<compile_context>
chip_gen: v5e
topology: v5e:2x2
jax: 0.10.0
libtpu: 0.0.40
codegen_flags: <defaults>
</compile_context>

<pallas_src>
import functools

import numpy as np
import jax
import jax.numpy as jnp
from jax.experimental import pallas as pl
from jax.experimental.pallas import tpu as pltpu

# --------------- small-scale config (scaled from the original module) --------
# original: N_SAMPLES=480000, N_FFT=400, HOP=160, feat_seq=1500, whisper dim=768,
#           13 hidden states, dim_transformer=256, nhead=4, nlayers=4
B          = 2
RAW_LEN    = 3000             # incoming raw-audio length (gets pad_or_trim'ed)
HOP        = 32
N_FFT      = 64
N_FREQ     = N_FFT // 2 + 1   # 33
FREQ_PAD   = 64               # zero-padded frequency axis (tile friendly)
T_FRAMES   = 128              # feat_seq: frames == BN channels == token features
N_SAMPLES  = T_FRAMES * HOP   # 4096
N_MELS     = 16
D_ENC      = 32               # stand-in Whisper hidden size -> transformer seq len
N_STATES   = 13               # encoder hidden states mixed by layer_weights
DIM        = 32               # dim_transformer
NHEAD      = 4
DHEAD      = DIM // NHEAD
FFN        = 4 * DIM          # 128
NLAYERS    = 2                # stands in for 4
OUT_PAD    = 128              # lane-dense output row
EPS_BN     = 1e-5
EPS_LN     = 1e-5


# ------------------------------ fused kernel ---------------------------------
def _fused_kernel(
    # frozen feature extractor (log-mel front end)
    wave_ref,     # (1, 2*HOP, T)        whole STFT frame per column (two halves)
    dft_ref,      # (2*FREQ_PAD, N_FFT)  windowed [cos;sin] DFT
    melx_ref,     # (N_MELS, 2*FREQ_PAD) mel filterbank duplicated over [re;im]
    wmix_ref,     # (D_ENC, N_MELS)      softmax(layer_weights)-folded encoder weights
    # BatchNorm1d(feat_seq), eval mode, folded to per-frame scale/shift
    bnsc_ref,     # (1, T)
    bnsh_ref,     # (1, T)
    # TransformerWrapper
    w_in_ref,     # (T, DIM)
    b_in_ref,     # (1, DIM)
    pe_ref,       # (D_ENC, DIM)
    wqkv_ref,     # (L, DIM, 3*DIM)  fused per-head Q|K|V projections
    bqkv_ref,     # (L, 1, 3*DIM)
    wo_ref,       # (L, DIM, DIM)    fused per-head output projection
    bo_ref,       # (L, 1, DIM)
    ln1g_ref, ln1b_ref,    # (L, 1, DIM)
    w1_ref, b1_ref,        # (L, DIM, FFN) / (L, 1, FFN)
    w2_ref, b2_ref,        # (L, FFN, DIM) / (L, 1, DIM)
    ln2g_ref, ln2b_ref,    # (L, 1, DIM)
    # PoolAttFF + sigmoid head
    pw1_ref, pb1_ref,      # (DIM, 2*DIM) / (1, 2*DIM)
    pw2_ref, pb2_ref,      # (1, 2*DIM)   / (1, 1)
    pw3_ref, pb3_ref,      # (1, DIM)     / (1, 1)
    out_ref,               # (1, 1, OUT_PAD)
):
    f32 = jnp.float32

    # ---- log-mel spectrogram: window folded into the DFT; framing realized as
    #      one accumulated matmul over the concatenated frame slab (no gather) --
    slab = jnp.dot(dft_ref[...], wave_ref[0], preferred_element_type=f32)   # (2F, T)
    # mel = M @ re^2 + M @ im^2  ==  [M | M] @ slab^2   (single lane-dense matmul)
    mel = jnp.dot(melx_ref[...], slab * slab, preferred_element_type=f32)   # (N_MELS, T)
    log_spec = jnp.log(jnp.maximum(mel, 1e-10)) * np.float32(1.0 / np.log(10.0))
    log_spec = jnp.maximum(log_spec, jnp.max(log_spec) - 8.0)   # per-item clamp
    feat = (log_spec + 4.0) * 0.25                              # (N_MELS, T)

    # ---- frozen 13-state stand-in encoder with softmax(layer_weights) already
    #      folded into the weights (exact by linearity): one matmul ------------
    mixed = jnp.dot(wmix_ref[...], feat, preferred_element_type=f32)        # (D_ENC, T)

    # ---- BatchNorm1d(feat_seq): channel axis == frame axis (per-frame stats)
    xbn = mixed * bnsc_ref[...] + bnsh_ref[...]                             # (D_ENC, T)

    # ---- TransformerWrapper: input projection (T -> DIM) + positional enc.
    h = (jnp.dot(xbn, w_in_ref[...], preferred_element_type=f32)
         + b_in_ref[...] + pe_ref[...])                                     # (S, DIM)

    def layer_norm(v, g, b):
        mu = jnp.mean(v, axis=-1, keepdims=True)
        var = jnp.mean(v * v, axis=-1, keepdims=True) - mu * mu             # single pass
        return (v - mu) * jax.lax.rsqrt(var + EPS_LN) * g + b

    scale = 1.0 / float(np.sqrt(DHEAD))
    for l in range(NLAYERS):
        # -- multi-head self-attention: fused QKV projection, per-head softmax,
        #    fused output projection ------------------------------------------
        qkv = (jnp.dot(h, wqkv_ref[l], preferred_element_type=f32)
               + bqkv_ref[l])                                               # (S, 3*DIM)
        ctx_parts = []
        for hh in range(NHEAD):
            q = qkv[:, hh * DHEAD:(hh + 1) * DHEAD]
            k = qkv[:, DIM + hh * DHEAD:DIM + (hh + 1) * DHEAD]
            v = qkv[:, 2 * DIM + hh * DHEAD:2 * DIM + (hh + 1) * DHEAD]
            s = jax.lax.dot_general(q, k, (((1,), (1,)), ((), ())),
                                    preferred_element_type=f32) * scale     # (S, S)
            s = s - jnp.max(s, axis=-1, keepdims=True)
            p = jnp.exp(s)
            p = p / jnp.sum(p, axis=-1, keepdims=True)     # exact softmax rows
            ctx_parts.append(jnp.dot(p, v, preferred_element_type=f32))     # (S, DHEAD)
        ctx_all = jnp.concatenate(ctx_parts, axis=-1)                       # (S, DIM)
        attn = jnp.dot(ctx_all, wo_ref[l], preferred_element_type=f32) + bo_ref[l]
        h = layer_norm(h + attn, ln1g_ref[l], ln1b_ref[l])                  # post-LN add&norm
        # -- feed-forward (ReLU); dropout = identity at inference
        ff = jnp.maximum(jnp.dot(h, w1_ref[l], preferred_element_type=f32) + b1_ref[l], 0.0)
        ff = jnp.dot(ff, w2_ref[l], preferred_element_type=f32) + b2_ref[l]
        h = layer_norm(h + ff, ln2g_ref[l], ln2b_ref[l])

    # ---- PoolAttFF + final sigmoid -------------------------------------------
    h1 = jnp.maximum(jnp.dot(h, pw1_ref[...], preferred_element_type=f32)
                     + pb1_ref[...], 0.0)                                   # (S, 2*DIM)
    att = jnp.sum(h1 * pw2_ref[...], axis=-1, keepdims=True) + pb2_ref[...]  # (S, 1)
    att = att - jnp.max(att)
    att = jnp.exp(att)
    att = att / jnp.sum(att)                       # softmax over the sequence
    pooled = jnp.sum(att * h, axis=0, keepdims=True)                        # (1, DIM)
    y = jnp.sum(pooled * pw3_ref[...], axis=-1, keepdims=True) + pb3_ref[...]
    y = jax.nn.sigmoid(y)                                                   # (1, 1)
    out_ref[0] = y + jnp.zeros((1, OUT_PAD), jnp.float32)  # lane-dense output row


# --------------------------- specs / index maps -------------------------------
def _zero_index(ndim, b):
    return (0,) * ndim


def _batch_index(b):
    return (b, 0, 0)


# ------------------------------ constants / params ---------------------------
def mel_filterbank(n_mels=N_MELS, n_freq=N_FREQ, n_fft=N_FFT, sr=16000.0):
    def hz_to_mel(f):
        return 2595.0 * np.log10(1.0 + f / 700.0)

    def mel_to_hz(m):
        return 700.0 * (10.0 ** (m / 2595.0) - 1.0)

    mels = np.linspace(hz_to_mel(0.0), hz_to_mel(sr / 2.0), n_mels + 2)
    hz = mel_to_hz(mels)
    bins = np.floor((n_fft + 1) * hz / sr).astype(np.int64)
    fb = np.zeros((n_mels, n_freq), dtype=np.float64)
    for m in range(1, n_mels + 1):
        l, c, r = int(bins[m - 1]), int(bins[m]), int(bins[m + 1])
        for kk in range(l, c):
            fb[m - 1, kk] = (kk - l) / max(c - l, 1)
        for kk in range(c, r):
            fb[m - 1, kk] = (r - kk) / max(r - c, 1)
    return fb


def build_consts():
    n = np.arange(N_FFT)
    window = 0.5 * (1.0 - np.cos(2.0 * np.pi * n / N_FFT))        # periodic Hann
    k = np.arange(N_FREQ)
    ang = 2.0 * np.pi * np.outer(k, n) / N_FFT                    # (N_FREQ, N_FFT)
    dft = np.zeros((2 * FREQ_PAD, N_FFT), np.float64)             # [win*cos ; win*sin]
    dft[:N_FREQ, :] = np.cos(ang) * window[None, :]
    dft[FREQ_PAD:FREQ_PAD + N_FREQ, :] = np.sin(ang) * window[None, :]
    fb = mel_filterbank()
    mel_ext = np.zeros((N_MELS, 2 * FREQ_PAD), np.float64)        # duplicated so that
    mel_ext[:, :N_FREQ] = fb                                      # mel == mel_ext @ slab^2
    mel_ext[:, FREQ_PAD:FREQ_PAD + N_FREQ] = fb
    # sinusoidal positional encoding over the transformer sequence
    pos = np.arange(D_ENC)[:, None]
    i = np.arange(DIM)[None, :]
    angle = pos / np.power(10000.0, (2 * (i // 2)) / DIM)
    pe = np.where(i % 2 == 0, np.sin(angle), np.cos(angle))
    to = lambda a: jnp.asarray(a, jnp.float32)
    return dict(dft=to(dft), mel_ext=to(mel_ext), pos_enc=to(pe))


def init_params(key):
    ks = iter(jax.random.split(key, 40))

    def w(shape, scale=0.05):
        return (scale * jax.random.normal(next(ks), shape)).astype(jnp.float32)

    p = {}
    # frozen stand-in Whisper-encoder hidden-state projections (requires_grad_(False))
    p["w_enc"] = w((N_STATES, D_ENC, N_MELS), 0.2)
    # layer_weights = nn.Parameter(torch.ones(13))
    p["layer_weights"] = jnp.ones((N_STATES,), jnp.float32)
    # BatchNorm1d(feat_seq) affine + running stats (eval mode)
    p["bn_gamma"] = 1.0 + w((T_FRAMES,))
    p["bn_beta"] = w((T_FRAMES,))
    p["bn_mean"] = w((T_FRAMES,))
    p["bn_var"] = 1.0 + jnp.abs(w((T_FRAMES,)))
    # TransformerWrapper: input projection + encoder layers (stacked over layers)
    p["w_in"] = w((T_FRAMES, DIM))
    p["b_in"] = w((1, DIM))
    p["w_q"] = w((NLAYERS, NHEAD, DIM, DHEAD)); p["b_q"] = w((NLAYERS, NHEAD, 1, DHEAD))
    p["w_k"] = w((NLAYERS, NHEAD, DIM, DHEAD)); p["b_k"] = w((NLAYERS, NHEAD, 1, DHEAD))
    p["w_v"] = w((NLAYERS, NHEAD, DIM, DHEAD)); p["b_v"] = w((NLAYERS, NHEAD, 1, DHEAD))
    p["w_o"] = w((NLAYERS, NHEAD, DHEAD, DIM)); p["b_o"] = w((NLAYERS, 1, DIM))
    p["ln1_g"] = 1.0 + w((NLAYERS, 1, DIM)); p["ln1_b"] = w((NLAYERS, 1, DIM))
    p["w1"] = w((NLAYERS, DIM, FFN)); p["b1"] = w((NLAYERS, 1, FFN))
    p["w2"] = w((NLAYERS, FFN, DIM)); p["b2"] = w((NLAYERS, 1, DIM))
    p["ln2_g"] = 1.0 + w((NLAYERS, 1, DIM)); p["ln2_b"] = w((NLAYERS, 1, DIM))
    # PoolAttFF (linear2 / linear3 weights stored as (out=1, in) rows)
    p["p_w1"] = w((DIM, 2 * DIM)); p["p_b1"] = w((1, 2 * DIM))
    p["p_w2"] = w((1, 2 * DIM));   p["p_b2"] = w((1, 1))
    p["p_w3"] = w((1, DIM));       p["p_b3"] = w((1, 1))
    return p


# ------------------------------- forward pass --------------------------------
def forward(x, params, consts):
    # pad_or_trim + center=True STFT framing (pure strided views; no gather)
    n = x.shape[-1]
    if n >= N_SAMPLES:
        xp = x[:, :N_SAMPLES]
    else:
        xp = jnp.pad(x, ((0, 0), (0, N_SAMPLES - n)))
    xr = jnp.pad(xp, ((0, 0), (N_FFT // 2, N_FFT // 2)), mode="reflect")
    # frame t = xr[t*HOP : t*HOP + N_FFT] = wave[:, :, t] (two stacked half frames)
    wave_a = jnp.transpose(xr[:, :N_SAMPLES].reshape(B, T_FRAMES, HOP), (0, 2, 1))
    wave_b = jnp.transpose(xr[:, HOP:N_SAMPLES + HOP].reshape(B, T_FRAMES, HOP), (0, 2, 1))
    wave = jnp.concatenate([wave_a, wave_b], axis=1)           # (B, N_FFT, T)

    # ---- parameter-only prep (forward semantics preserved; all exact folds) ---
    # softmax(layer_weights) folded into the frozen encoder weights (linearity)
    sm = jax.nn.softmax(params["layer_weights"])
    w_mix = jnp.einsum("l,lem->em", sm, params["w_enc"]).astype(jnp.float32)
    # eval-mode BN folding
    inv = jax.lax.rsqrt(params["bn_var"] + EPS_BN)
    bn_scale = (params["bn_gamma"] * inv).reshape(1, T_FRAMES)
    bn_shift = (params["bn_beta"]
                - params["bn_mean"] * params["bn_gamma"] * inv).reshape(1, T_FRAMES)
    # fused per-head Q|K|V projection and fused output projection
    def fuse_heads(wh):  # (L, H, DIM, DHEAD) -> (L, DIM, H*DHEAD)
        return jnp.transpose(wh, (0, 2, 1, 3)).reshape(NLAYERS, DIM, NHEAD * DHEAD)
    w_qkv = jnp.concatenate(
        [fuse_heads(params["w_q"]), fuse_heads(params["w_k"]), fuse_heads(params["w_v"])],
        axis=-1)                                                 # (L, DIM, 3*DIM)
    b_qkv = jnp.concatenate(
        [params["b_q"].reshape(NLAYERS, 1, NHEAD * DHEAD),
         params["b_k"].reshape(NLAYERS, 1, NHEAD * DHEAD),
         params["b_v"].reshape(NLAYERS, 1, NHEAD * DHEAD)], axis=-1)   # (L, 1, 3*DIM)
    w_o = params["w_o"].reshape(NLAYERS, NHEAD * DHEAD, DIM)     # (L, DIM, DIM)

    batched_inputs = [wave]
    const_inputs = [
        consts["dft"], consts["mel_ext"], w_mix, bn_scale, bn_shift,
        params["w_in"], params["b_in"], consts["pos_enc"],
        w_qkv, b_qkv, w_o, params["b_o"],
        params["ln1_g"], params["ln1_b"],
        params["w1"], params["b1"], params["w2"], params["b2"],
        params["ln2_g"], params["ln2_b"],
        params["p_w1"], params["p_b1"], params["p_w2"], params["p_b2"],
        params["p_w3"], params["p_b3"],
    ]
    in_specs = (
        [pl.BlockSpec((1,) + a.shape[1:], _batch_index) for a in batched_inputs]
        + [pl.BlockSpec(a.shape, functools.partial(_zero_index, a.ndim))
           for a in const_inputs])

    out = pl.pallas_call(
        _fused_kernel,
        out_shape=jax.ShapeDtypeStruct((B, 1, OUT_PAD), jnp.float32),
        grid=(B,),
        in_specs=in_specs,
        out_specs=pl.BlockSpec((1, 1, OUT_PAD), _batch_index),
        compiler_params=pltpu.CompilerParams(dimension_semantics=("parallel",)),
    )(*batched_inputs, *const_inputs)
    return out[:, 0, :1]                                       # (B, 1)


# ----------------------------------- main -------------------------------------
if __name__ == "__main__":
    key = jax.random.PRNGKey(0)
    k_in, k_par = jax.random.split(key)
    x = jax.random.normal(k_in, (B, RAW_LEN), dtype=jnp.float32)
    params = init_params(k_par)
    consts = build_consts()

    fwd = jax.jit(forward)
    out = jax.block_until_ready(fwd(x, params, consts))

    assert out.shape == (B, 1), out.shape
    assert bool(jnp.all(jnp.isfinite(out)))
    assert bool(jnp.all((out > 0.0) & (out < 1.0)))
    print("KERNEL_OK")
</pallas_src>

<mosaic_0001>
module attributes {stable_mosaic.version = 11 : i64} {
  func.func @_fused_kernel(%arg0: i32, %arg1: memref<1x64x128xf32, #tpu.memory_space<vmem>>, %arg2: memref<128x64xf32, #tpu.memory_space<vmem>>, %arg3: memref<16x128xf32, #tpu.memory_space<vmem>>, %arg4: memref<32x16xf32, #tpu.memory_space<vmem>>, %arg5: memref<1x128xf32, #tpu.memory_space<vmem>>, %arg6: memref<1x128xf32, #tpu.memory_space<vmem>>, %arg7: memref<128x32xf32, #tpu.memory_space<vmem>>, %arg8: memref<1x32xf32, #tpu.memory_space<vmem>>, %arg9: memref<32x32xf32, #tpu.memory_space<vmem>>, %arg10: memref<2x32x96xf32, #tpu.memory_space<vmem>>, %arg11: memref<2x1x96xf32, #tpu.memory_space<vmem>>, %arg12: memref<2x32x32xf32, #tpu.memory_space<vmem>>, %arg13: memref<2x1x32xf32, #tpu.memory_space<vmem>>, %arg14: memref<2x1x32xf32, #tpu.memory_space<vmem>>, %arg15: memref<2x1x32xf32, #tpu.memory_space<vmem>>, %arg16: memref<2x32x128xf32, #tpu.memory_space<vmem>>, %arg17: memref<2x1x128xf32, #tpu.memory_space<vmem>>, %arg18: memref<2x128x32xf32, #tpu.memory_space<vmem>>, %arg19: memref<2x1x32xf32, #tpu.memory_space<vmem>>, %arg20: memref<2x1x32xf32, #tpu.memory_space<vmem>>, %arg21: memref<2x1x32xf32, #tpu.memory_space<vmem>>, %arg22: memref<32x64xf32, #tpu.memory_space<vmem>>, %arg23: memref<1x64xf32, #tpu.memory_space<vmem>>, %arg24: memref<1x64xf32, #tpu.memory_space<vmem>>, %arg25: memref<1x1xf32, #tpu.memory_space<vmem>>, %arg26: memref<1x32xf32, #tpu.memory_space<vmem>>, %arg27: memref<1x1xf32, #tpu.memory_space<vmem>>, %arg28: memref<1x1x128xf32, #tpu.memory_space<vmem>>) attributes {dimension_semantics = [#tpu.dimension_semantics<parallel>], iteration_bounds = array<i64: 2>, scalar_prefetch = 0 : i64, scratch_operands = 0 : i64, tpu.core_type = #tpu.core_type<tc>, window_params = [{transform_indices = @transform_0, window_bounds = array<i64: 1, 64, 128>}, {pipeline_mode = #tpu.pipeline_mode<synchronous>, transform_indices = @transform_1, window_bounds = array<i64: 128, 64>}, {pipeline_mode = #tpu.pipeline_mode<synchronous>, transform_indices = @transform_2, window_bounds = array<i64: 16, 128>}, {pipeline_mode = #tpu.pipeline_mode<synchronous>, transform_indices = @transform_3, window_bounds = array<i64: 32, 16>}, {pipeline_mode = #tpu.pipeline_mode<synchronous>, transform_indices = @transform_4, window_bounds = array<i64: 1, 128>}, {pipeline_mode = #tpu.pipeline_mode<synchronous>, transform_indices = @transform_5, window_bounds = array<i64: 1, 128>}, {pipeline_mode = #tpu.pipeline_mode<synchronous>, transform_indices = @transform_6, window_bounds = array<i64: 128, 32>}, {pipeline_mode = #tpu.pipeline_mode<synchronous>, transform_indices = @transform_7, window_bounds = array<i64: 1, 32>}, {pipeline_mode = #tpu.pipeline_mode<synchronous>, transform_indices = @transform_8, window_bounds = array<i64: 32, 32>}, {pipeline_mode = #tpu.pipeline_mode<synchronous>, transform_indices = @transform_9, window_bounds = array<i64: 2, 32, 96>}, {pipeline_mode = #tpu.pipeline_mode<synchronous>, transform_indices = @transform_10, window_bounds = array<i64: 2, 1, 96>}, {pipeline_mode = #tpu.pipeline_mode<synchronous>, transform_indices = @transform_11, window_bounds = array<i64: 2, 32, 32>}, {pipeline_mode = #tpu.pipeline_mode<synchronous>, transform_indices = @transform_12, window_bounds = array<i64: 2, 1, 32>}, {pipeline_mode = #tpu.pipeline_mode<synchronous>, transform_indices = @transform_13, window_bounds = array<i64: 2, 1, 32>}, {pipeline_mode = #tpu.pipeline_mode<synchronous>, transform_indices = @transform_14, window_bounds = array<i64: 2, 1, 32>}, {pipeline_mode = #tpu.pipeline_mode<synchronous>, transform_indices = @transform_15, window_bounds = array<i64: 2, 32, 128>}, {pipeline_mode = #tpu.pipeline_mode<synchronous>, transform_indices = @transform_16, window_bounds = array<i64: 2, 1, 128>}, {pipeline_mode = #tpu.pipeline_mode<synchronous>, transform_indices = @transform_17, window_bounds = array<i64: 2, 128, 32>}, {pipeline_mode = #tpu.pipeline_mode<synchronous>, transform_indices = @transform_18, window_bounds = array<i64: 2, 1, 32>}, {pipeline_mode = #tpu.pipeline_mode<synchronous>, transform_indices = @transform_19, window_bounds = array<i64: 2, 1, 32>}, {pipeline_mode = #tpu.pipeline_mode<synchronous>, transform_indices = @transform_20, window_bounds = array<i64: 2, 1, 32>}, {pipeline_mode = #tpu.pipeline_mode<synchronous>, transform_indices = @transform_21, window_bounds = array<i64: 32, 64>}, {pipeline_mode = #tpu.pipeline_mode<synchronous>, transform_indices = @transform_22, window_bounds = array<i64: 1, 64>}, {pipeline_mode = #tpu.pipeline_mode<synchronous>, transform_indices = @transform_23, window_bounds = array<i64: 1, 64>}, {pipeline_mode = #tpu.pipeline_mode<synchronous>, transform_indices = @transform_24, window_bounds = array<i64: 1, 1>}, {pipeline_mode = #tpu.pipeline_mode<synchronous>, transform_indices = @transform_25, window_bounds = array<i64: 1, 32>}, {pipeline_mode = #tpu.pipeline_mode<synchronous>, transform_indices = @transform_26, window_bounds = array<i64: 1, 1>}, {transform_indices = @transform_27, window_bounds = array<i64: 1, 1, 128>}]} {
    %c0 = arith.constant 0 : index
    %c0_0 = arith.constant 0 : index
    %0 = vector.load %arg2[%c0, %c0_0] : memref<128x64xf32, #tpu.memory_space<vmem>>, vector<128x64xf32>
    %c0_1 = arith.constant 0 : index
    %c0_2 = arith.constant 0 : index
    %c0_3 = arith.constant 0 : index
    %1 = vector.load %arg1[%c0_1, %c0_2, %c0_3] : memref<1x64x128xf32, #tpu.memory_space<vmem>>, vector<1x64x128xf32>
    %2 = vector.shape_cast %1 : vector<1x64x128xf32> to vector<64x128xf32>
    %cst = arith.constant dense<0.000000e+00> : vector<128x128xf32>
    %3 = tpu.matmul %0, %2, %cst {dimension_numbers = #tpu.dot_dimension_numbers<[1], [0], [0], [1], [0, 0, 1, 1], [], []>} : vector<128x64xf32>, vector<64x128xf32>, vector<128x128xf32> -> vector<128x128xf32>
    %c0_4 = arith.constant 0 : index
    %c0_5 = arith.constant 0 : index
    %4 = vector.load %arg3[%c0_4, %c0_5] : memref<16x128xf32, #tpu.memory_space<vmem>>, vector<16x128xf32>
    %5 = arith.mulf %3, %3 : vector<128x128xf32>
    %cst_6 = arith.constant dense<0.000000e+00> : vector<16x128xf32>
    %6 = tpu.matmul %4, %5, %cst_6 {dimension_numbers = #tpu.dot_dimension_numbers<[1], [0], [0], [1], [0, 0, 1, 1], [], []>} : vector<16x128xf32>, vector<128x128xf32>, vector<16x128xf32> -> vector<16x128xf32>
    %cst_7 = arith.constant 1.000000e-10 : f32
    %7 = vector.broadcast %cst_7 : f32 to vector<16x128xf32>
    %8 = arith.maximumf %6, %7 : vector<16x128xf32>
    %9 = math.log %8 : vector<16x128xf32>
    %cst_8 = arith.constant 0.434294492 : f32
    %10 = vector.broadcast %cst_8 : f32 to vector<16x128xf32>
    %11 = arith.mulf %9, %10 : vector<16x128xf32>
    %12 = vector.shape_cast %11 : vector<16x128xf32> to vector<1x16x128xf32>
    %cst_9 = arith.constant dense<0xFF800000> : vector<1xf32>
    %13 = vector.multi_reduction <maximumf>, %12, %cst_9 [1, 2] : vector<1x16x128xf32> to vector<1xf32>
    %14 = vector.shape_cast %13 : vector<1xf32> to vector<1x1x1xf32>
    %15 = vector.extract %14[0, 0, 0] : f32 from vector<1x1x1xf32>
    %cst_10 = arith.constant 8.000000e+00 : f32
    %16 = arith.subf %15, %cst_10 : f32
    %17 = vector.broadcast %16 : f32 to vector<16x128xf32>
    %18 = arith.maximumf %11, %17 : vector<16x128xf32>
    %cst_11 = arith.constant 4.000000e+00 : f32
    %19 = vector.broadcast %cst_11 : f32 to vector<16x128xf32>
    %20 = arith.addf %18, %19 : vector<16x128xf32>
    %cst_12 = arith.constant 2.500000e-01 : f32
    %21 = vector.broadcast %cst_12 : f32 to vector<16x128xf32>
    %22 = arith.mulf %20, %21 : vector<16x128xf32>
    %c0_13 = arith.constant 0 : index
    %c0_14 = arith.constant 0 : index
    %23 = vector.load %arg4[%c0_13, %c0_14] : memref<32x16xf32, #tpu.memory_space<vmem>>, vector<32x16xf32>
    %cst_15 = arith.constant dense<0.000000e+00> : vector<32x128xf32>
    %24 = tpu.matmul %23, %22, %cst_15 {dimension_numbers = #tpu.dot_dimension_numbers<[1], [0], [0], [1], [0, 0, 1, 1], [], []>} : vector<32x16xf32>, vector<16x128xf32>, vector<32x128xf32> -> vector<32x128xf32>
    %c0_16 = arith.constant 0 : index
    %c0_17 = arith.constant 0 : index
    %25 = vector.load %arg5[%c0_16, %c0_17] : memref<1x128xf32, #tpu.memory_space<vmem>>, vector<1x128xf32>
    %26 = vector.broadcast %25 : vector<1x128xf32> to vector<32x128xf32>
    %27 = arith.mulf %24, %26 : vector<32x128xf32>
    %c0_18 = arith.constant 0 : index
    %c0_19 = arith.constant 0 : index
    %28 = vector.load %arg6[%c0_18, %c0_19] : memref<1x128xf32, #tpu.memory_space<vmem>>, vector<1x128xf32>
    %29 = vector.broadcast %28 : vector<1x128xf32> to vector<32x128xf32>
    %30 = arith.addf %27, %29 : vector<32x128xf32>
    %c0_20 = arith.constant 0 : index
    %c0_21 = arith.constant 0 : index
    %31 = vector.load %arg7[%c0_20, %c0_21] : memref<128x32xf32, #tpu.memory_space<vmem>>, vector<128x32xf32>
    %cst_22 = arith.constant dense<0.000000e+00> : vector<32x32xf32>
    %32 = tpu.matmul %30, %31, %cst_22 {dimension_numbers = #tpu.dot_dimension_numbers<[1], [0], [0], [1], [0, 0, 1, 1], [], []>} : vector<32x128xf32>, vector<128x32xf32>, vector<32x32xf32> -> vector<32x32xf32>
    %c0_23 = arith.constant 0 : index
    %c0_24 = arith.constant 0 : index
    %33 = vector.load %arg8[%c0_23, %c0_24] : memref<1x32xf32, #tpu.memory_space<vmem>>, vector<1x32xf32>
    %34 = vector.broadcast %33 : vector<1x32xf32> to vector<32x32xf32>
    %35 = arith.addf %32, %34 : vector<32x32xf32>
    %c0_25 = arith.constant 0 : index
    %c0_26 = arith.constant 0 : index
    %36 = vector.load %arg9[%c0_25, %c0_26] : memref<32x32xf32, #tpu.memory_space<vmem>>, vector<32x32xf32>
    %37 = arith.addf %35, %36 : vector<32x32xf32>
    %c0_27 = arith.constant 0 : index
    %c0_28 = arith.constant 0 : index
    %c0_29 = arith.constant 0 : index
    %38 = vector.load %arg10[%c0_27, %c0_28, %c0_29] : memref<2x32x96xf32, #tpu.memory_space<vmem>>, vector<1x32x96xf32>
    %39 = vector.shape_cast %38 : vector<1x32x96xf32> to vector<32x96xf32>
    %cst_30 = arith.constant dense<0.000000e+00> : vector<32x96xf32>
    %40 = tpu.matmul %37, %39, %cst_30 {dimension_numbers = #tpu.dot_dimension_numbers<[1], [0], [0], [1], [0, 0, 1, 1], [], []>} : vector<32x32xf32>, vector<32x96xf32>, vector<32x96xf32> -> vector<32x96xf32>
    %c0_31 = arith.constant 0 : index
    %c0_32 = arith.constant 0 : index
    %c0_33 = arith.constant 0 : index
    %41 = vector.load %arg11[%c0_31, %c0_32, %c0_33] : memref<2x1x96xf32, #tpu.memory_space<vmem>>, vector<1x1x96xf32>
    %42 = vector.shape_cast %41 : vector<1x1x96xf32> to vector<1x96xf32>
    %43 = vector.broadcast %42 : vector<1x96xf32> to vector<32x96xf32>
    %44 = arith.addf %40, %43 : vector<32x96xf32>
    %45 = vector.extract_strided_slice %44 {offsets = [0, 0], sizes = [32, 8], strides = [1, 1]} : vector<32x96xf32> to vector<32x8xf32>
    %46 = vector.extract_strided_slice %44 {offsets = [0, 32], sizes = [32, 8], strides = [1, 1]} : vector<32x96xf32> to vector<32x8xf32>
    %47 = vector.extract_strided_slice %44 {offsets = [0, 64], sizes = [32, 8], strides = [1, 1]} : vector<32x96xf32> to vector<32x8xf32>
    %cst_34 = arith.constant dense<0.000000e+00> : vector<32x32xf32>
    %48 = tpu.matmul %45, %46, %cst_34 {dimension_numbers = #tpu.dot_dimension_numbers<[1], [1], [0], [0], [0, 0, 1, 0], [], []>} : vector<32x8xf32>, vector<32x8xf32>, vector<32x32xf32> -> vector<32x32xf32>
    %cst_35 = arith.constant 0.353553385 : f32
    %49 = vector.broadcast %cst_35 : f32 to vector<32x32xf32>
    %50 = arith.mulf %48, %49 : vector<32x32xf32>
    %cst_36 = arith.constant dense<0xFF800000> : vector<32xf32>
    %51 = vector.multi_reduction <maximumf>, %50, %cst_36 [1] : vector<32x32xf32> to vector<32xf32>
    %52 = vector.shape_cast %51 : vector<32xf32> to vector<32x1xf32>
    %53 = vector.broadcast %52 : vector<32x1xf32> to vector<32x32xf32>
    %54 = arith.subf %50, %53 : vector<32x32xf32>
    %55 = math.exp %54 : vector<32x32xf32>
    %cst_37 = arith.constant dense<0.000000e+00> : vector<32xf32>
    %56 = vector.multi_reduction <add>, %55, %cst_37 [1] : vector<32x32xf32> to vector<32xf32>
    %57 = vector.shape_cast %56 : vector<32xf32> to vector<32x1xf32>
    %58 = vector.broadcast %57 : vector<32x1xf32> to vector<32x32xf32>
    %59 = arith.divf %55, %58 : vector<32x32xf32>
    %cst_38 = arith.constant dense<0.000000e+00> : vector<32x8xf32>
    %60 = tpu.matmul %59, %47, %cst_38 {dimension_numbers = #tpu.dot_dimension_numbers<[1], [0], [0], [1], [0, 0, 1, 1], [], []>} : vector<32x32xf32>, vector<32x8xf32>, vector<32x8xf32> -> vector<32x8xf32>
    %61 = vector.extract_strided_slice %44 {offsets = [0, 8], sizes = [32, 8], strides = [1, 1]} : vector<32x96xf32> to vector<32x8xf32>
    %62 = vector.extract_strided_slice %44 {offsets = [0, 40], sizes = [32, 8], strides = [1, 1]} : vector<32x96xf32> to vector<32x8xf32>
    %63 = vector.extract_strided_slice %44 {offsets = [0, 72], sizes = [32, 8], strides = [1, 1]} : vector<32x96xf32> to vector<32x8xf32>
    %cst_39 = arith.constant dense<0.000000e+00> : vector<32x32xf32>
    %64 = tpu.matmul %61, %62, %cst_39 {dimension_numbers = #tpu.dot_dimension_numbers<[1], [1], [0], [0], [0, 0, 1, 0], [], []>} : vector<32x8xf32>, vector<32x8xf32>, vector<32x32xf32> -> vector<32x32xf32>
    %cst_40 = arith.constant 0.353553385 : f32
    %65 = vector.broadcast %cst_40 : f32 to vector<32x32xf32>
    %66 = arith.mulf %64, %65 : vector<32x32xf32>
    %cst_41 = arith.constant dense<0xFF800000> : vector<32xf32>
    %67 = vector.multi_reduction <maximumf>, %66, %cst_41 [1] : vector<32x32xf32> to vector<32xf32>
    %68 = vector.shape_cast %67 : vector<32xf32> to vector<32x1xf32>
    %69 = vector.broadcast %68 : vector<32x1xf32> to vector<32x32xf32>
    %70 = arith.subf %66, %69 : vector<32x32xf32>
    %71 = math.exp %70 : vector<32x32xf32>
    %cst_42 = arith.constant dense<0.000000e+00> : vector<32xf32>
    %72 = vector.multi_reduction <add>, %71, %cst_42 [1] : vector<32x32xf32> to vector<32xf32>
    %73 = vector.shape_cast %72 : vector<32xf32> to vector<32x1xf32>
    %74 = vector.broadcast %73 : vector<32x1xf32> to vector<32x32xf32>
    %75 = arith.divf %71, %74 : vector<32x32xf32>
    %cst_43 = arith.constant dense<0.000000e+00> : vector<32x8xf32>
    %76 = tpu.matmul %75, %63, %cst_43 {dimension_numbers = #tpu.dot_dimension_numbers<[1], [0], [0], [1], [0, 0, 1, 1], [], []>} : vector<32x32xf32>, vector<32x8xf32>, vector<32x8xf32> -> vector<32x8xf32>
    %77 = vector.extract_strided_slice %44 {offsets = [0, 16], sizes = [32, 8], strides = [1, 1]} : vector<32x96xf32> to vector<32x8xf32>
    %78 = vector.extract_strided_slice %44 {offsets = [0, 48], sizes = [32, 8], strides = [1, 1]} : vector<32x96xf32> to vector<32x8xf32>
    %79 = vector.extract_strided_slice %44 {offsets = [0, 80], sizes = [32, 8], strides = [1, 1]} : vector<32x96xf32> to vector<32x8xf32>
    %cst_44 = arith.constant dense<0.000000e+00> : vector<32x32xf32>
    %80 = tpu.matmul %77, %78, %cst_44 {dimension_numbers = #tpu.dot_dimension_numbers<[1], [1], [0], [0], [0, 0, 1, 0], [], []>} : vector<32x8xf32>, vector<32x8xf32>, vector<32x32xf32> -> vector<32x32xf32>
    %cst_45 = arith.constant 0.353553385 : f32
    %81 = vector.broadcast %cst_45 : f32 to vector<32x32xf32>
    %82 = arith.mulf %80, %81 : vector<32x32xf32>
    %cst_46 = arith.constant dense<0xFF800000> : vector<32xf32>
    %83 = vector.multi_reduction <maximumf>, %82, %cst_46 [1] : vector<32x32xf32> to vector<32xf32>
    %84 = vector.shape_cast %83 : vector<32xf32> to vector<32x1xf32>
    %85 = vector.broadcast %84 : vector<32x1xf32> to vector<32x32xf32>
    %86 = arith.subf %82, %85 : vector<32x32xf32>
    %87 = math.exp %86 : vector<32x32xf32>
    %cst_47 = arith.constant dense<0.000000e+00> : vector<32xf32>
    %88 = vector.multi_reduction <add>, %87, %cst_47 [1] : vector<32x32xf32> to vector<32xf32>
    %89 = vector.shape_cast %88 : vector<32xf32> to vector<32x1xf32>
    %90 = vector.broadcast %89 : vector<32x1xf32> to vector<32x32xf32>
    %91 = arith.divf %87, %90 : vector<32x32xf32>
    %cst_48 = arith.constant dense<0.000000e+00> : vector<32x8xf32>
    %92 = tpu.matmul %91, %79, %cst_48 {dimension_numbers = #tpu.dot_dimension_numbers<[1], [0], [0], [1], [0, 0, 1, 1], [], []>} : vector<32x32xf32>, vector<32x8xf32>, vector<32x8xf32> -> vector<32x8xf32>
    %93 = vector.extract_strided_slice %44 {offsets = [0, 24], sizes = [32, 8], strides = [1, 1]} : vector<32x96xf32> to vector<32x8xf32>
    %94 = vector.extract_strided_slice %44 {offsets = [0, 56], sizes = [32, 8], strides = [1, 1]} : vector<32x96xf32> to vector<32x8xf32>
    %95 = vector.extract_strided_slice %44 {offsets = [0, 88], sizes = [32, 8], strides = [1, 1]} : vector<32x96xf32> to vector<32x8xf32>
    %cst_49 = arith.constant dense<0.000000e+00> : vector<32x32xf32>
    %96 = tpu.matmul %93, %94, %cst_49 {dimension_numbers = #tpu.dot_dimension_numbers<[1], [1], [0], [0], [0, 0, 1, 0], [], []>} : vector<32x8xf32>, vector<32x8xf32>, vector<32x32xf32> -> vector<32x32xf32>
    %cst_50 = arith.constant 0.353553385 : f32
    %97 = vector.broadcast %cst_50 : f32 to vector<32x32xf32>
    %98 = arith.mulf %96, %97 : vector<32x32xf32>
    %cst_51 = arith.constant dense<0xFF800000> : vector<32xf32>
    %99 = vector.multi_reduction <maximumf>, %98, %cst_51 [1] : vector<32x32xf32> to vector<32xf32>
    %100 = vector.shape_cast %99 : vector<32xf32> to vector<32x1xf32>
    %101 = vector.broadcast %100 : vector<32x1xf32> to vector<32x32xf32>
    %102 = arith.subf %98, %101 : vector<32x32xf32>
    %103 = math.exp %102 : vector<32x32xf32>
    %cst_52 = arith.constant dense<0.000000e+00> : vector<32xf32>
    %104 = vector.multi_reduction <add>, %103, %cst_52 [1] : vector<32x32xf32> to vector<32xf32>
    %105 = vector.shape_cast %104 : vector<32xf32> to vector<32x1xf32>
    %106 = vector.broadcast %105 : vector<32x1xf32> to vector<32x32xf32>
    %107 = arith.divf %103, %106 : vector<32x32xf32>
    %cst_53 = arith.constant dense<0.000000e+00> : vector<32x8xf32>
    %108 = tpu.matmul %107, %95, %cst_53 {dimension_numbers = #tpu.dot_dimension_numbers<[1], [0], [0], [1], [0, 0, 1, 1], [], []>} : vector<32x32xf32>, vector<32x8xf32>, vector<32x8xf32> -> vector<32x8xf32>
    %109 = tpu.concatenate %60, %76, %92, %108 in 1 : vector<32x8xf32>, vector<32x8xf32>, vector<32x8xf32>, vector<32x8xf32> -> vector<32x32xf32>
    %c0_54 = arith.constant 0 : index
    %c0_55 = arith.constant 0 : index
    %c0_56 = arith.constant 0 : index
    %110 = vector.load %arg12[%c0_54, %c0_55, %c0_56] : memref<2x32x32xf32, #tpu.memory_space<vmem>>, vector<1x32x32xf32>
    %111 = vector.shape_cast %110 : vector<1x32x32xf32> to vector<32x32xf32>
    %cst_57 = arith.constant dense<0.000000e+00> : vector<32x32xf32>
    %112 = tpu.matmul %109, %111, %cst_57 {dimension_numbers = #tpu.dot_dimension_numbers<[1], [0], [0], [1], [0, 0, 1, 1], [], []>} : vector<32x32xf32>, vector<32x32xf32>, vector<32x32xf32> -> vector<32x32xf32>
    %c0_58 = arith.constant 0 : index
    %c0_59 = arith.constant 0 : index
    %c0_60 = arith.constant 0 : index
    %113 = vector.load %arg13[%c0_58, %c0_59, %c0_60] : memref<2x1x32xf32, #tpu.memory_space<vmem>>, vector<1x1x32xf32>
    %114 = vector.shape_cast %113 : vector<1x1x32xf32> to vector<1x32xf32>
    %115 = vector.broadcast %114 : vector<1x32xf32> to vector<32x32xf32>
    %116 = arith.addf %112, %115 : vector<32x32xf32>
    %117 = arith.addf %37, %116 : vector<32x32xf32>
    %c0_61 = arith.constant 0 : index
    %c0_62 = arith.constant 0 : index
    %c0_63 = arith.constant 0 : index
    %118 = vector.load %arg14[%c0_61, %c0_62, %c0_63] : memref<2x1x32xf32, #tpu.memory_space<vmem>>, vector<1x1x32xf32>
    %119 = vector.shape_cast %118 : vector<1x1x32xf32> to vector<1x32xf32>
    %c0_64 = arith.constant 0 : index
    %c0_65 = arith.constant 0 : index
    %c0_66 = arith.constant 0 : index
    %120 = vector.load %arg15[%c0_64, %c0_65, %c0_66] : memref<2x1x32xf32, #tpu.memory_space<vmem>>, vector<1x1x32xf32>
    %121 = vector.shape_cast %120 : vector<1x1x32xf32> to vector<1x32xf32>
    %cst_67 = arith.constant dense<0.000000e+00> : vector<32xf32>
    %122 = vector.multi_reduction <add>, %117, %cst_67 [1] : vector<32x32xf32> to vector<32xf32>
    %123 = vector.shape_cast %122 : vector<32xf32> to vector<32x1xf32>
    %cst_68 = arith.constant 3.200000e+01 : f32
    %124 = vector.broadcast %cst_68 : f32 to vector<32x1xf32>
    %125 = arith.divf %123, %124 : vector<32x1xf32>
    %126 = arith.mulf %117, %117 : vector<32x32xf32>
    %cst_69 = arith.constant dense<0.000000e+00> : vector<32xf32>
    %127 = vector.multi_reduction <add>, %126, %cst_69 [1] : vector<32x32xf32> to vector<32xf32>
    %128 = vector.shape_cast %127 : vector<32xf32> to vector<32x1xf32>
    %cst_70 = arith.constant 3.200000e+01 : f32
    %129 = vector.broadcast %cst_70 : f32 to vector<32x1xf32>
    %130 = arith.divf %128, %129 : vector<32x1xf32>
    %131 = arith.mulf %125, %125 : vector<32x1xf32>
    %132 = arith.subf %130, %131 : vector<32x1xf32>
    %133 = vector.broadcast %125 : vector<32x1xf32> to vector<32x32xf32>
    %134 = arith.subf %117, %133 : vector<32x32xf32>
    %cst_71 = arith.constant 9.99999974E-6 : f32
    %135 = vector.broadcast %cst_71 : f32 to vector<32x1xf32>
    %136 = arith.addf %132, %135 : vector<32x1xf32>
    %137 = math.rsqrt %136 : vector<32x1xf32>
    %138 = vector.broadcast %137 : vector<32x1xf32> to vector<32x32xf32>
    %139 = arith.mulf %134, %138 : vector<32x32xf32>
    %140 = vector.broadcast %119 : vector<1x32xf32> to vector<32x32xf32>
    %141 = arith.mulf %139, %140 : vector<32x32xf32>
    %142 = vector.broadcast %121 : vector<1x32xf32> to vector<32x32xf32>
    %143 = arith.addf %141, %142 : vector<32x32xf32>
    %c0_72 = arith.constant 0 : index
    %c0_73 = arith.constant 0 : index
    %c0_74 = arith.constant 0 : index
    %144 = vector.load %arg16[%c0_72, %c0_73, %c0_74] : memref<2x32x128xf32, #tpu.memory_space<vmem>>, vector<1x32x128xf32>
    %145 = vector.shape_cast %144 : vector<1x32x128xf32> to vector<32x128xf32>
    %cst_75 = arith.constant dense<0.000000e+00> : vector<32x128xf32>
    %146 = tpu.matmul %143, %145, %cst_75 {dimension_numbers = #tpu.dot_dimension_numbers<[1], [0], [0], [1], [0, 0, 1, 1], [], []>} : vector<32x32xf32>, vector<32x128xf32>, vector<32x128xf32> -> vector<32x128xf32>
    %c0_76 = arith.constant 0 : index
    %c0_77 = arith.constant 0 : index
    %c0_78 = arith.constant 0 : index
    %147 = vector.load %arg17[%c0_76, %c0_77, %c0_78] : memref<2x1x128xf32, #tpu.memory_space<vmem>>, vector<1x1x128xf32>
    %148 = vector.shape_cast %147 : vector<1x1x128xf32> to vector<1x128xf32>
    %149 = vector.broadcast %148 : vector<1x128xf32> to vector<32x128xf32>
    %150 = arith.addf %146, %149 : vector<32x128xf32>
    %cst_79 = arith.constant 0.000000e+00 : f32
    %151 = vector.broadcast %cst_79 : f32 to vector<32x128xf32>
    %152 = arith.maximumf %150, %151 : vector<32x128xf32>
    %c0_80 = arith.constant 0 : index
    %c0_81 = arith.constant 0 : index
    %c0_82 = arith.constant 0 : index
    %153 = vector.load %arg18[%c0_80, %c0_81, %c0_82] : memref<2x128x32xf32, #tpu.memory_space<vmem>>, vector<1x128x32xf32>
    %154 = vector.shape_cast %153 : vector<1x128x32xf32> to vector<128x32xf32>
    %cst_83 = arith.constant dense<0.000000e+00> : vector<32x32xf32>
    %155 = tpu.matmul %152, %154, %cst_83 {dimension_numbers = #tpu.dot_dimension_numbers<[1], [0], [0], [1], [0, 0, 1, 1], [], []>} : vector<32x128xf32>, vector<128x32xf32>, vector<32x32xf32> -> vector<32x32xf32>
    %c0_84 = arith.constant 0 : index
    %c0_85 = arith.constant 0 : index
    %c0_86 = arith.constant 0 : index
    %156 = vector.load %arg19[%c0_84, %c0_85, %c0_86] : memref<2x1x32xf32, #tpu.memory_space<vmem>>, vector<1x1x32xf32>
    %157 = vector.shape_cast %156 : vector<1x1x32xf32> to vector<1x32xf32>
    %158 = vector.broadcast %157 : vector<1x32xf32> to vector<32x32xf32>
    %159 = arith.addf %155, %158 : vector<32x32xf32>
    %160 = arith.addf %143, %159 : vector<32x32xf32>
    %c0_87 = arith.constant 0 : index
    %c0_88 = arith.constant 0 : index
    %c0_89 = arith.constant 0 : index
    %161 = vector.load %arg20[%c0_87, %c0_88, %c0_89] : memref<2x1x32xf32, #tpu.memory_space<vmem>>, vector<1x1x32xf32>
    %162 = vector.shape_cast %161 : vector<1x1x32xf32> to vector<1x32xf32>
    %c0_90 = arith.constant 0 : index
    %c0_91 = arith.constant 0 : index
    %c0_92 = arith.constant 0 : index
    %163 = vector.load %arg21[%c0_90, %c0_91, %c0_92] : memref<2x1x32xf32, #tpu.memory_space<vmem>>, vector<1x1x32xf32>
    %164 = vector.shape_cast %163 : vector<1x1x32xf32> to vector<1x32xf32>
    %cst_93 = arith.constant dense<0.000000e+00> : vector<32xf32>
    %165 = vector.multi_reduction <add>, %160, %cst_93 [1] : vector<32x32xf32> to vector<32xf32>
    %166 = vector.shape_cast %165 : vector<32xf32> to vector<32x1xf32>
    %cst_94 = arith.constant 3.200000e+01 : f32
    %167 = vector.broadcast %cst_94 : f32 to vector<32x1xf32>
    %168 = arith.divf %166, %167 : vector<32x1xf32>
    %169 = arith.mulf %160, %160 : vector<32x32xf32>
    %cst_95 = arith.constant dense<0.000000e+00> : vector<32xf32>
    %170 = vector.multi_reduction <add>, %169, %cst_95 [1] : vector<32x32xf32> to vector<32xf32>
    %171 = vector.shape_cast %170 : vector<32xf32> to vector<32x1xf32>
    %cst_96 = arith.constant 3.200000e+01 : f32
    %172 = vector.broadcast %cst_96 : f32 to vector<32x1xf32>
    %173 = arith.divf %171, %172 : vector<32x1xf32>
    %174 = arith.mulf %168, %168 : vector<32x1xf32>
    %175 = arith.subf %173, %174 : vector<32x1xf32>
    %176 = vector.broadcast %168 : vector<32x1xf32> to vector<32x32xf32>
    %177 = arith.subf %160, %176 : vector<32x32xf32>
    %cst_97 = arith.constant 9.99999974E-6 : f32
    %178 = vector.broadcast %cst_97 : f32 to vector<32x1xf32>
    %179 = arith.addf %175, %178 : vector<32x1xf32>
    %180 = math.rsqrt %179 : vector<32x1xf32>
    %181 = vector.broadcast %180 : vector<32x1xf32> to vector<32x32xf32>
    %182 = arith.mulf %177, %181 : vector<32x32xf32>
    %183 = vector.broadcast %162 : vector<1x32xf32> to vector<32x32xf32>
    %184 = arith.mulf %182, %183 : vector<32x32xf32>
    %185 = vector.broadcast %164 : vector<1x32xf32> to vector<32x32xf32>
    %186 = arith.addf %184, %185 : vector<32x32xf32>
    %c1 = arith.constant 1 : index
    %c0_98 = arith.constant 0 : index
    %c0_99 = arith.constant 0 : index
    %187 = vector.load %arg10[%c1, %c0_98, %c0_99] : memref<2x32x96xf32, #tpu.memory_space<vmem>>, vector<1x32x96xf32>
    %188 = vector.shape_cast %187 : vector<1x32x96xf32> to vector<32x96xf32>
    %cst_100 = arith.constant dense<0.000000e+00> : vector<32x96xf32>
    %189 = tpu.matmul %186, %188, %cst_100 {dimension_numbers = #tpu.dot_dimension_numbers<[1], [0], [0], [1], [0, 0, 1, 1], [], []>} : vector<32x32xf32>, vector<32x96xf32>, vector<32x96xf32> -> vector<32x96xf32>
    %c1_101 = arith.constant 1 : index
    %c0_102 = arith.constant 0 : index
    %c0_103 = arith.constant 0 : index
    %190 = vector.load %arg11[%c1_101, %c0_102, %c0_103] : memref<2x1x96xf32, #tpu.memory_space<vmem>>, vector<1x1x96xf32>
    %191 = vector.shape_cast %190 : vector<1x1x96xf32> to vector<1x96xf32>
    %192 = vector.broadcast %191 : vector<1x96xf32> to vector<32x96xf32>
    %193 = arith.addf %189, %192 : vector<32x96xf32>
    %194 = vector.extract_strided_slice %193 {offsets = [0, 0], sizes = [32, 8], strides = [1, 1]} : vector<32x96xf32> to vector<32x8xf32>
    %195 = vector.extract_strided_slice %193 {offsets = [0, 32], sizes = [32, 8], strides = [1, 1]} : vector<32x96xf32> to vector<32x8xf32>
    %196 = vector.extract_strided_slice %193 {offsets = [0, 64], sizes = [32, 8], strides = [1, 1]} : vector<32x96xf32> to vector<32x8xf32>
    %cst_104 = arith.constant dense<0.000000e+00> : vector<32x32xf32>
    %197 = tpu.matmul %194, %195, %cst_104 {dimension_numbers = #tpu.dot_dimension_numbers<[1], [1], [0], [0], [0, 0, 1, 0], [], []>} : vector<32x8xf32>, vector<32x8xf32>, vector<32x32xf32> -> vector<32x32xf32>
    %cst_105 = arith.constant 0.353553385 : f32
    %198 = vector.broadcast %cst_105 : f32 to vector<32x32xf32>
    %199 = arith.mulf %197, %198 : vector<32x32xf32>
    %cst_106 = arith.constant dense<0xFF800000> : vector<32xf32>
    %200 = vector.multi_reduction <maximumf>, %199, %cst_106 [1] : vector<32x32xf32> to vector<32xf32>
    %201 = vector.shape_cast %200 : vector<32xf32> to vector<32x1xf32>
    %202 = vector.broadcast %201 : vector<32x1xf32> to vector<32x32xf32>
    %203 = arith.subf %199, %202 : vector<32x32xf32>
    %204 = math.exp %203 : vector<32x32xf32>
    %cst_107 = arith.constant dense<0.000000e+00> : vector<32xf32>
    %205 = vector.multi_reduction <add>, %204, %cst_107 [1] : vector<32x32xf32> to vector<32xf32>
    %206 = vector.shape_cast %205 : vector<32xf32> to vector<32x1xf32>
    %207 = vector.broadcast %206 : vector<32x1xf32> to vector<32x32xf32>
    %208 = arith.divf %204, %207 : vector<32x32xf32>
    %cst_108 = arith.constant dense<0.000000e+00> : vector<32x8xf32>
    %209 = tpu.matmul %208, %196, %cst_108 {dimension_numbers = #tpu.dot_dimension_numbers<[1], [0], [0], [1], [0, 0, 1, 1], [], []>} : vector<32x32xf32>, vector<32x8xf32>, vector<32x8xf32> -> vector<32x8xf32>
    %210 = vector.extract_strided_slice %193 {offsets = [0, 8], sizes = [32, 8], strides = [1, 1]} : vector<32x96xf32> to vector<32x8xf32>
    %211 = vector.extract_strided_slice %193 {offsets = [0, 40], sizes = [32, 8], strides = [1, 1]} : vector<32x96xf32> to vector<32x8xf32>
    %212 = vector.extract_strided_slice %193 {offsets = [0, 72], sizes = [32, 8], strides = [1, 1]} : vector<32x96xf32> to vector<32x8xf32>
    %cst_109 = arith.constant dense<0.000000e+00> : vector<32x32xf32>
    %213 = tpu.matmul %210, %211, %cst_109 {dimension_numbers = #tpu.dot_dimension_numbers<[1], [1], [0], [0], [0, 0, 1, 0], [], []>} : vector<32x8xf32>, vector<32x8xf32>, vector<32x32xf32> -> vector<32x32xf32>
    %cst_110 = arith.constant 0.353553385 : f32
    %214 = vector.broadcast %cst_110 : f32 to vector<32x32xf32>
    %215 = arith.mulf %213, %214 : vector<32x32xf32>
    %cst_111 = arith.constant dense<0xFF800000> : vector<32xf32>
    %216 = vector.multi_reduction <maximumf>, %215, %cst_111 [1] : vector<32x32xf32> to vector<32xf32>
    %217 = vector.shape_cast %216 : vector<32xf32> to vector<32x1xf32>
    %218 = vector.broadcast %217 : vector<32x1xf32> to vector<32x32xf32>
    %219 = arith.subf %215, %218 : vector<32x32xf32>
    %220 = math.exp %219 : vector<32x32xf32>
    %cst_112 = arith.constant dense<0.000000e+00> : vector<32xf32>
    %221 = vector.multi_reduction <add>, %220, %cst_112 [1] : vector<32x32xf32> to vector<32xf32>
    %222 = vector.shape_cast %221 : vector<32xf32> to vector<32x1xf32>
    %223 = vector.broadcast %222 : vector<32x1xf32> to vector<32x32xf32>
    %224 = arith.divf %220, %223 : vector<32x32xf32>
    %cst_113 = arith.constant dense<0.000000e+00> : vector<32x8xf32>
    %225 = tpu.matmul %224, %212, %cst_113 {dimension_numbers = #tpu.dot_dimension_numbers<[1], [0], [0], [1], [0, 0, 1, 1], [], []>} : vector<32x32xf32>, vector<32x8xf32>, vector<32x8xf32> -> vector<32x8xf32>
    %226 = vector.extract_strided_slice %193 {offsets = [0, 16], sizes = [32, 8], strides = [1, 1]} : vector<32x96xf32> to vector<32x8xf32>
    %227 = vector.extract_strided_slice %193 {offsets = [0, 48], sizes = [32, 8], strides = [1, 1]} : vector<32x96xf32> to vector<32x8xf32>
    %228 = vector.extract_strided_slice %193 {offsets = [0, 80], sizes = [32, 8], strides = [1, 1]} : vector<32x96xf32> to vector<32x8xf32>
    %cst_114 = arith.constant dense<0.000000e+00> : vector<32x32xf32>
    %229 = tpu.matmul %226, %227, %cst_114 {dimension_numbers = #tpu.dot_dimension_numbers<[1], [1], [0], [0], [0, 0, 1, 0], [], []>} : vector<32x8xf32>, vector<32x8xf32>, vector<32x32xf32> -> vector<32x32xf32>
    %cst_115 = arith.constant 0.353553385 : f32
    %230 = vector.broadcast %cst_115 : f32 to vector<32x32xf32>
    %231 = arith.mulf %229, %230 : vector<32x32xf32>
    %cst_116 = arith.constant dense<0xFF800000> : vector<32xf32>
    %232 = vector.multi_reduction <maximumf>, %231, %cst_116 [1] : vector<32x32xf32> to vector<32xf32>
    %233 = vector.shape_cast %232 : vector<32xf32> to vector<32x1xf32>
    %234 = vector.broadcast %233 : vector<32x1xf32> to vector<32x32xf32>
    %235 = arith.subf %231, %234 : vector<32x32xf32>
    %236 = math.exp %235 : vector<32x32xf32>
    %cst_117 = arith.constant dense<0.000000e+00> : vector<32xf32>
    %237 = vector.multi_reduction <add>, %236, %cst_117 [1] : vector<32x32xf32> to vector<32xf32>
    %238 = vector.shape_cast %237 : vector<32xf32> to vector<32x1xf32>
    %239 = vector.broadcast %238 : vector<32x1xf32> to vector<32x32xf32>
    %240 = arith.divf %236, %239 : vector<32x32xf32>
    %cst_118 = arith.constant dense<0.000000e+00> : vector<32x8xf32>
    %241 = tpu.matmul %240, %228, %cst_118 {dimension_numbers = #tpu.dot_dimension_numbers<[1], [0], [0], [1], [0, 0, 1, 1], [], []>} : vector<32x32xf32>, vector<32x8xf32>, vector<32x8xf32> -> vector<32x8xf32>
    %242 = vector.extract_strided_slice %193 {offsets = [0, 24], sizes = [32, 8], strides = [1, 1]} : vector<32x96xf32> to vector<32x8xf32>
    %243 = vector.extract_strided_slice %193 {offsets = [0, 56], sizes = [32, 8], strides = [1, 1]} : vector<32x96xf32> to vector<32x8xf32>
    %244 = vector.extract_strided_slice %193 {offsets = [0, 88], sizes = [32, 8], strides = [1, 1]} : vector<32x96xf32> to vector<32x8xf32>
    %cst_119 = arith.constant dense<0.000000e+00> : vector<32x32xf32>
    %245 = tpu.matmul %242, %243, %cst_119 {dimension_numbers = #tpu.dot_dimension_numbers<[1], [1], [0], [0], [0, 0, 1, 0], [], []>} : vector<32x8xf32>, vector<32x8xf32>, vector<32x32xf32> -> vector<32x32xf32>
    %cst_120 = arith.constant 0.353553385 : f32
    %246 = vector.broadcast %cst_120 : f32 to vector<32x32xf32>
    %247 = arith.mulf %245, %246 : vector<32x32xf32>
    %cst_121 = arith.constant dense<0xFF800000> : vector<32xf32>
    %248 = vector.multi_reduction <maximumf>, %247, %cst_121 [1] : vector<32x32xf32> to vector<32xf32>
    %249 = vector.shape_cast %248 : vector<32xf32> to vector<32x1xf32>
    %250 = vector.broadcast %249 : vector<32x1xf32> to vector<32x32xf32>
    %251 = arith.subf %247, %250 : vector<32x32xf32>
    %252 = math.exp %251 : vector<32x32xf32>
    %cst_122 = arith.constant dense<0.000000e+00> : vector<32xf32>
    %253 = vector.multi_reduction <add>, %252, %cst_122 [1] : vector<32x32xf32> to vector<32xf32>
    %254 = vector.shape_cast %253 : vector<32xf32> to vector<32x1xf32>
    %255 = vector.broadcast %254 : vector<32x1xf32> to vector<32x32xf32>
    %256 = arith.divf %252, %255 : vector<32x32xf32>
    %cst_123 = arith.constant dense<0.000000e+00> : vector<32x8xf32>
    %257 = tpu.matmul %256, %244, %cst_123 {dimension_numbers = #tpu.dot_dimension_numbers<[1], [0], [0], [1], [0, 0, 1, 1], [], []>} : vector<32x32xf32>, vector<32x8xf32>, vector<32x8xf32> -> vector<32x8xf32>
    %258 = tpu.concatenate %209, %225, %241, %257 in 1 : vector<32x8xf32>, vector<32x8xf32>, vector<32x8xf32>, vector<32x8xf32> -> vector<32x32xf32>
    %c1_124 = arith.constant 1 : index
    %c0_125 = arith.constant 0 : index
    %c0_126 = arith.constant 0 : index
    %259 = vector.load %arg12[%c1_124, %c0_125, %c0_126] : memref<2x32x32xf32, #tpu.memory_space<vmem>>, vector<1x32x32xf32>
    %260 = vector.shape_cast %259 : vector<1x32x32xf32> to vector<32x32xf32>
    %cst_127 = arith.constant dense<0.000000e+00> : vector<32x32xf32>
    %261 = tpu.matmul %258, %260, %cst_127 {dimension_numbers = #tpu.dot_dimension_numbers<[1], [0], [0], [1], [0, 0, 1, 1], [], []>} : vector<32x32xf32>, vector<32x32xf32>, vector<32x32xf32> -> vector<32x32xf32>
    %c1_128 = arith.constant 1 : index
    %c0_129 = arith.constant 0 : index
    %c0_130 = arith.constant 0 : index
    %262 = vector.load %arg13[%c1_128, %c0_129, %c0_130] : memref<2x1x32xf32, #tpu.memory_space<vmem>>, vector<1x1x32xf32>
    %263 = vector.shape_cast %262 : vector<1x1x32xf32> to vector<1x32xf32>
    %264 = vector.broadcast %263 : vector<1x32xf32> to vector<32x32xf32>
    %265 = arith.addf %261, %264 : vector<32x32xf32>
    %266 = arith.addf %186, %265 : vector<32x32xf32>
    %c1_131 = arith.constant 1 : index
    %c0_132 = arith.constant 0 : index
    %c0_133 = arith.constant 0 : index
    %267 = vector.load %arg14[%c1_131, %c0_132, %c0_133] : memref<2x1x32xf32, #tpu.memory_space<vmem>>, vector<1x1x32xf32>
    %268 = vector.shape_cast %267 : vector<1x1x32xf32> to vector<1x32xf32>
    %c1_134 = arith.constant 1 : index
    %c0_135 = arith.constant 0 : index
    %c0_136 = arith.constant 0 : index
    %269 = vector.load %arg15[%c1_134, %c0_135, %c0_136] : memref<2x1x32xf32, #tpu.memory_space<vmem>>, vector<1x1x32xf32>
    %270 = vector.shape_cast %269 : vector<1x1x32xf32> to vector<1x32xf32>
    %cst_137 = arith.constant dense<0.000000e+00> : vector<32xf32>
    %271 = vector.multi_reduction <add>, %266, %cst_137 [1] : vector<32x32xf32> to vector<32xf32>
    %272 = vector.shape_cast %271 : vector<32xf32> to vector<32x1xf32>
    %cst_138 = arith.constant 3.200000e+01 : f32
    %273 = vector.broadcast %cst_138 : f32 to vector<32x1xf32>
    %274 = arith.divf %272, %273 : vector<32x1xf32>
    %275 = arith.mulf %266, %266 : vector<32x32xf32>
    %cst_139 = arith.constant dense<0.000000e+00> : vector<32xf32>
    %276 = vector.multi_reduction <add>, %275, %cst_139 [1] : vector<32x32xf32> to vector<32xf32>
    %277 = vector.shape_cast %276 : vector<32xf32> to vector<32x1xf32>
    %cst_140 = arith.constant 3.200000e+01 : f32
    %278 = vector.broadcast %cst_140 : f32 to vector<32x1xf32>
    %279 = arith.divf %277, %278 : vector<32x1xf32>
    %280 = arith.mulf %274, %274 : vector<32x1xf32>
    %281 = arith.subf %279, %280 : vector<32x1xf32>
    %282 = vector.broadcast %274 : vector<32x1xf32> to vector<32x32xf32>
    %283 = arith.subf %266, %282 : vector<32x32xf32>
    %cst_141 = arith.constant 9.99999974E-6 : f32
    %284 = vector.broadcast %cst_141 : f32 to vector<32x1xf32>
    %285 = arith.addf %281, %284 : vector<32x1xf32>
    %286 = math.rsqrt %285 : vector<32x1xf32>
    %287 = vector.broadcast %286 : vector<32x1xf32> to vector<32x32xf32>
    %288 = arith.mulf %283, %287 : vector<32x32xf32>
    %289 = vector.broadcast %268 : vector<1x32xf32> to vector<32x32xf32>
    %290 = arith.mulf %288, %289 : vector<32x32xf32>
    %291 = vector.broadcast %270 : vector<1x32xf32> to vector<32x32xf32>
    %292 = arith.addf %290, %291 : vector<32x32xf32>
    %c1_142 = arith.constant 1 : index
    %c0_143 = arith.constant 0 : index
    %c0_144 = arith.constant 0 : index
    %293 = vector.load %arg16[%c1_142, %c0_143, %c0_144] : memref<2x32x128xf32, #tpu.memory_space<vmem>>, vector<1x32x128xf32>
    %294 = vector.shape_cast %293 : vector<1x32x128xf32> to vector<32x128xf32>
    %cst_145 = arith.constant dense<0.000000e+00> : vector<32x128xf32>
    %295 = tpu.matmul %292, %294, %cst_145 {dimension_numbers = #tpu.dot_dimension_numbers<[1], [0], [0], [1], [0, 0, 1, 1], [], []>} : vector<32x32xf32>, vector<32x128xf32>, vector<32x128xf32> -> vector<32x128xf32>
    %c1_146 = arith.constant 1 : index
    %c0_147 = arith.constant 0 : index
    %c0_148 = arith.constant 0 : index
    %296 = vector.load %arg17[%c1_146, %c0_147, %c0_148] : memref<2x1x128xf32, #tpu.memory_space<vmem>>, vector<1x1x128xf32>
    %297 = vector.shape_cast %296 : vector<1x1x128xf32> to vector<1x128xf32>
    %298 = vector.broadcast %297 : vector<1x128xf32> to vector<32x128xf32>
    %299 = arith.addf %295, %298 : vector<32x128xf32>
    %cst_149 = arith.constant 0.000000e+00 : f32
    %300 = vector.broadcast %cst_149 : f32 to vector<32x128xf32>
    %301 = arith.maximumf %299, %300 : vector<32x128xf32>
    %c1_150 = arith.constant 1 : index
    %c0_151 = arith.constant 0 : index
    %c0_152 = arith.constant 0 : index
    %302 = vector.load %arg18[%c1_150, %c0_151, %c0_152] : memref<2x128x32xf32, #tpu.memory_space<vmem>>, vector<1x128x32xf32>
    %303 = vector.shape_cast %302 : vector<1x128x32xf32> to vector<128x32xf32>
    %cst_153 = arith.constant dense<0.000000e+00> : vector<32x32xf32>
    %304 = tpu.matmul %301, %303, %cst_153 {dimension_numbers = #tpu.dot_dimension_numbers<[1], [0], [0], [1], [0, 0, 1, 1], [], []>} : vector<32x128xf32>, vector<128x32xf32>, vector<32x32xf32> -> vector<32x32xf32>
    %c1_154 = arith.constant 1 : index
    %c0_155 = arith.constant 0 : index
    %c0_156 = arith.constant 0 : index
    %305 = vector.load %arg19[%c1_154, %c0_155, %c0_156] : memref<2x1x32xf32, #tpu.memory_space<vmem>>, vector<1x1x32xf32>
    %306 = vector.shape_cast %305 : vector<1x1x32xf32> to vector<1x32xf32>
    %307 = vector.broadcast %306 : vector<1x32xf32> to vector<32x32xf32>
    %308 = arith.addf %304, %307 : vector<32x32xf32>
    %309 = arith.addf %292, %308 : vector<32x32xf32>
    %c1_157 = arith.constant 1 : index
    %c0_158 = arith.constant 0 : index
    %c0_159 = arith.constant 0 : index
    %310 = vector.load %arg20[%c1_157, %c0_158, %c0_159] : memref<2x1x32xf32, #tpu.memory_space<vmem>>, vector<1x1x32xf32>
    %311 = vector.shape_cast %310 : vector<1x1x32xf32> to vector<1x32xf32>
    %c1_160 = arith.constant 1 : index
    %c0_161 = arith.constant 0 : index
    %c0_162 = arith.constant 0 : index
    %312 = vector.load %arg21[%c1_160, %c0_161, %c0_162] : memref<2x1x32xf32, #tpu.memory_space<vmem>>, vector<1x1x32xf32>
    %313 = vector.shape_cast %312 : vector<1x1x32xf32> to vector<1x32xf32>
    %cst_163 = arith.constant dense<0.000000e+00> : vector<32xf32>
    %314 = vector.multi_reduction <add>, %309, %cst_163 [1] : vector<32x32xf32> to vector<32xf32>
    %315 = vector.shape_cast %314 : vector<32xf32> to vector<32x1xf32>
    %cst_164 = arith.constant 3.200000e+01 : f32
    %316 = vector.broadcast %cst_164 : f32 to vector<32x1xf32>
    %317 = arith.divf %315, %316 : vector<32x1xf32>
    %318 = arith.mulf %309, %309 : vector<32x32xf32>
    %cst_165 = arith.constant dense<0.000000e+00> : vector<32xf32>
    %319 = vector.multi_reduction <add>, %318, %cst_165 [1] : vector<32x32xf32> to vector<32xf32>
    %320 = vector.shape_cast %319 : vector<32xf32> to vector<32x1xf32>
    %cst_166 = arith.constant 3.200000e+01 : f32
    %321 = vector.broadcast %cst_166 : f32 to vector<32x1xf32>
    %322 = arith.divf %320, %321 : vector<32x1xf32>
    %323 = arith.mulf %317, %317 : vector<32x1xf32>
    %324 = arith.subf %322, %323 : vector<32x1xf32>
    %325 = vector.broadcast %317 : vector<32x1xf32> to vector<32x32xf32>
    %326 = arith.subf %309, %325 : vector<32x32xf32>
    %cst_167 = arith.constant 9.99999974E-6 : f32
    %327 = vector.broadcast %cst_167 : f32 to vector<32x1xf32>
    %328 = arith.addf %324, %327 : vector<32x1xf32>
    %329 = math.rsqrt %328 : vector<32x1xf32>
    %330 = vector.broadcast %329 : vector<32x1xf32> to vector<32x32xf32>
    %331 = arith.mulf %326, %330 : vector<32x32xf32>
    %332 = vector.broadcast %311 : vector<1x32xf32> to vector<32x32xf32>
    %333 = arith.mulf %331, %332 : vector<32x32xf32>
    %334 = vector.broadcast %313 : vector<1x32xf32> to vector<32x32xf32>
    %335 = arith.addf %333, %334 : vector<32x32xf32>
    %c0_168 = arith.constant 0 : index
    %c0_169 = arith.constant 0 : index
    %336 = vector.load %arg22[%c0_168, %c0_169] : memref<32x64xf32, #tpu.memory_space<vmem>>, vector<32x64xf32>
    %cst_170 = arith.constant dense<0.000000e+00> : vector<32x64xf32>
    %337 = tpu.matmul %335, %336, %cst_170 {dimension_numbers = #tpu.dot_dimension_numbers<[1], [0], [0], [1], [0, 0, 1, 1], [], []>} : vector<32x32xf32>, vector<32x64xf32>, vector<32x64xf32> -> vector<32x64xf32>
    %c0_171 = arith.constant 0 : index
    %c0_172 = arith.constant 0 : index
    %338 = vector.load %arg23[%c0_171, %c0_172] : memref<1x64xf32, #tpu.memory_space<vmem>>, vector<1x64xf32>
    %339 = vector.broadcast %338 : vector<1x64xf32> to vector<32x64xf32>
    %340 = arith.addf %337, %339 : vector<32x64xf32>
    %cst_173 = arith.constant 0.000000e+00 : f32
    %341 = vector.broadcast %cst_173 : f32 to vector<32x64xf32>
    %342 = arith.maximumf %340, %341 : vector<32x64xf32>
    %c0_174 = arith.constant 0 : index
    %c0_175 = arith.constant 0 : index
    %343 = vector.load %arg24[%c0_174, %c0_175] : memref<1x64xf32, #tpu.memory_space<vmem>>, vector<1x64xf32>
    %344 = vector.broadcast %343 : vector<1x64xf32> to vector<32x64xf32>
    %345 = arith.mulf %342, %344 : vector<32x64xf32>
    %cst_176 = arith.constant dense<0.000000e+00> : vector<32xf32>
    %346 = vector.multi_reduction <add>, %345, %cst_176 [1] : vector<32x64xf32> to vector<32xf32>
    %347 = vector.shape_cast %346 : vector<32xf32> to vector<32x1xf32>
    %c0_177 = arith.constant 0 : index
    %c0_178 = arith.constant 0 : index
    %348 = vector.load %arg25[%c0_177, %c0_178] : memref<1x1xf32, #tpu.memory_space<vmem>>, vector<1x1xf32>
    %349 = vector.broadcast %348 : vector<1x1xf32> to vector<32x1xf32>
    %350 = arith.addf %347, %349 : vector<32x1xf32>
    %351 = vector.shape_cast %350 : vector<32x1xf32> to vector<1x32x1xf32>
    %cst_179 = arith.constant dense<0xFF800000> : vector<1xf32>
    %352 = vector.multi_reduction <maximumf>, %351, %cst_179 [1, 2] : vector<1x32x1xf32> to vector<1xf32>
    %353 = vector.shape_cast %352 : vector<1xf32> to vector<1x1x1xf32>
    %354 = vector.extract %353[0, 0, 0] : f32 from vector<1x1x1xf32>
    %355 = vector.broadcast %354 : f32 to vector<32x1xf32>
    %356 = arith.subf %350, %355 : vector<32x1xf32>
    %357 = math.exp %356 : vector<32x1xf32>
    %358 = vector.shape_cast %357 : vector<32x1xf32> to vector<1x32x1xf32>
    %cst_180 = arith.constant dense<0.000000e+00> : vector<1xf32>
    %359 = vector.multi_reduction <add>, %358, %cst_180 [1, 2] : vector<1x32x1xf32> to vector<1xf32>
    %360 = vector.shape_cast %359 : vector<1xf32> to vector<1x1x1xf32>
    %361 = vector.extract %360[0, 0, 0] : f32 from vector<1x1x1xf32>
    %362 = vector.broadcast %361 : f32 to vector<32x1xf32>
    %363 = arith.divf %357, %362 : vector<32x1xf32>
    %364 = vector.broadcast %363 : vector<32x1xf32> to vector<32x32xf32>
    %365 = arith.mulf %364, %335 : vector<32x32xf32>
    %cst_181 = arith.constant dense<0.000000e+00> : vector<32xf32>
    %366 = vector.multi_reduction <add>, %365, %cst_181 [0] : vector<32x32xf32> to vector<32xf32>
    %367 = vector.shape_cast %366 : vector<32xf32> to vector<1x32xf32>
    %c0_182 = arith.constant 0 : index
    %c0_183 = arith.constant 0 : index
    %368 = vector.load %arg26[%c0_182, %c0_183] : memref<1x32xf32, #tpu.memory_space<vmem>>, vector<1x32xf32>
    %369 = arith.mulf %367, %368 : vector<1x32xf32>
    %cst_184 = arith.constant dense<0.000000e+00> : vector<1xf32>
    %370 = vector.multi_reduction <add>, %369, %cst_184 [1] : vector<1x32xf32> to vector<1xf32>
    %371 = vector.shape_cast %370 : vector<1xf32> to vector<1x1xf32>
    %c0_185 = arith.constant 0 : index
    %c0_186 = arith.constant 0 : index
    %372 = vector.load %arg27[%c0_185, %c0_186] : memref<1x1xf32, #tpu.memory_space<vmem>>, vector<1x1xf32>
    %373 = arith.addf %371, %372 : vector<1x1xf32>
    %374 = arith.negf %373 : vector<1x1xf32>
    %375 = math.exp %374 : vector<1x1xf32>
    %cst_187 = arith.constant 1.000000e+00 : f32
    %376 = vector.broadcast %cst_187 : f32 to vector<1x1xf32>
    %377 = arith.addf %376, %375 : vector<1x1xf32>
    %378 = arith.divf %376, %377 : vector<1x1xf32>
    %cst_188 = arith.constant 0.000000e+00 : f32
    %379 = vector.broadcast %cst_188 : f32 to vector<1x128xf32>
    %380 = vector.broadcast %378 : vector<1x1xf32> to vector<1x128xf32>
    %381 = arith.addf %380, %379 : vector<1x128xf32>
    %c0_189 = arith.constant 0 : index
    %c0_190 = arith.constant 0 : index
    %c0_191 = arith.constant 0 : index
    %382 = vector.load %arg28[%c0_189, %c0_190, %c0_191] : memref<1x1x128xf32, #tpu.memory_space<vmem>>, vector<1x1x128xf32>
    %383 = vector.shape_cast %382 : vector<1x1x128xf32> to vector<1x128xf32>
    %384 = vector.shape_cast %381 : vector<1x128xf32> to vector<1x1x128xf32>
    tpu.vector_store %arg28[%c0_189, %c0_190, %c0_191], %384 {strides = array<i32>} : memref<1x1x128xf32, #tpu.memory_space<vmem>>, vector<1x1x128xf32>,
    return
  }
  func.func @transform_0(%arg0: i32) -> (i32, i32, i32) {
    %c0_i32 = arith.constant 0 : i32
    %c0_i32_0 = arith.constant 0 : i32
    %c0_i32_1 = arith.constant 0 : i32
    return %arg0, %c0_i32, %c0_i32_0 : i32, i32, i32
  }
  func.func @transform_1(%arg0: i32) -> (i32, i32) {
    %c0_i32 = arith.constant 0 : i32
    %c0_i32_0 = arith.constant 0 : i32
    %c0_i32_1 = arith.constant 0 : i32
    return %c0_i32, %c0_i32_0 : i32, i32
  }
  func.func @transform_2(%arg0: i32) -> (i32, i32) {
    %c0_i32 = arith.constant 0 : i32
    %c0_i32_0 = arith.constant 0 : i32
    %c0_i32_1 = arith.constant 0 : i32
    return %c0_i32, %c0_i32_0 : i32, i32
  }
  func.func @transform_3(%arg0: i32) -> (i32, i32) {
    %c0_i32 = arith.constant 0 : i32
    %c0_i32_0 = arith.constant 0 : i32
    %c0_i32_1 = arith.constant 0 : i32
    return %c0_i32, %c0_i32_0 : i32, i32
  }
  func.func @transform_4(%arg0: i32) -> (i32, i32) {
    %c0_i32 = arith.constant 0 : i32
    %c0_i32_0 = arith.constant 0 : i32
    %c0_i32_1 = arith.constant 0 : i32
    return %c0_i32, %c0_i32_0 : i32, i32
  }
  func.func @transform_5(%arg0: i32) -> (i32, i32) {
    %c0_i32 = arith.constant 0 : i32
    %c0_i32_0 = arith.constant 0 : i32
    %c0_i32_1 = arith.constant 0 : i32
    return %c0_i32, %c0_i32_0 : i32, i32
  }
  func.func @transform_6(%arg0: i32) -> (i32, i32) {
    %c0_i32 = arith.constant 0 : i32
    %c0_i32_0 = arith.constant 0 : i32
    %c0_i32_1 = arith.constant 0 : i32
    return %c0_i32, %c0_i32_0 : i32, i32
  }
  func.func @transform_7(%arg0: i32) -> (i32, i32) {
    %c0_i32 = arith.constant 0 : i32
    %c0_i32_0 = arith.constant 0 : i32
    %c0_i32_1 = arith.constant 0 : i32
    return %c0_i32, %c0_i32_0 : i32, i32
  }
  func.func @transform_8(%arg0: i32) -> (i32, i32) {
    %c0_i32 = arith.constant 0 : i32
    %c0_i32_0 = arith.constant 0 : i32
    %c0_i32_1 = arith.constant 0 : i32
    return %c0_i32, %c0_i32_0 : i32, i32
  }
  func.func @transform_9(%arg0: i32) -> (i32, i32, i32) {
    %c0_i32 = arith.constant 0 : i32
    %c0_i32_0 = arith.constant 0 : i32
    %c0_i32_1 = arith.constant 0 : i32
    %c0_i32_2 = arith.constant 0 : i32
    return %c0_i32, %c0_i32_0, %c0_i32_1 : i32, i32, i32
  }
  func.func @transform_10(%arg0: i32) -> (i32, i32, i32) {
    %c0_i32 = arith.constant 0 : i32
    %c0_i32_0 = arith.constant 0 : i32
    %c0_i32_1 = arith.constant 0 : i32
    %c0_i32_2 = arith.constant 0 : i32
    return %c0_i32, %c0_i32_0, %c0_i32_1 : i32, i32, i32
  }
  func.func @transform_11(%arg0: i32) -> (i32, i32, i32) {
    %c0_i32 = arith.constant 0 : i32
    %c0_i32_0 = arith.constant 0 : i32
    %c0_i32_1 = arith.constant 0 : i32
    %c0_i32_2 = arith.constant 0 : i32
    return %c0_i32, %c0_i32_0, %c0_i32_1 : i32, i32, i32
  }
  func.func @transform_12(%arg0: i32) -> (i32, i32, i32) {
    %c0_i32 = arith.constant 0 : i32
    %c0_i32_0 = arith.constant 0 : i32
    %c0_i32_1 = arith.constant 0 : i32
    %c0_i32_2 = arith.constant 0 : i32
    return %c0_i32, %c0_i32_0, %c0_i32_1 : i32, i32, i32
  }
  func.func @transform_13(%arg0: i32) -> (i32, i32, i32) {
    %c0_i32 = arith.constant 0 : i32
    %c0_i32_0 = arith.constant 0 : i32
    %c0_i32_1 = arith.constant 0 : i32
    %c0_i32_2 = arith.constant 0 : i32
    return %c0_i32, %c0_i32_0, %c0_i32_1 : i32, i32, i32
  }
  func.func @transform_14(%arg0: i32) -> (i32, i32, i32) {
    %c0_i32 = arith.constant 0 : i32
    %c0_i32_0 = arith.constant 0 : i32
    %c0_i32_1 = arith.constant 0 : i32
    %c0_i32_2 = arith.constant 0 : i32
    return %c0_i32, %c0_i32_0, %c0_i32_1 : i32, i32, i32
  }
  func.func @transform_15(%arg0: i32) -> (i32, i32, i32) {
    %c0_i32 = arith.constant 0 : i32
    %c0_i32_0 = arith.constant 0 : i32
    %c0_i32_1 = arith.constant 0 : i32
    %c0_i32_2 = arith.constant 0 : i32
    return %c0_i32, %c0_i32_0, %c0_i32_1 : i32, i32, i32
  }
  func.func @transform_16(%arg0: i32) -> (i32, i32, i32) {
    %c0_i32 = arith.constant 0 : i32
    %c0_i32_0 = arith.constant 0 : i32
    %c0_i32_1 = arith.constant 0 : i32
    %c0_i32_2 = arith.constant 0 : i32
    return %c0_i32, %c0_i32_0, %c0_i32_1 : i32, i32, i32
  }
  func.func @transform_17(%arg0: i32) -> (i32, i32, i32) {
    %c0_i32 = arith.constant 0 : i32
    %c0_i32_0 = arith.constant 0 : i32
    %c0_i32_1 = arith.constant 0 : i32
    %c0_i32_2 = arith.constant 0 : i32
    return %c0_i32, %c0_i32_0, %c0_i32_1 : i32, i32, i32
  }
  func.func @transform_18(%arg0: i32) -> (i32, i32, i32) {
    %c0_i32 = arith.constant 0 : i32
    %c0_i32_0 = arith.constant 0 : i32
    %c0_i32_1 = arith.constant 0 : i32
    %c0_i32_2 = arith.constant 0 : i32
    return %c0_i32, %c0_i32_0, %c0_i32_1 : i32, i32, i32
  }
  func.func @transform_19(%arg0: i32) -> (i32, i32, i32) {
    %c0_i32 = arith.constant 0 : i32
    %c0_i32_0 = arith.constant 0 : i32
    %c0_i32_1 = arith.constant 0 : i32
    %c0_i32_2 = arith.constant 0 : i32
    return %c0_i32, %c0_i32_0, %c0_i32_1 : i32, i32, i32
  }
  func.func @transform_20(%arg0: i32) -> (i32, i32, i32) {
    %c0_i32 = arith.constant 0 : i32
    %c0_i32_0 = arith.constant 0 : i32
    %c0_i32_1 = arith.constant 0 : i32
    %c0_i32_2 = arith.constant 0 : i32
    return %c0_i32, %c0_i32_0, %c0_i32_1 : i32, i32, i32
  }
  func.func @transform_21(%arg0: i32) -> (i32, i32) {
    %c0_i32 = arith.constant 0 : i32
    %c0_i32_0 = arith.constant 0 : i32
    %c0_i32_1 = arith.constant 0 : i32
    return %c0_i32, %c0_i32_0 : i32, i32
  }
  func.func @transform_22(%arg0: i32) -> (i32, i32) {
    %c0_i32 = arith.constant 0 : i32
    %c0_i32_0 = arith.constant 0 : i32
    %c0_i32_1 = arith.constant 0 : i32
    return %c0_i32, %c0_i32_0 : i32, i32
  }
  func.func @transform_23(%arg0: i32) -> (i32, i32) {
    %c0_i32 = arith.constant 0 : i32
    %c0_i32_0 = arith.constant 0 : i32
    %c0_i32_1 = arith.constant 0 : i32
    return %c0_i32, %c0_i32_0 : i32, i32
  }
  func.func @transform_24(%arg0: i32) -> (i32, i32) {
    %c0_i32 = arith.constant 0 : i32
    %c0_i32_0 = arith.constant 0 : i32
    %c0_i32_1 = arith.constant 0 : i32
    return %c0_i32, %c0_i32_0 : i32, i32
  }
  func.func @transform_25(%arg0: i32) -> (i32, i32) {
    %c0_i32 = arith.constant 0 : i32
    %c0_i32_0 = arith.constant 0 : i32
    %c0_i32_1 = arith.constant 0 : i32
    return %c0_i32, %c0_i32_0 : i32, i32
  }
  func.func @transform_26(%arg0: i32) -> (i32, i32) {
    %c0_i32 = arith.constant 0 : i32
    %c0_i32_0 = arith.constant 0 : i32
    %c0_i32_1 = arith.constant 0 : i32
    return %c0_i32, %c0_i32_0 : i32, i32
  }
  func.func @transform_27(%arg0: i32) -> (i32, i32, i32) {
    %c0_i32 = arith.constant 0 : i32
    %c0_i32_0 = arith.constant 0 : i32
    %c0_i32_1 = arith.constant 0 : i32
    return %arg0, %c0_i32, %c0_i32_0 : i32, i32, i32
  }
}

</mosaic_0001>

<llo_original>
// kernel: forward.1
$region0: #{forward.1}
  #allocation0 [shape = 'u32[]', space=smem, size = 0x4, offset = 0x4, fixed_abs, tag = 'smem constant byte address 0x4 - core index']
  #allocation1 [shape = 'u32[72,128]{1,0:T(1,128)}', space=vmem, size = 0x9000, scoped, tag = 'internal scratch']
  #allocation2 [shape = 'f32[1,1]{1,0:T(1,128)S(1)}', space=vmem, size = 0x200, scoped, tag = 'scoped memory for forward.1']
  #allocation3 [shape = 'f32[1,1]{1,0:T(1,128)S(1)}', space=vmem, size = 0x200, scoped, tag = 'scoped memory for forward.1']
  %s0 = inlined_call_operand.vmem [shape: f32[2,64,128], index: 0, kind: input, shape index: {}]
  %s1 = inlined_call_operand.vmem [shape: f32[128,64], index: 1, kind: input, shape index: {}]
  %s2 = inlined_call_operand.vmem [shape: f32[16,128], index: 2, kind: input, shape index: {}]
  %s3 = inlined_call_operand.vmem [shape: f32[32,16], index: 3, kind: input, shape index: {}]
  %s4 = inlined_call_operand.vmem [shape: f32[1,128], index: 4, kind: input, shape index: {}]
  %s5 = inlined_call_operand.vmem [shape: f32[1,128], index: 5, kind: input, shape index: {}]
  %s6 = inlined_call_operand.vmem [shape: f32[128,32], index: 6, kind: input, shape index: {}]
  %s7 = inlined_call_operand.vmem [shape: f32[1,32], index: 7, kind: input, shape index: {}]
  %s8 = inlined_call_operand.vmem [shape: f32[32,32], index: 8, kind: input, shape index: {}]
  %s9 = inlined_call_operand.vmem [shape: f32[2,32,96], index: 9, kind: input, shape index: {}]
  %s10 = inlined_call_operand.vmem [shape: f32[2,1,96], index: 10, kind: input, shape index: {}]
  %s11 = inlined_call_operand.vmem [shape: f32[2,32,32], index: 11, kind: input, shape index: {}]
  %s12 = inlined_call_operand.vmem [shape: f32[2,1,32], index: 12, kind: input, shape index: {}]
  %s13 = inlined_call_operand.vmem [shape: f32[2,1,32], index: 13, kind: input, shape index: {}]
  %s14 = inlined_call_operand.vmem [shape: f32[2,1,32], index: 14, kind: input, shape index: {}]
  %s15 = inlined_call_operand.vmem [shape: f32[2,32,128], index: 15, kind: input, shape index: {}]
  %s16 = inlined_call_operand.vmem [shape: f32[2,1,128], index: 16, kind: input, shape index: {}]
  %s17 = inlined_call_operand.vmem [shape: f32[2,128,32], index: 17, kind: input, shape index: {}]
  %s18 = inlined_call_operand.vmem [shape: f32[2,1,32], index: 18, kind: input, shape index: {}]
  %s19 = inlined_call_operand.vmem [shape: f32[2,1,32], index: 19, kind: input, shape index: {}]
  %s20 = inlined_call_operand.vmem [shape: f32[2,1,32], index: 20, kind: input, shape index: {}]
  %s21 = inlined_call_operand.vmem [shape: f32[32,64], index: 21, kind: input, shape index: {}]
  %s22 = inlined_call_operand.vmem [shape: f32[1,64], index: 22, kind: input, shape index: {}]
  %s23 = inlined_call_operand.vmem [shape: f32[1,64], index: 23, kind: input, shape index: {}]
  %s24 = inlined_call_operand.<no memory space> [shape: f32[1,1], index: 24, kind: input, shape index: {}]
  %s25 = inlined_call_operand.vmem [shape: f32[1,32], index: 25, kind: input, shape index: {}]
  %s26 = inlined_call_operand.<no memory space> [shape: f32[1,1], index: 26, kind: input, shape index: {}]
  %s27 = inlined_call_operand.vmem [shape: f32[2,1,128], index: 27, kind: output, shape index: {}]
  %s28 = sld [smem:[#allocation0]]
  $region141: #{forward.1} parent=0
    _
  %s30 = ssub.s32 1, %s28
  %s31 = scalar_select 0, %s30, %s28
  %v32 = vstv %s24
  %33 = vst [vmem:[#allocation2] sm:$0x1] %v32
  %v34 = vstv %s26
  %35 = vst [vmem:[#allocation3] sm:$0x1] %v34
  loop: start=0, step=1, limit=4
  $region2: #{forward.1} parent=0 // loop_pre_header
    _
  $region3: #{forward.1} parent=0 // loop_header
    %s37 = sphi 0, %s41
    %p38 = scmp.ge.s32.totalorder %s37, 4
    %s47 = sphi 0, %s49
    %s50 = sphi 0, %s47
    %s51 = sphi 0, %s50
    %s67 = sphi 0, %s51
    %s71 = sphi 0, %s71
    %s73 = sphi 0, %s71
    %s74 = sphi 0, %s73
    %s88 = sphi 0, %s74
    %s92 = sphi 0, %s92
    %s94 = sphi 0, %s92
    %s95 = sphi 0, %s94
    %s109 = sphi 0, %s95
    %s113 = sphi 0, %s113
    %s115 = sphi 0, %s113
    %s116 = sphi 0, %s115
    %s130 = sphi 0, %s116
    %s134 = sphi 0, %s134
    %s136 = sphi 0, %s134
    %s137 = sphi 0, %s136
    %s151 = sphi 0, %s137
    %s155 = sphi 0, %s155
    %s157 = sphi 0, %s155
    %s158 = sphi 0, %s157
    %s172 = sphi 0, %s158
    %s176 = sphi 0, %s176
    %s178 = sphi 0, %s176
    %s179 = sphi 0, %s178
    %s193 = sphi 0, %s179
    %s197 = sphi 0, %s197
    %s199 = sphi 0, %s197
    %s200 = sphi 0, %s199
    %s214 = sphi 0, %s200
    %s218 = sphi 0, %s218
    %s220 = sphi 0, %s218
    %s221 = sphi 0, %s220
    %s235 = sphi 0, %s221
    %s239 = sphi 0, %s239
    %s241 = sphi 0, %s239
    %s242 = sphi 0, %s241
    %s256 = sphi 0, %s242
    %s260 = sphi 0, %s260
    %s262 = sphi 0, %s260
    %s263 = sphi 0, %s262
    %s277 = sphi 0, %s263
    %s281 = sphi 0, %s281
    %s283 = sphi 0, %s281
    %s284 = sphi 0, %s283
    %s298 = sphi 0, %s284
    %s302 = sphi 0, %s302
    %s304 = sphi 0, %s302
    %s305 = sphi 0, %s304
    %s319 = sphi 0, %s305
    %s323 = sphi 0, %s323
    %s325 = sphi 0, %s323
    %s326 = sphi 0, %s325
    %s340 = sphi 0, %s326
    %s344 = sphi 0, %s344
    %s346 = sphi 0, %s344
    %s347 = sphi 0, %s346
    %s361 = sphi 0, %s347
    %s365 = sphi 0, %s365
    %s367 = sphi 0, %s365
    %s368 = sphi 0, %s367
    %s382 = sphi 0, %s368
    %s386 = sphi 0, %s386
    %s388 = sphi 0, %s386
    %s389 = sphi 0, %s388
    %s403 = sphi 0, %s389
    %s407 = sphi 0, %s407
    %s409 = sphi 0, %s407
    %s410 = sphi 0, %s409
    %s424 = sphi 0, %s410
    %s428 = sphi 0, %s428
    %s430 = sphi 0, %s428
    %s431 = sphi 0, %s430
    %s445 = sphi 0, %s431
    %s449 = sphi 0, %s449
    %s451 = sphi 0, %s449
    %s452 = sphi 0, %s451
    %s466 = sphi 0, %s452
    %s470 = sphi 0, %s470
    %s472 = sphi 0, %s470
    %s473 = sphi 0, %s472
    %s487 = sphi 0, %s473
    %s491 = sphi 0, %s491
    %s493 = sphi 0, %s491
    %s494 = sphi 0, %s493
    %s508 = sphi 0, %s494
    %s512 = sphi 0, %s512
    %s514 = sphi 0, %s512
    %s515 = sphi 0, %s514
    %s529 = sphi 0, %s515
    %s533 = sphi 0, %s533
    %s535 = sphi 0, %s533
    %s536 = sphi 0, %s535
    %s550 = sphi 0, %s536
    %s554 = sphi 0, %s554
    %s556 = sphi 0, %s554
    %s557 = sphi 0, %s556
    %s571 = sphi 0, %s557
    %s575 = sphi 0, %s575
    %s577 = sphi 0, %s575
    %s578 = sphi 0, %s577
    %s592 = sphi 0, %s578
    %s596 = sphi 0, %s596
    %s598 = sphi 0, %s596
    %s599 = sphi 0, %s598
    %s613 = sphi 0, %s599
    %s619 = sphi 0, %s621
    %s622 = sphi 0, %s619
    %s623 = sphi 0, %s622
    %s639 = sphi 0, %s623
  $region4: #{forward.1} parent=0 // loop_header_branch
    %40 = sbr.rel (%p38) target = $region8
  $region5: #{forward.1} parent=0 // loop_body
    %s42 = ssub.s32 %s37, 1
    %s43 = ssub.s32 %s37, 2
    %s44 = sadd.s32 %s37, 1
    %s45 = ssub.s32 %s37, %s44
    %p46 = scmp.eq.s32.totalorder %s45, 0
    %s48 = sadd.s32 %s47, 1
    %s49 = scalar_select %p46, %s47, %s48
    %p52 = pneg %p46
    %p53 = scmp.eq.s32.totalorder %s37, 1
    %p54 = por %p52, %p53
    %p55 = scmp.ne.s32.totalorder %s47, %s50
    %p56 = scmp.eq.s32.totalorder %s37, 0
    %p57 = por %p55, %p56
    %p58 = scmp.ne.s32.totalorder %s47, %s50
    %p59 = scmp.eq.s32.totalorder %s42, 1
    %p60 = por %p58, %p59
    %p61 = scmp.ne.s32.totalorder %s50, %s51
    %p62 = scmp.eq.s32.totalorder %s42, 0
    %p63 = por %p61, %p62
    %p64 = scmp.ne.s32.totalorder %s50, %s51
    %p65 = scmp.eq.s32.totalorder %s43, 1
    %p66 = por %p64, %p65
    %p68 = scmp.ne.s32.totalorder %s51, %s67
    %p69 = scmp.eq.s32.totalorder %s43, 0
    %p70 = por %p68, %p69
    %s72 = sadd.s32 %s71, 1
    %p75 = scmp.eq.s32.totalorder %s37, 1
    %p76 = scmp.ne.s32.totalorder %s71, %s73
    %p77 = scmp.eq.s32.totalorder %s37, 0
    %p78 = por %p76, %p77
    %p79 = scmp.ne.s32.totalorder %s71, %s73
    %p80 = scmp.eq.s32.totalorder %s42, 1
    %p81 = por %p79, %p80
    %p82 = scmp.ne.s32.totalorder %s73, %s74
    %p83 = scmp.eq.s32.totalorder %s42, 0
    %p84 = por %p82, %p83
    %p85 = scmp.ne.s32.totalorder %s73, %s74
    %p86 = scmp.eq.s32.totalorder %s43, 1
    %p87 = por %p85, %p86
    %p89 = scmp.ne.s32.totalorder %s74, %s88
    %p90 = scmp.eq.s32.totalorder %s43, 0
    %p91 = por %p89, %p90
    %s93 = sadd.s32 %s92, 1
    %p96 = scmp.eq.s32.totalorder %s37, 1
    %p97 = scmp.ne.s32.totalorder %s92, %s94
    %p98 = scmp.eq.s32.totalorder %s37, 0
    %p99 = por %p97, %p98
    %p100 = scmp.ne.s32.totalorder %s92, %s94
    %p101 = scmp.eq.s32.totalorder %s42, 1
    %p102 = por %p100, %p101
    %p103 = scmp.ne.s32.totalorder %s94, %s95
    %p104 = scmp.eq.s32.totalorder %s42, 0
    %p105 = por %p103, %p104
    %p106 = scmp.ne.s32.totalorder %s94, %s95
    %p107 = scmp.eq.s32.totalorder %s43, 1
    %p108 = por %p106, %p107
    %p110 = scmp.ne.s32.totalorder %s95, %s109
    %p111 = scmp.eq.s32.totalorder %s43, 0
    %p112 = por %p110, %p111
    %s114 = sadd.s32 %s113, 1
    %p117 = scmp.eq.s32.totalorder %s37, 1
    %p118 = scmp.ne.s32.totalorder %s113, %s115
    %p119 = scmp.eq.s32.totalorder %s37, 0
    %p120 = por %p118, %p119
    %p121 = scmp.ne.s32.totalorder %s113, %s115
    %p122 = scmp.eq.s32.totalorder %s42, 1
    %p123 = por %p121, %p122
    %p124 = scmp.ne.s32.totalorder %s115, %s116
    %p125 = scmp.eq.s32.totalorder %s42, 0
    %p126 = por %p124, %p125
    %p127 = scmp.ne.s32.totalorder %s115, %s116
    %p128 = scmp.eq.s32.totalorder %s43, 1
    %p129 = por %p127, %p128
    %p131 = scmp.ne.s32.totalorder %s116, %s130
    %p132 = scmp.eq.s32.totalorder %s43, 0
    %p133 = por %p131, %p132
    %s135 = sadd.s32 %s134, 1
    %p138 = scmp.eq.s32.totalorder %s37, 1
    %p139 = scmp.ne.s32.totalorder %s134, %s136
    %p140 = scmp.eq.s32.totalorder %s37, 0
    %p141 = por %p139, %p140
    %p142 = scmp.ne.s32.totalorder %s134, %s136
    %p143 = scmp.eq.s32.totalorder %s42, 1
    %p144 = por %p142, %p143
    %p145 = scmp.ne.s32.totalorder %s136, %s137
    %p146 = scmp.eq.s32.totalorder %s42, 0
    %p147 = por %p145, %p146
    %p148 = scmp.ne.s32.totalorder %s136, %s137
    %p149 = scmp.eq.s32.totalorder %s43, 1
    %p150 = por %p148, %p149
    %p152 = scmp.ne.s32.totalorder %s137, %s151
    %p153 = scmp.eq.s32.totalorder %s43, 0
    %p154 = por %p152, %p153
    %s156 = sadd.s32 %s155, 1
    %p159 = scmp.eq.s32.totalorder %s37, 1
    %p160 = scmp.ne.s32.totalorder %s155, %s157
    %p161 = scmp.eq.s32.totalorder %s37, 0
    %p162 = por %p160, %p161
    %p163 = scmp.ne.s32.totalorder %s155, %s157
    %p164 = scmp.eq.s32.totalorder %s42, 1
    %p165 = por %p163, %p164
    %p166 = scmp.ne.s32.totalorder %s157, %s158
    %p167 = scmp.eq.s32.totalorder %s42, 0
    %p168 = por %p166, %p167
    %p169 = scmp.ne.s32.totalorder %s157, %s158
    %p170 = scmp.eq.s32.totalorder %s43, 1
    %p171 = por %p169, %p170
    %p173 = scmp.ne.s32.totalorder %s158, %s172
    %p174 = scmp.eq.s32.totalorder %s43, 0
    %p175 = por %p173, %p174
    %s177 = sadd.s32 %s176, 1
    %p180 = scmp.eq.s32.totalorder %s37, 1
    %p181 = scmp.ne.s32.totalorder %s176, %s178
    %p182 = scmp.eq.s32.totalorder %s37, 0
    %p183 = por %p181, %p182
    %p184 = scmp.ne.s32.totalorder %s176, %s178
    %p185 = scmp.eq.s32.totalorder %s42, 1
    %p186 = por %p184, %p185
    %p187 = scmp.ne.s32.totalorder %s178, %s179
    %p188 = scmp.eq.s32.totalorder %s42, 0
    %p189 = por %p187, %p188
    %p190 = scmp.ne.s32.totalorder %s178, %s179
    %p191 = scmp.eq.s32.totalorder %s43, 1
    %p192 = por %p190, %p191
    %p194 = scmp.ne.s32.totalorder %s179, %s193
    %p195 = scmp.eq.s32.totalorder %s43, 0
    %p196 = por %p194, %p195
    %s198 = sadd.s32 %s197, 1
    %p201 = scmp.eq.s32.totalorder %s37, 1
    %p202 = scmp.ne.s32.totalorder %s197, %s199
    %p203 = scmp.eq.s32.totalorder %s37, 0
    %p204 = por %p202, %p203
    %p205 = scmp.ne.s32.totalorder %s197, %s199
    %p206 = scmp.eq.s32.totalorder %s42, 1
    %p207 = por %p205, %p206
    %p208 = scmp.ne.s32.totalorder %s199, %s200
    %p209 = scmp.eq.s32.totalorder %s42, 0
    %p210 = por %p208, %p209
    %p211 = scmp.ne.s32.totalorder %s199, %s200
    %p212 = scmp.eq.s32.totalorder %s43, 1
    %p213 = por %p211, %p212
    %p215 = scmp.ne.s32.totalorder %s200, %s214
    %p216 = scmp.eq.s32.totalorder %s43, 0
    %p217 = por %p215, %p216
    %s219 = sadd.s32 %s218, 1
    %p222 = scmp.eq.s32.totalorder %s37, 1
    %p223 = scmp.ne.s32.totalorder %s218, %s220
    %p224 = scmp.eq.s32.totalorder %s37, 0
    %p225 = por %p223, %p224
    %p226 = scmp.ne.s32.totalorder %s218, %s220
    %p227 = scmp.eq.s32.totalorder %s42, 1
    %p228 = por %p226, %p227
    %p229 = scmp.ne.s32.totalorder %s220, %s221
    %p230 = scmp.eq.s32.totalorder %s42, 0
    %p231 = por %p229, %p230
    %p232 = scmp.ne.s32.totalorder %s220, %s221
    %p233 = scmp.eq.s32.totalorder %s43, 1
    %p234 = por %p232, %p233
    %p236 = scmp.ne.s32.totalorder %s221, %s235
    %p237 = scmp.eq.s32.totalorder %s43, 0
    %p238 = por %p236, %p237
    %s240 = sadd.s32 %s239, 1
    %p243 = scmp.eq.s32.totalorder %s37, 1
    %p244 = scmp.ne.s32.totalorder %s239, %s241
    %p245 = scmp.eq.s32.totalorder %s37, 0
    %p246 = por %p244, %p245
    %p247 = scmp.ne.s32.totalorder %s239, %s241
    %p248 = scmp.eq.s32.totalorder %s42, 1
    %p249 = por %p247, %p248
    %p250 = scmp.ne.s32.totalorder %s241, %s242
    %p251 = scmp.eq.s32.totalorder %s42, 0
    %p252 = por %p250, %p251
    %p253 = scmp.ne.s32.totalorder %s241, %s242
    %p254 = scmp.eq.s32.totalorder %s43, 1
    %p255 = por %p253, %p254
    %p257 = scmp.ne.s32.totalorder %s242, %s256
    %p258 = scmp.eq.s32.totalorder %s43, 0
    %p259 = por %p257, %p258
    %s261 = sadd.s32 %s260, 1
    %p264 = scmp.eq.s32.totalorder %s37, 1
    %p265 = scmp.ne.s32.totalorder %s260, %s262
    %p266 = scmp.eq.s32.totalorder %s37, 0
    %p267 = por %p265, %p266
    %p268 = scmp.ne.s32.totalorder %s260, %s262
    %p269 = scmp.eq.s32.totalorder %s42, 1
    %p270 = por %p268, %p269
    %p271 = scmp.ne.s32.totalorder %s262, %s263
    %p272 = scmp.eq.s32.totalorder %s42, 0
    %p273 = por %p271, %p272
    %p274 = scmp.ne.s32.totalorder %s262, %s263
    %p275 = scmp.eq.s32.totalorder %s43, 1
    %p276 = por %p274, %p275
    %p278 = scmp.ne.s32.totalorder %s263, %s277
    %p279 = scmp.eq.s32.totalorder %s43, 0
    %p280 = por %p278, %p279
    %s282 = sadd.s32 %s281, 1
    %p285 = scmp.eq.s32.totalorder %s37, 1
    %p286 = scmp.ne.s32.totalorder %s281, %s283
    %p287 = scmp.eq.s32.totalorder %s37, 0
    %p288 = por %p286, %p287
    %p289 = scmp.ne.s32.totalorder %s281, %s283
    %p290 = scmp.eq.s32.totalorder %s42, 1
    %p291 = por %p289, %p290
    %p292 = scmp.ne.s32.totalorder %s283, %s284
    %p293 = scmp.eq.s32.totalorder %s42, 0
    %p294 = por %p292, %p293
    %p295 = scmp.ne.s32.totalorder %s283, %s284
    %p296 = scmp.eq.s32.totalorder %s43, 1
    %p297 = por %p295, %p296
    %p299 = scmp.ne.s32.totalorder %s284, %s298
    %p300 = scmp.eq.s32.totalorder %s43, 0
    %p301 = por %p299, %p300
    %s303 = sadd.s32 %s302, 1
    %p306 = scmp.eq.s32.totalorder %s37, 1
    %p307 = scmp.ne.s32.totalorder %s302, %s304
    %p308 = scmp.eq.s32.totalorder %s37, 0
    %p309 = por %p307, %p308
    %p310 = scmp.ne.s32.totalorder %s302, %s304
    %p311 = scmp.eq.s32.totalorder %s42, 1
    %p312 = por %p310, %p311
    %p313 = scmp.ne.s32.totalorder %s304, %s305
    %p314 = scmp.eq.s32.totalorder %s42, 0
    %p315 = por %p313, %p314
    %p316 = scmp.ne.s32.totalorder %s304, %s305
    %p317 = scmp.eq.s32.totalorder %s43, 1
    %p318 = por %p316, %p317
    %p320 = scmp.ne.s32.totalorder %s305, %s319
    %p321 = scmp.eq.s32.totalorder %s43, 0
    %p322 = por %p320, %p321
    %s324 = sadd.s32 %s323, 1
    %p327 = scmp.eq.s32.totalorder %s37, 1
    %p328 = scmp.ne.s32.totalorder %s323, %s325
    %p329 = scmp.eq.s32.totalorder %s37, 0
    %p330 = por %p328, %p329
    %p331 = scmp.ne.s32.totalorder %s323, %s325
    %p332 = scmp.eq.s32.totalorder %s42, 1
    %p333 = por %p331, %p332
    %p334 = scmp.ne.s32.totalorder %s325, %s326
    %p335 = scmp.eq.s32.totalorder %s42, 0
    %p336 = por %p334, %p335
    %p337 = scmp.ne.s32.totalorder %s325, %s326
    %p338 = scmp.eq.s32.totalorder %s43, 1
    %p339 = por %p337, %p338
    %p341 = scmp.ne.s32.totalorder %s326, %s340
    %p342 = scmp.eq.s32.totalorder %s43, 0
    %p343 = por %p341, %p342
    %s345 = sadd.s32 %s344, 1
    %p348 = scmp.eq.s32.totalorder %s37, 1
    %p349 = scmp.ne.s32.totalorder %s344, %s346
    %p350 = scmp.eq.s32.totalorder %s37, 0
    %p351 = por %p349, %p350
    %p352 = scmp.ne.s32.totalorder %s344, %s346
    %p353 = scmp.eq.s32.totalorder %s42, 1
    %p354 = por %p352, %p353
    %p355 = scmp.ne.s32.totalorder %s346, %s347
    %p356 = scmp.eq.s32.totalorder %s42, 0
    %p357 = por %p355, %p356
    %p358 = scmp.ne.s32.totalorder %s346, %s347
    %p359 = scmp.eq.s32.totalorder %s43, 1
    %p360 = por %p358, %p359
    %p362 = scmp.ne.s32.totalorder %s347, %s361
    %p363 = scmp.eq.s32.totalorder %s43, 0
    %p364 = por %p362, %p363
    %s366 = sadd.s32 %s365, 1
    %p369 = scmp.eq.s32.totalorder %s37, 1
    %p370 = scmp.ne.s32.totalorder %s365, %s367
    %p371 = scmp.eq.s32.totalorder %s37, 0
    %p372 = por %p370, %p371
    %p373 = scmp.ne.s32.totalorder %s365, %s367
    %p374 = scmp.eq.s32.totalorder %s42, 1
    %p375 = por %p373, %p374
    %p376 = scmp.ne.s32.totalorder %s367, %s368
    %p377 = scmp.eq.s32.totalorder %s42, 0
    %p378 = por %p376, %p377
    %p379 = scmp.ne.s32.totalorder %s367, %s368
    %p380 = scmp.eq.s32.totalorder %s43, 1
    %p381 = por %p379, %p380
    %p383 = scmp.ne.s32.totalorder %s368, %s382
    %p384 = scmp.eq.s32.totalorder %s43, 0
    %p385 = por %p383, %p384
    %s387 = sadd.s32 %s386, 1
    %p390 = scmp.eq.s32.totalorder %s37, 1
    %p391 = scmp.ne.s32.totalorder %s386, %s388
    %p392 = scmp.eq.s32.totalorder %s37, 0
    %p393 = por %p391, %p392
    %p394 = scmp.ne.s32.totalorder %s386, %s388
    %p395 = scmp.eq.s32.totalorder %s42, 1
    %p396 = por %p394, %p395
    %p397 = scmp.ne.s32.totalorder %s388, %s389
    %p398 = scmp.eq.s32.totalorder %s42, 0
    %p399 = por %p397, %p398
    %p400 = scmp.ne.s32.totalorder %s388, %s389
    %p401 = scmp.eq.s32.totalorder %s43, 1
    %p402 = por %p400, %p401
    %p404 = scmp.ne.s32.totalorder %s389, %s403
    %p405 = scmp.eq.s32.totalorder %s43, 0
    %p406 = por %p404, %p405
    %s408 = sadd.s32 %s407, 1
    %p411 = scmp.eq.s32.totalorder %s37, 1
    %p412 = scmp.ne.s32.totalorder %s407, %s409
    %p413 = scmp.eq.s32.totalorder %s37, 0
    %p414 = por %p412, %p413
    %p415 = scmp.ne.s32.totalorder %s407, %s409
    %p416 = scmp.eq.s32.totalorder %s42, 1
    %p417 = por %p415, %p416
    %p418 = scmp.ne.s32.totalorder %s409, %s410
    %p419 = scmp.eq.s32.totalorder %s42, 0
    %p420 = por %p418, %p419
    %p421 = scmp.ne.s32.totalorder %s409, %s410
    %p422 = scmp.eq.s32.totalorder %s43, 1
    %p423 = por %p421, %p422
    %p425 = scmp.ne.s32.totalorder %s410, %s424
    %p426 = scmp.eq.s32.totalorder %s43, 0
    %p427 = por %p425, %p426
    %s429 = sadd.s32 %s428, 1
    %p432 = scmp.eq.s32.totalorder %s37, 1
    %p433 = scmp.ne.s32.totalorder %s428, %s430
    %p434 = scmp.eq.s32.totalorder %s37, 0
    %p435 = por %p433, %p434
    %p436 = scmp.ne.s32.totalorder %s428, %s430
    %p437 = scmp.eq.s32.totalorder %s42, 1
    %p438 = por %p436, %p437
    %p439 = scmp.ne.s32.totalorder %s430, %s431
    %p440 = scmp.eq.s32.totalorder %s42, 0
    %p441 = por %p439, %p440
    %p442 = scmp.ne.s32.totalorder %s430, %s431
    %p443 = scmp.eq.s32.totalorder %s43, 1
    %p444 = por %p442, %p443
    %p446 = scmp.ne.s32.totalorder %s431, %s445
    %p447 = scmp.eq.s32.totalorder %s43, 0
    %p448 = por %p446, %p447
    %s450 = sadd.s32 %s449, 1
    %p453 = scmp.eq.s32.totalorder %s37, 1
    %p454 = scmp.ne.s32.totalorder %s449, %s451
    %p455 = scmp.eq.s32.totalorder %s37, 0
    %p456 = por %p454, %p455
    %p457 = scmp.ne.s32.totalorder %s449, %s451
    %p458 = scmp.eq.s32.totalorder %s42, 1
    %p459 = por %p457, %p458
    %p460 = scmp.ne.s32.totalorder %s451, %s452
    %p461 = scmp.eq.s32.totalorder %s42, 0
    %p462 = por %p460, %p461
    %p463 = scmp.ne.s32.totalorder %s451, %s452
    %p464 = scmp.eq.s32.totalorder %s43, 1
    %p465 = por %p463, %p464
    %p467 = scmp.ne.s32.totalorder %s452, %s466
    %p468 = scmp.eq.s32.totalorder %s43, 0
    %p469 = por %p467, %p468
    %s471 = sadd.s32 %s470, 1
    %p474 = scmp.eq.s32.totalorder %s37, 1
    %p475 = scmp.ne.s32.totalorder %s470, %s472
    %p476 = scmp.eq.s32.totalorder %s37, 0
    %p477 = por %p475, %p476
    %p478 = scmp.ne.s32.totalorder %s470, %s472
    %p479 = scmp.eq.s32.totalorder %s42, 1
    %p480 = por %p478, %p479
    %p481 = scmp.ne.s32.totalorder %s472, %s473
    %p482 = scmp.eq.s32.totalorder %s42, 0
    %p483 = por %p481, %p482
    %p484 = scmp.ne.s32.totalorder %s472, %s473
    %p485 = scmp.eq.s32.totalorder %s43, 1
    %p486 = por %p484, %p485
    %p488 = scmp.ne.s32.totalorder %s473, %s487
    %p489 = scmp.eq.s32.totalorder %s43, 0
    %p490 = por %p488, %p489
    %s492 = sadd.s32 %s491, 1
    %p495 = scmp.eq.s32.totalorder %s37, 1
    %p496 = scmp.ne.s32.totalorder %s491, %s493
    %p497 = scmp.eq.s32.totalorder %s37, 0
    %p498 = por %p496, %p497
    %p499 = scmp.ne.s32.totalorder %s491, %s493
    %p500 = scmp.eq.s32.totalorder %s42, 1
    %p501 = por %p499, %p500
    %p502 = scmp.ne.s32.totalorder %s493, %s494
    %p503 = scmp.eq.s32.totalorder %s42, 0
    %p504 = por %p502, %p503
    %p505 = scmp.ne.s32.totalorder %s493, %s494
    %p506 = scmp.eq.s32.totalorder %s43, 1
    %p507 = por %p505, %p506
    %p509 = scmp.ne.s32.totalorder %s494, %s508
    %p510 = scmp.eq.s32.totalorder %s43, 0
    %p511 = por %p509, %p510
    %s513 = sadd.s32 %s512, 1
    %p516 = scmp.eq.s32.totalorder %s37, 1
    %p517 = scmp.ne.s32.totalorder %s512, %s514
    %p518 = scmp.eq.s32.totalorder %s37, 0
    %p519 = por %p517, %p518
    %p520 = scmp.ne.s32.totalorder %s512, %s514
    %p521 = scmp.eq.s32.totalorder %s42, 1
    %p522 = por %p520, %p521
    %p523 = scmp.ne.s32.totalorder %s514, %s515
    %p524 = scmp.eq.s32.totalorder %s42, 0
    %p525 = por %p523, %p524
    %p526 = scmp.ne.s32.totalorder %s514, %s515
    %p527 = scmp.eq.s32.totalorder %s43, 1
    %p528 = por %p526, %p527
    %p530 = scmp.ne.s32.totalorder %s515, %s529
    %p531 = scmp.eq.s32.totalorder %s43, 0
    %p532 = por %p530, %p531
    %s534 = sadd.s32 %s533, 1
    %p537 = scmp.eq.s32.totalorder %s37, 1
    %p538 = scmp.ne.s32.totalorder %s533, %s535
    %p539 = scmp.eq.s32.totalorder %s37, 0
    %p540 = por %p538, %p539
    %p541 = scmp.ne.s32.totalorder %s533, %s535
    %p542 = scmp.eq.s32.totalorder %s42, 1
    %p543 = por %p541, %p542
    %p544 = scmp.ne.s32.totalorder %s535, %s536
    %p545 = scmp.eq.s32.totalorder %s42, 0
    %p546 = por %p544, %p545
    %p547 = scmp.ne.s32.totalorder %s535, %s536
    %p548 = scmp.eq.s32.totalorder %s43, 1
    %p549 = por %p547, %p548
    %p551 = scmp.ne.s32.totalorder %s536, %s550
    %p552 = scmp.eq.s32.totalorder %s43, 0
    %p553 = por %p551, %p552
    %s555 = sadd.s32 %s554, 1
    %p558 = scmp.eq.s32.totalorder %s37, 1
    %p559 = scmp.ne.s32.totalorder %s554, %s556
    %p560 = scmp.eq.s32.totalorder %s37, 0
    %p561 = por %p559, %p560
    %p562 = scmp.ne.s32.totalorder %s554, %s556
    %p563 = scmp.eq.s32.totalorder %s42, 1
    %p564 = por %p562, %p563
    %p565 = scmp.ne.s32.totalorder %s556, %s557
    %p566 = scmp.eq.s32.totalorder %s42, 0
    %p567 = por %p565, %p566
    %p568 = scmp.ne.s32.totalorder %s556, %s557
    %p569 = scmp.eq.s32.totalorder %s43, 1
    %p570 = por %p568, %p569
    %p572 = scmp.ne.s32.totalorder %s557, %s571
    %p573 = scmp.eq.s32.totalorder %s43, 0
    %p574 = por %p572, %p573
    %s576 = sadd.s32 %s575, 1
    %p579 = scmp.eq.s32.totalorder %s37, 1
    %p580 = scmp.ne.s32.totalorder %s575, %s577
    %p581 = scmp.eq.s32.totalorder %s37, 0
    %p582 = por %p580, %p581
    %p583 = scmp.ne.s32.totalorder %s575, %s577
    %p584 = scmp.eq.s32.totalorder %s42, 1
    %p585 = por %p583, %p584
    %p586 = scmp.ne.s32.totalorder %s577, %s578
    %p587 = scmp.eq.s32.totalorder %s42, 0
    %p588 = por %p586, %p587
    %p589 = scmp.ne.s32.totalorder %s577, %s578
    %p590 = scmp.eq.s32.totalorder %s43, 1
    %p591 = por %p589, %p590
    %p593 = scmp.ne.s32.totalorder %s578, %s592
    %p594 = scmp.eq.s32.totalorder %s43, 0
    %p595 = por %p593, %p594
    %s597 = sadd.s32 %s596, 1
    %p600 = scmp.eq.s32.totalorder %s37, 1
    %p601 = scmp.ne.s32.totalorder %s596, %s598
    %p602 = scmp.eq.s32.totalorder %s37, 0
    %p603 = por %p601, %p602
    %p604 = scmp.ne.s32.totalorder %s596, %s598
    %p605 = scmp.eq.s32.totalorder %s42, 1
    %p606 = por %p604, %p605
    %p607 = scmp.ne.s32.totalorder %s598, %s599
    %p608 = scmp.eq.s32.totalorder %s42, 0
    %p609 = por %p607, %p608
    %p610 = scmp.ne.s32.totalorder %s598, %s599
    %p611 = scmp.eq.s32.totalorder %s43, 1
    %p612 = por %p610, %p611
    %p614 = scmp.ne.s32.totalorder %s599, %s613
    %p615 = scmp.eq.s32.totalorder %s43, 0
    %p616 = por %p614, %p615
    %s617 = ssub.s32 %s37, %s44
    %p618 = scmp.eq.s32.totalorder %s617, 0
    %s620 = sadd.s32 %s619, 1
    %s621 = scalar_select %p618, %s619, %s620
    %p624 = pneg %p618
    %p625 = scmp.eq.s32.totalorder %s37, 1
    %p626 = por %p624, %p625
    %p627 = scmp.ne.s32.totalorder %s619, %s622
    %p628 = scmp.eq.s32.totalorder %s37, 0
    %p629 = por %p627, %p628
    %p630 = scmp.ne.s32.totalorder %s619, %s622
    %p631 = scmp.eq.s32.totalorder %s42, 1
    %p632 = por %p630, %p631
    %p633 = scmp.ne.s32.totalorder %s622, %s623
    %p634 = scmp.eq.s32.totalorder %s42, 0
    %p635 = por %p633, %p634
    %p636 = scmp.ne.s32.totalorder %s622, %s623
    %p637 = scmp.eq.s32.totalorder %s43, 1
    %p638 = por %p636, %p637
    %p640 = scmp.ne.s32.totalorder %s623, %s639
    %p641 = scmp.eq.s32.totalorder %s43, 0
    %p642 = por %p640, %p641
    %p643 = scmp.le.s32.totalorder 1, %s37
    %p644 = scmp.lt.s32.totalorder %s37, 3
    %p645 = pnand %p643, %p644
    %p646 = pneg %p645
    // Predicated region
    $region9: #{forward.1} parent=5 // pred_check
      _
    $region10: #{forward.1} parent=5 // pred_check_branch
      %648 = sbr.rel (%p645) target = $region12
    $region11: #{forward.1} parent=5 // pred_region
      %s649 = ssub.s32 %s37, 1
      // Predicated region
      $region13: #{forward.1} parent=11 // pred_check
        %p650 = pneg %p84
      $region14: #{forward.1} parent=11 // pred_check_branch
        %652 = sbr.rel (%p650) target = $region16
      $region15: #{forward.1} parent=11 // pred_region
        _
      $region16: #{forward.1} parent=11 // pred_fallthru
        _
      // Predicated region
      $region17: #{forward.1} parent=11 // pred_check
        %p653 = pneg %p105
      $region18: #{forward.1} parent=11 // pred_check_branch
        %655 = sbr.rel (%p653) target = $region20
      $region19: #{forward.1} parent=11 // pred_region
        _
      $region20: #{forward.1} parent=11 // pred_fallthru
        _
      // Predicated region
      $region21: #{forward.1} parent=11 // pred_check
        %p656 = pneg %p126
      $region22: #{forward.1} parent=11 // pred_check_branch
        %658 = sbr.rel (%p656) target = $region24
      $region23: #{forward.1} parent=11 // pred_region
        _
      $region24: #{forward.1} parent=11 // pred_fallthru
        _
      // Predicated region
      $region25: #{forward.1} parent=11 // pred_check
        %p659 = pneg %p147
      $region26: #{forward.1} parent=11 // pred_check_branch
        %661 = sbr.rel (%p659) target = $region28
      $region27: #{forward.1} parent=11 // pred_region
        _
      $region28: #{forward.1} parent=11 // pred_fallthru
        _
      // Predicated region
      $region29: #{forward.1} parent=11 // pred_check
        %p662 = pneg %p168
      $region30: #{forward.1} parent=11 // pred_check_branch
        %664 = sbr.rel (%p662) target = $region32
      $region31: #{forward.1} parent=11 // pred_region
        _
      $region32: #{forward.1} parent=11 // pred_fallthru
        _
      // Predicated region
      $region33: #{forward.1} parent=11 // pred_check
        %p665 = pneg %p189
      $region34: #{forward.1} parent=11 // pred_check_branch
        %667 = sbr.rel (%p665) target = $region36
      $region35: #{forward.1} parent=11 // pred_region
        _
      $region36: #{forward.1} parent=11 // pred_fallthru
        _
      // Predicated region
      $region37: #{forward.1} parent=11 // pred_check
        %p668 = pneg %p210
      $region38: #{forward.1} parent=11 // pred_check_branch
        %670 = sbr.rel (%p668) target = $region40
      $region39: #{forward.1} parent=11 // pred_region
        _
      $region40: #{forward.1} parent=11 // pred_fallthru
        _
      // Predicated region
      $region41: #{forward.1} parent=11 // pred_check
        %p671 = pneg %p231
      $region42: #{forward.1} parent=11 // pred_check_branch
        %673 = sbr.rel (%p671) target = $region44
      $region43: #{forward.1} parent=11 // pred_region
        _
      $region44: #{forward.1} parent=11 // pred_fallthru
        _
      // Predicated region
      $region45: #{forward.1} parent=11 // pred_check
        %p674 = pneg %p252
      $region46: #{forward.1} parent=11 // pred_check_branch
        %676 = sbr.rel (%p674) target = $region48
      $region47: #{forward.1} parent=11 // pred_region
        _
      $region48: #{forward.1} parent=11 // pred_fallthru
        _
      // Predicated region
      $region49: #{forward.1} parent=11 // pred_check
        %p677 = pneg %p273
      $region50: #{forward.1} parent=11 // pred_check_branch
        %679 = sbr.rel (%p677) target = $region52
      $region51: #{forward.1} parent=11 // pred_region
        _
      $region52: #{forward.1} parent=11 // pred_fallthru
        _
      // Predicated region
      $region53: #{forward.1} parent=11 // pred_check
        %p680 = pneg %p294
      $region54: #{forward.1} parent=11 // pred_check_branch
        %682 = sbr.rel (%p680) target = $region56
      $region55: #{forward.1} parent=11 // pred_region
        _
      $region56: #{forward.1} parent=11 // pred_fallthru
        _
      // Predicated region
      $region57: #{forward.1} parent=11 // pred_check
        %p683 = pneg %p315
      $region58: #{forward.1} parent=11 // pred_check_branch
        %685 = sbr.rel (%p683) target = $region60
      $region59: #{forward.1} parent=11 // pred_region
        _
      $region60: #{forward.1} parent=11 // pred_fallthru
        _
      // Predicated region
      $region61: #{forward.1} parent=11 // pred_check
        %p686 = pneg %p336
      $region62: #{forward.1} parent=11 // pred_check_branch
        %688 = sbr.rel (%p686) target = $region64
      $region63: #{forward.1} parent=11 // pred_region
        _
      $region64: #{forward.1} parent=11 // pred_fallthru
        _
      // Predicated region
      $region65: #{forward.1} parent=11 // pred_check
        %p689 = pneg %p357
      $region66: #{forward.1} parent=11 // pred_check_branch
        %691 = sbr.rel (%p689) target = $region68
      $region67: #{forward.1} parent=11 // pred_region
        _
      $region68: #{forward.1} parent=11 // pred_fallthru
        _
      // Predicated region
      $region69: #{forward.1} parent=11 // pred_check
        %p692 = pneg %p378
      $region70: #{forward.1} parent=11 // pred_check_branch
        %694 = sbr.rel (%p692) target = $region72
      $region71: #{forward.1} parent=11 // pred_region
        _
      $region72: #{forward.1} parent=11 // pred_fallthru
        _
      // Predicated region
      $region73: #{forward.1} parent=11 // pred_check
        %p695 = pneg %p399
      $region74: #{forward.1} parent=11 // pred_check_branch
        %697 = sbr.rel (%p695) target = $region76
      $region75: #{forward.1} parent=11 // pred_region
        _
      $region76: #{forward.1} parent=11 // pred_fallthru
        _
      // Predicated region
      $region77: #{forward.1} parent=11 // pred_check
        %p698 = pneg %p420
      $region78: #{forward.1} parent=11 // pred_check_branch
        %700 = sbr.rel (%p698) target = $region80
      $region79: #{forward.1} parent=11 // pred_region
        _
      $region80: #{forward.1} parent=11 // pred_fallthru
        _
      // Predicated region
      $region81: #{forward.1} parent=11 // pred_check
        %p701 = pneg %p441
      $region82: #{forward.1} parent=11 // pred_check_branch
        %703 = sbr.rel (%p701) target = $region84
      $region83: #{forward.1} parent=11 // pred_region
        _
      $region84: #{forward.1} parent=11 // pred_fallthru
        _
      // Predicated region
      $region85: #{forward.1} parent=11 // pred_check
        %p704 = pneg %p462
      $region86: #{forward.1} parent=11 // pred_check_branch
        %706 = sbr.rel (%p704) target = $region88
      $region87: #{forward.1} parent=11 // pred_region
        _
      $region88: #{forward.1} parent=11 // pred_fallthru
        _
      // Predicated region
      $region89: #{forward.1} parent=11 // pred_check
        %p707 = pneg %p483
      $region90: #{forward.1} parent=11 // pred_check_branch
        %709 = sbr.rel (%p707) target = $region92
      $region91: #{forward.1} parent=11 // pred_region
        _
      $region92: #{forward.1} parent=11 // pred_fallthru
        _
      // Predicated region
      $region93: #{forward.1} parent=11 // pred_check
        %p710 = pneg %p504
      $region94: #{forward.1} parent=11 // pred_check_branch
        %712 = sbr.rel (%p710) target = $region96
      $region95: #{forward.1} parent=11 // pred_region
        _
      $region96: #{forward.1} parent=11 // pred_fallthru
        _
      // Predicated region
      $region97: #{forward.1} parent=11 // pred_check
        %p713 = pneg %p525
      $region98: #{forward.1} parent=11 // pred_check_branch
        %715 = sbr.rel (%p713) target = $region100
      $region99: #{forward.1} parent=11 // pred_region
        _
      $region100: #{forward.1} parent=11 // pred_fallthru
        _
      // Predicated region
      $region101: #{forward.1} parent=11 // pred_check
        %p716 = pneg %p546
      $region102: #{forward.1} parent=11 // pred_check_branch
        %718 = sbr.rel (%p716) target = $region104
      $region103: #{forward.1} parent=11 // pred_region
        _
      $region104: #{forward.1} parent=11 // pred_fallthru
        _
      // Predicated region
      $region105: #{forward.1} parent=11 // pred_check
        %p719 = pneg %p567
      $region106: #{forward.1} parent=11 // pred_check_branch
        %721 = sbr.rel (%p719) target = $region108
      $region107: #{forward.1} parent=11 // pred_region
        _
      $region108: #{forward.1} parent=11 // pred_fallthru
        _
      // Predicated region
      $region109: #{forward.1} parent=11 // pred_check
        %p722 = pneg %p588
      $region110: #{forward.1} parent=11 // pred_check_branch
        %724 = sbr.rel (%p722) target = $region112
      $region111: #{forward.1} parent=11 // pred_region
        _
      $region112: #{forward.1} parent=11 // pred_fallthru
        _
      // Predicated region
      $region113: #{forward.1} parent=11 // pred_check
        %p725 = pneg %p609
      $region114: #{forward.1} parent=11 // pred_check_branch
        %727 = sbr.rel (%p725) target = $region116
      $region115: #{forward.1} parent=11 // pred_region
        _
      $region116: #{forward.1} parent=11 // pred_fallthru
        _
    $region12: #{forward.1} parent=5 // pred_fallthru
      _
    %p728 = scmp.lt.s32.totalorder %s37, 2
    // Predicated region
    $region117: #{forward.1} parent=5 // pred_check
      %p729 = pneg %p728
    $region118: #{forward.1} parent=5 // pred_check_branch
      %731 = sbr.rel (%p729) target = $region120
    $region119: #{forward.1} parent=5 // pred_region
      // Predicated region
      $region121: #{forward.1} parent=119 // pred_check
        %p732 = pneg %p57
      $region122: #{forward.1} parent=119 // pred_check_branch
        %734 = sbr.rel (%p732) target = $region124
      $region123: #{forward.1} parent=119 // pred_region
        %p735 = scmp.lt.s32.totalorder %s37, 1
        %s736 = scalar_select %p735, %s37, 1
        %s737 = smul.addr %s736, 8
        %s738 = smul.addr %s737, 8
        %s739 = scalar_lea.vmem %s0, %s738
      $region124: #{forward.1} parent=119 // pred_fallthru
        _
    $region120: #{forward.1} parent=5 // pred_fallthru
      _
    %p740 = scmp.le.s32.totalorder 1, %s37
    %p741 = scmp.lt.s32.totalorder %s37, 3
    %p742 = pnand %p740, %p741
    %p743 = pneg %p742
    // Predicated region
    $region125: #{forward.1} parent=5 // pred_check
      _
    $region126: #{forward.1} parent=5 // pred_check_branch
      %745 = sbr.rel (%p742) target = $region128
    $region127: #{forward.1} parent=5 // pred_region
      %s746 = ssub.s32 %s37, 1
      %p747 = scmp.lt.s32.totalorder %s42, 1
      %s748 = scalar_select %p747, %s42, 1
      %s749 = smul.addr %s748, 8
      %s750 = smul.addr %s749, 8
      %s751 = scalar_lea.vmem %s0, %s750
      %p752 = pneg %p63
      %p753 = pneg %p60
      %p754 = pneg %p84
      %p755 = pneg %p81
      %p756 = pneg %p105
      %p757 = pneg %p102
      %p758 = pneg %p126
      %p759 = pneg %p123
      %p760 = pneg %p147
      %p761 = pneg %p144
      %p762 = pneg %p168
      %p763 = pneg %p165
      %p764 = pneg %p189
      %p765 = pneg %p186
      %p766 = pneg %p210
      %p767 = pneg %p207
      %p768 = pneg %p231
      %p769 = pneg %p228
      %p770 = pneg %p252
      %p771 = pneg %p249
      %p772 = pneg %p273
      %p773 = pneg %p270
      %p774 = pneg %p294
      %p775 = pneg %p291
      %p776 = pneg %p315
      %p777 = pneg %p312
      %p778 = pneg %p336
      %p779 = pneg %p333
      %p780 = pneg %p357
      %p781 = pneg %p354
      %p782 = pneg %p378
      %p783 = pneg %p375
      %p784 = pneg %p399
      %p785 = pneg %p396
      %p786 = pneg %p420
      %p787 = pneg %p417
      %p788 = pneg %p441
      %p789 = pneg %p438
      %p790 = pneg %p462
      %p791 = pneg %p459
      %p792 = pneg %p483
      %p793 = pneg %p480
      %p794 = pneg %p504
      %p795 = pneg %p501
      %p796 = pneg %p525
      %p797 = pneg %p522
      %p798 = pneg %p546
      %p799 = pneg %p543
      %p800 = pneg %p567
      %p801 = pneg %p564
      %p802 = pneg %p588
      %p803 = pneg %p585
      %p804 = pneg %p609
      %p805 = pneg %p606
      %p806 = pneg %p635
      %p807 = pneg %p632
      %p808 = scmp.lt.s32.totalorder %s42, 1
      %s809 = scalar_select %p808, %s42, 1
      %s810 = scalar_lea.vmem %s27, %s809
      %p811 = scmp.lt.s32.totalorder %s42, 1
      %s812 = scalar_select %p811, %s42, 1
      %s813 = smul.addr %s812, 8
      %s814 = smul.addr %s813, 8
      %s815 = scalar_lea.vmem %s0, %s814
      %p816 = scmp.lt.s32.totalorder %s42, 1
      %s817 = scalar_select %p816, %s42, 1
      %s818 = scalar_lea.vmem %s27, %s817
      %v819 = vld [vmem:[%s1] sm:$0xff]
      %v820 = vld [vmem:[%s1 + $0x8] sm:$0xff]
      %v821 = vld [vmem:[%s1 + $0x10] sm:$0xff]
      %v822 = vld [vmem:[%s1 + $0x18] sm:$0xff]
      %v823 = vld [vmem:[%s1 + $0x20] sm:$0xff]
      %v824 = vld [vmem:[%s1 + $0x28] sm:$0xff]
      %v825 = vld [vmem:[%s1 + $0x30] sm:$0xff]
      %v826 = vld [vmem:[%s1 + $0x38] sm:$0xff]
      %v827 = vld [vmem:[%s1 + $0x40] sm:$0xff]
      %v828 = vld [vmem:[%s1 + $0x48] sm:$0xff]
      %v829 = vld [vmem:[%s1 + $0x50] sm:$0xff]
      %v830 = vld [vmem:[%s1 + $0x58] sm:$0xff]
      %v831 = vld [vmem:[%s1 + $0x60] sm:$0xff]
      %v832 = vld [vmem:[%s1 + $0x68] sm:$0xff]
      %v833 = vld [vmem:[%s1 + $0x70] sm:$0xff]
      %v834 = vld [vmem:[%s1 + $0x78] sm:$0xff]
      %v835 = vld [vmem:[%s815] sm:$0xff]
      %v836 = vld [vmem:[%s815 + $0x8] sm:$0xff]
      %v837 = vld [vmem:[%s815 + $0x10] sm:$0xff]
      %v838 = vld [vmem:[%s815 + $0x18] sm:$0xff]
      %v839 = vld [vmem:[%s815 + $0x20] sm:$0xff]
      %v840 = vld [vmem:[%s815 + $0x28] sm:$0xff]
      %v841 = vld [vmem:[%s815 + $0x30] sm:$0xff]
      %v842 = vld [vmem:[%s815 + $0x38] sm:$0xff]
      %vm843 = vcmask 523264
      %v845 = vsel %vm843, %v819, 0
      %v848 = vsel %vm843, %v820, 0
      %v851 = vsel %vm843, %v821, 0
      %v854 = vsel %vm843, %v822, 0
      %v857 = vsel %vm843, %v823, 0
      %v860 = vsel %vm843, %v824, 0
      %v863 = vsel %vm843, %v825, 0
      %v866 = vsel %vm843, %v826, 0
      %v869 = vsel %vm843, %v827, 0
      %v872 = vsel %vm843, %v828, 0
      %v875 = vsel %vm843, %v829, 0
      %v878 = vsel %vm843, %v830, 0
      %v881 = vsel %vm843, %v831, 0
      %v884 = vsel %vm843, %v832, 0
      %v887 = vsel %vm843, %v833, 0
      %v890 = vsel %vm843, %v834, 0
      %892 = vmatpush.msra.mxu0 0.0
      %893 = vmatpush.msra.mxu0 0.0
      %894 = vmatpush.msra.mxu0 0.0
      %895 = vmatpush.msra.mxu0 0.0
      %896 = vmatpush.msra.mxu0 0.0
      %897 = vmatpush.msra.mxu0 0.0
      %898 = vmatpush.msra.mxu0 0.0
      %899 = vmatpush.msra.mxu0 0.0
      %900 = vmatpush.msra.mxu0 %v842
      %901 = vmatpush.msra.mxu0 %v841
      %902 = vmatpush.msra.mxu0 %v840
      %903 = vmatpush.msra.mxu0 %v839
      %904 = vmatpush.msra.mxu0 %v838
      %905 = vmatpush.msra.mxu0 %v837
      %906 = vmatpush.msra.mxu0 %v836
      %907 = vmatpush.msra.mxu0 %v835
      %908 = vmatmul.f32.gmra.mxu0 %v845
      %v909 = vpop.f32.mrf.mxu0
      %v910 = vadd.f32 0.0, %v909
      %911 = vmatmul.f32.gmra.mxu0 %v848
      %v912 = vpop.f32.mrf.mxu0
      %v913 = vadd.f32 0.0, %v912
      %914 = vmatmul.f32.gmra.mxu0 %v851
      %v915 = vpop.f32.mrf.mxu0
      %v916 = vadd.f32 0.0, %v915
      %917 = vmatmul.f32.gmra.mxu0 %v854
      %v918 = vpop.f32.mrf.mxu0
      %v919 = vadd.f32 0.0, %v918
      %920 = vmatmul.f32.gmra.mxu0 %v857
      %v921 = vpop.f32.mrf.mxu0
      %v922 = vadd.f32 0.0, %v921
      %923 = vmatmul.f32.gmra.mxu0 %v860
      %v924 = vpop.f32.mrf.mxu0
      %v925 = vadd.f32 0.0, %v924
      %926 = vmatmul.f32.gmra.mxu0 %v863
      %v927 = vpop.f32.mrf.mxu0
      %v928 = vadd.f32 0.0, %v927
      %929 = vmatmul.f32.gmra.mxu0 %v866
      %v930 = vpop.f32.mrf.mxu0
      %v931 = vadd.f32 0.0, %v930
      %932 = vmatmul.f32.gmra.mxu0 %v869
      %v933 = vpop.f32.mrf.mxu0
      %v934 = vadd.f32 0.0, %v933
      %935 = vmatmul.f32.gmra.mxu0 %v872
      %v936 = vpop.f32.mrf.mxu0
      %v937 = vadd.f32 0.0, %v936
      %938 = vmatmul.f32.gmra.mxu0 %v875
      %v939 = vpop.f32.mrf.mxu0
      %v940 = vadd.f32 0.0, %v939
      %941 = vmatmul.f32.gmra.mxu0 %v878
      %v942 = vpop.f32.mrf.mxu0
      %v943 = vadd.f32 0.0, %v942
      %944 = vmatmul.f32.gmra.mxu0 %v881
      %v945 = vpop.f32.mrf.mxu0
      %v946 = vadd.f32 0.0, %v945
      %947 = vmatmul.f32.gmra.mxu0 %v884
      %v948 = vpop.f32.mrf.mxu0
      %v949 = vadd.f32 0.0, %v948
      %950 = vmatmul.f32.gmra.mxu0 %v887
      %v951 = vpop.f32.mrf.mxu0
      %v952 = vadd.f32 0.0, %v951
      %953 = vmatmul.f32.gmra.mxu0 %v890
      %v954 = vpop.f32.mrf.mxu0
      %v955 = vadd.f32 0.0, %v954
      %956 = vdwg.mxu0
      %v957 = vld [vmem:[%s2] sm:$0xff]
      %v958 = vld [vmem:[%s2 + $0x8] sm:$0xff]
      %v959 = vmul.f32 %v910, %v910
      %v960 = vmul.f32 %v913, %v913
      %v961 = vmul.f32 %v916, %v916
      %v962 = vmul.f32 %v919, %v919
      %v963 = vmul.f32 %v922, %v922
      %v964 = vmul.f32 %v925, %v925
      %v965 = vmul.f32 %v928, %v928
      %v966 = vmul.f32 %v931, %v931
      %v967 = vmul.f32 %v934, %v934
      %v968 = vmul.f32 %v937, %v937
      %v969 = vmul.f32 %v940, %v940
      %v970 = vmul.f32 %v943, %v943
      %v971 = vmul.f32 %v946, %v946
      %v972 = vmul.f32 %v949, %v949
      %v973 = vmul.f32 %v952, %v952
      %v974 = vmul.f32 %v955, %v955
      %975 = vmatpush.msra.mxu0 %v974
      %976 = vmatpush.msra.mxu0 %v973
      %977 = vmatpush.msra.mxu0 %v972
      %978 = vmatpush.msra.mxu0 %v971
      %979 = vmatpush.msra.mxu0 %v970
      %980 = vmatpush.msra.mxu0 %v969
      %981 = vmatpush.msra.mxu0 %v968
      %982 = vmatpush.msra.mxu0 %v967
      %983 = vmatpush.msra.mxu0 %v966
      %984 = vmatpush.msra.mxu0 %v965
      %985 = vmatpush.msra.mxu0 %v964
      %986 = vmatpush.msra.mxu0 %v963
      %987 = vmatpush.msra.mxu0 %v962
      %988 = vmatpush.msra.mxu0 %v961
      %989 = vmatpush.msra.mxu0 %v960
      %990 = vmatpush.msra.mxu0 %v959
      %991 = vmatmul.f32.gmra.mxu0 %v957
      %v992 = vpop.f32.mrf.mxu0
      %v993 = vadd.f32 0.0, %v992
      %994 = vmatmul.f32.gmra.mxu0 %v958
      %v995 = vpop.f32.mrf.mxu0
      %v996 = vadd.f32 0.0, %v995
      %997 = vdwg.mxu0
      %v998 = vmax.f32 %v993, 1e-10
      %v999 = vmax.f32 %v996, 1e-10
      %v1000 = vlog2.pop %v998
      %v1001 = vmul.f32 %v1000, 0.6931472
      %v1002 = vlog2.pop %v999
      %v1003 = vmul.f32 %v1002, 0.6931472
      %v1004 = vmul.f32 %v1001, 0.4342945
      %v1005 = vmul.f32 %v1003, 0.4342945
      %v1006 = vmax.f32 %v1004, %v1005
      %1007 = vmax.xlane.f32.xlu0 %v1006
      %v1008 = vpop.xlane.xlu0 %1007
      %v1009 = vrot.slane %v1008, 4
      %v1010 = vmax.f32 %v1008, %v1009
      %v1011 = vrot.slane %v1010, 2
      %v1012 = vmax.f32 %v1010, %v1011
      %v1013 = vrot.slane %v1012, 1
      %v1014 = vmax.f32 %v1012, %v1013
      %s1015 = vtos %v1014
      %s1016 = ssub.f32 %s1015, 8.0
      %v1017 = vstv %s1016
      %v1018 = vmax.f32 %v1004, %v1017
      %v1019 = vmax.f32 %v1005, %v1017
      %v1020 = vadd.f32 %v1018, 4.0
      %v1021 = vadd.f32 %v1019, 4.0
      %v1022 = vmul.f32 %v1020, 0.25
      %v1023 = vmul.f32 %v1021, 0.25
      %v1024 = vld [vmem:[%s3] sm:$0xff]
      %v1025 = vld [vmem:[%s3 + $0x8] sm:$0xff]
      %v1026 = vld [vmem:[%s3 + $0x10] sm:$0xff]
      %v1027 = vld [vmem:[%s3 + $0x18] sm:$0xff]
      %vm1028 = vcmask 130048
      %v1030 = vsel %vm1028, %v1024, 0
      %v1033 = vsel %vm1028, %v1025, 0
      %v1036 = vsel %vm1028, %v1026, 0
      %v1039 = vsel %vm1028, %v1027, 0
      %1041 = vmatpush.msra.mxu0 0.0
      %1042 = vmatpush.msra.mxu0 0.0
      %1043 = vmatpush.msra.mxu0 0.0
      %1044 = vmatpush.msra.mxu0 0.0
      %1045 = vmatpush.msra.mxu0 0.0
      %1046 = vmatpush.msra.mxu0 0.0
      %1047 = vmatpush.msra.mxu0 0.0
      %1048 = vmatpush.msra.mxu0 0.0
      %1049 = vmatpush.msra.mxu0 0.0
      %1050 = vmatpush.msra.mxu0 0.0
      %1051 = vmatpush.msra.mxu0 0.0
      %1052 = vmatpush.msra.mxu0 0.0
      %1053 = vmatpush.msra.mxu0 0.0
      %1054 = vmatpush.msra.mxu0 0.0
      %1055 = vmatpush.msra.mxu0 %v1023
      %1056 = vmatpush.msra.mxu0 %v1022
      %1057 = vmatmul.f32.gmra.mxu0 %v1030
      %v1058 = vpop.f32.mrf.mxu0
      %v1059 = vadd.f32 0.0, %v1058
      %1060 = vmatmul.f32.gmra.mxu0 %v1033
      %v1061 = vpop.f32.mrf.mxu0
      %v1062 = vadd.f32 0.0, %v1061
      %1063 = vmatmul.f32.gmra.mxu0 %v1036
      %v1064 = vpop.f32.mrf.mxu0
      %v1065 = vadd.f32 0.0, %v1064
      %1066 = vmatmul.f32.gmra.mxu0 %v1039
      %v1067 = vpop.f32.mrf.mxu0
      %v1068 = vadd.f32 0.0, %v1067
      %1069 = vdwg.mxu0
      %v1070 = vld [vmem:[%s4] sm:$0x1]
      %v1072 = vperm.slane %v1070, 0
      %v1074 = vmul.f32 %v1059, %v1072
      %v1075 = vmul.f32 %v1062, %v1072
      %v1076 = vmul.f32 %v1065, %v1072
      %v1077 = vmul.f32 %v1068, %v1072
      %v1078 = vld [vmem:[%s5] sm:$0x1]
      %v1080 = vperm.slane %v1078, 0
      %v1082 = vadd.f32 %v1074, %v1080
      %v1083 = vadd.f32 %v1075, %v1080
      %v1084 = vadd.f32 %v1076, %v1080
      %v1085 = vadd.f32 %v1077, %v1080
      %v1086 = vld [vmem:[%s6] sm:$0xff]
      %v1087 = vld [vmem:[%s6 + $0x8] sm:$0xff]
      %v1088 = vld [vmem:[%s6 + $0x10] sm:$0xff]
      %v1089 = vld [vmem:[%s6 + $0x18] sm:$0xff]
      %v1090 = vld [vmem:[%s6 + $0x20] sm:$0xff]
      %v1091 = vld [vmem:[%s6 + $0x28] sm:$0xff]
      %v1092 = vld [vmem:[%s6 + $0x30] sm:$0xff]
      %v1093 = vld [vmem:[%s6 + $0x38] sm:$0xff]
      %v1094 = vld [vmem:[%s6 + $0x40] sm:$0xff]
      %v1095 = vld [vmem:[%s6 + $0x48] sm:$0xff]
      %v1096 = vld [vmem:[%s6 + $0x50] sm:$0xff]
      %v1097 = vld [vmem:[%s6 + $0x58] sm:$0xff]
      %v1098 = vld [vmem:[%s6 + $0x60] sm:$0xff]
      %v1099 = vld [vmem:[%s6 + $0x68] sm:$0xff]
      %v1100 = vld [vmem:[%s6 + $0x70] sm:$0xff]
      %v1101 = vld [vmem:[%s6 + $0x78] sm:$0xff]
      %v1102 = vld [vmem:[%s7] sm:$0x1]
      %v1104 = vperm.slane %v1102, 0
      %1106 = vmatpush.msra.mxu0 %v1101
      %1107 = vmatpush.msra.mxu0 %v1100
      %1108 = vmatpush.msra.mxu0 %v1099
      %1109 = vmatpush.msra.mxu0 %v1098
      %1110 = vmatpush.msra.mxu0 %v1097
      %1111 = vmatpush.msra.mxu0 %v1096
      %1112 = vmatpush.msra.mxu0 %v1095
      %1113 = vmatpush.msra.mxu0 %v1094
      %1114 = vmatpush.msra.mxu0 %v1093
      %1115 = vmatpush.msra.mxu0 %v1092
      %1116 = vmatpush.msra.mxu0 %v1091
      %1117 = vmatpush.msra.mxu0 %v1090
      %1118 = vmatpush.msra.mxu0 %v1089
      %1119 = vmatpush.msra.mxu0 %v1088
      %1120 = vmatpush.msra.mxu0 %v1087
      %1121 = vmatpush.msra.mxu0 %v1086
      %1122 = vmatmul.f32.gmra.mxu0 %v1082
      %v1123 = vpop.f32.mrf.mxu0
      %v1124 = vadd.f32 %v1104, %v1123
      %1125 = vmatmul.f32.gmra.mxu0 %v1083
      %v1126 = vpop.f32.mrf.mxu0
      %v1127 = vadd.f32 %v1104, %v1126
      %1128 = vmatmul.f32.gmra.mxu0 %v1084
      %v1129 = vpop.f32.mrf.mxu0
      %v1130 = vadd.f32 %v1104, %v1129
      %1131 = vmatmul.f32.gmra.mxu0 %v1085
      %v1132 = vpop.f32.mrf.mxu0
      %v1133 = vadd.f32 %v1104, %v1132
      %1134 = vdwg.mxu0
      %v1135 = vld [vmem:[%s8] sm:$0xff]
      %v1136 = vld [vmem:[%s8 + $0x8] sm:$0xff]
      %v1137 = vld [vmem:[%s8 + $0x10] sm:$0xff]
      %v1138 = vld [vmem:[%s8 + $0x18] sm:$0xff]
      %v1139 = vadd.f32 %v1124, %v1135
      %v1140 = vadd.f32 %v1127, %v1136
      %v1141 = vadd.f32 %v1130, %v1137
      %v1142 = vadd.f32 %v1133, %v1138
      %v1143 = vld [vmem:[%s9] sm:$0xff]
      %v1144 = vld [vmem:[%s9 + $0x8] sm:$0xff]
      %v1145 = vld [vmem:[%s9 + $0x10] sm:$0xff]
      %v1146 = vld [vmem:[%s9 + $0x18] sm:$0xff]
      %v1147 = vld [vmem:[%s10] sm:$0x1]
      %v1149 = vperm.slane %v1147, 0
      %vm1151 = vcmask 261120
      %v1153 = vsel %vm1151, %v1139, 0
      %v1156 = vsel %vm1151, %v1140, 0
      %v1159 = vsel %vm1151, %v1141, 0
      %v1162 = vsel %vm1151, %v1142, 0
      %1164 = vmatpush.msra.mxu0 0.0
      %1165 = vmatpush.msra.mxu0 0.0
      %1166 = vmatpush.msra.mxu0 0.0
      %1167 = vmatpush.msra.mxu0 0.0
      %1168 = vmatpush.msra.mxu0 0.0
      %1169 = vmatpush.msra.mxu0 0.0
      %1170 = vmatpush.msra.mxu0 0.0
      %1171 = vmatpush.msra.mxu0 0.0
      %1172 = vmatpush.msra.mxu0 0.0
      %1173 = vmatpush.msra.mxu0 0.0
      %1174 = vmatpush.msra.mxu0 0.0
      %1175 = vmatpush.msra.mxu0 0.0
      %1176 = vmatpush.msra.mxu0 %v1146
      %1177 = vmatpush.msra.mxu0 %v1145
      %1178 = vmatpush.msra.mxu0 %v1144
      %1179 = vmatpush.msra.mxu0 %v1143
      %1180 = vmatmul.f32.gmra.mxu0 %v1153
      %v1181 = vpop.f32.mrf.mxu0
      %v1182 = vadd.f32 %v1149, %v1181
      %1183 = vmatmul.f32.gmra.mxu0 %v1156
      %v1184 = vpop.f32.mrf.mxu0
      %v1185 = vadd.f32 %v1149, %v1184
      %1186 = vmatmul.f32.gmra.mxu0 %v1159
      %v1187 = vpop.f32.mrf.mxu0
      %v1188 = vadd.f32 %v1149, %v1187
      %1189 = vmatmul.f32.gmra.mxu0 %v1162
      %v1190 = vpop.f32.mrf.mxu0
      %v1191 = vadd.f32 %v1149, %v1190
      %1192 = vdwg.mxu0
      %1197 = vrot.lane.b32.xlu0 %v1182, 96
      %v1198 = vpop.permute.xlu0 %1197
      %1199 = vrot.lane.b32.xlu0 %v1185, 96
      %v1200 = vpop.permute.xlu0 %1199
      %1201 = vrot.lane.b32.xlu0 %v1188, 96
      %v1202 = vpop.permute.xlu0 %1201
      %1203 = vrot.lane.b32.xlu0 %v1191, 96
      %v1204 = vpop.permute.xlu0 %1203
      %vm1205 = vcmask 64512
      %v1206 = vsel %vm1205, %v1182, 0
      %v1208 = vsel %vm1205, %v1185, 0
      %v1210 = vsel %vm1205, %v1188, 0
      %v1212 = vsel %vm1205, %v1191, 0
      %v1214 = vsel %vm1205, %v1198, 0
      %v1216 = vsel %vm1205, %v1200, 0
      %v1218 = vsel %vm1205, %v1202, 0
      %v1220 = vsel %vm1205, %v1204, 0
      %1222 = vmatpush.xpose.msra.mxu0 0.0
      %1223 = vmatpush.xpose.msra.mxu0 0.0
      %1224 = vmatpush.xpose.msra.mxu0 0.0
      %1225 = vmatpush.xpose.msra.mxu0 0.0
      %1226 = vmatpush.xpose.msra.mxu0 0.0
      %1227 = vmatpush.xpose.msra.mxu0 0.0
      %1228 = vmatpush.xpose.msra.mxu0 0.0
      %1229 = vmatpush.xpose.msra.mxu0 0.0
      %1230 = vmatpush.xpose.msra.mxu0 0.0
      %1231 = vmatpush.xpose.msra.mxu0 0.0
      %1232 = vmatpush.xpose.msra.mxu0 0.0
      %1233 = vmatpush.xpose.msra.mxu0 0.0
      %1234 = vmatpush.xpose.msra.mxu0 %v1220
      %1235 = vmatpush.xpose.msra.mxu0 %v1218
      %1236 = vmatpush.xpose.msra.mxu0 %v1216
      %1237 = vmatpush.xpose.msra.mxu0 %v1214
      %1238 = vmatmul.f32.gmra.mxu0 %v1206
      %v1239 = vpop.f32.mrf.mxu0
      %v1240 = vadd.f32 0.0, %v1239
      %1241 = vmatmul.f32.gmra.mxu0 %v1208
      %v1242 = vpop.f32.mrf.mxu0
      %v1243 = vadd.f32 0.0, %v1242
      %1244 = vmatmul.f32.gmra.mxu0 %v1210
      %v1245 = vpop.f32.mrf.mxu0
      %v1246 = vadd.f32 0.0, %v1245
      %1247 = vmatmul.f32.gmra.mxu0 %v1212
      %v1248 = vpop.f32.mrf.mxu0
      %v1249 = vadd.f32 0.0, %v1248
      %1250 = vdwg.mxu0
      %v1251 = vmul.f32 %v1240, 0.35355338
      %v1252 = vmul.f32 %v1243, 0.35355338
      %v1253 = vmul.f32 %v1246, 0.35355338
      %v1254 = vmul.f32 %v1249, 0.35355338
      %v1255 = vsel %vm1151, %v1251, -inf
      %1256 = vmax.xlane.f32.xlu0 %v1255
      %v1257 = vpop.xlane.xlu0 %1256
      %v1258 = vsel %vm1151, %v1252, -inf
      %1259 = vmax.xlane.f32.xlu0 %v1258
      %v1260 = vpop.xlane.xlu0 %1259
      %v1261 = vsel %vm1151, %v1253, -inf
      %1262 = vmax.xlane.f32.xlu0 %v1261
      %v1263 = vpop.xlane.xlu0 %1262
      %v1264 = vsel %vm1151, %v1254, -inf
      %1265 = vmax.xlane.f32.xlu0 %v1264
      %v1266 = vpop.xlane.xlu0 %1265
      %v1267 = vsub.f32 %v1251, %v1257
      %v1268 = vsub.f32 %v1252, %v1260
      %v1269 = vsub.f32 %v1253, %v1263
      %v1270 = vsub.f32 %v1254, %v1266
      %v1271 = vmul.f32 %v1267, 1.442695
      %v1272 = vpow.pop %v1271
      %v1273 = vmul.f32 %v1268, 1.442695
      %v1274 = vpow.pop %v1273
      %v1275 = vmul.f32 %v1269, 1.442695
      %v1276 = vpow.pop %v1275
      %v1277 = vmul.f32 %v1270, 1.442695
      %v1278 = vpow.pop %v1277
      %v1279 = vsel %vm1151, %v1272, 0.0
      %1280 = vadd.xlane.f32.xlu0 %v1279
      %v1281 = vpop.xlane.xlu0 %1280
      %v1282 = vsel %vm1151, %v1274, 0.0
      %1283 = vadd.xlane.f32.xlu0 %v1282
      %v1284 = vpop.xlane.xlu0 %1283
      %v1285 = vsel %vm1151, %v1276, 0.0
      %1286 = vadd.xlane.f32.xlu0 %v1285
      %v1287 = vpop.xlane.xlu0 %1286
      %v1288 = vsel %vm1151, %v1278, 0.0
      %1289 = vadd.xlane.f32.xlu0 %v1288
      %v1290 = vpop.xlane.xlu0 %1289
      %v1291 = vrcp.pop %v1281
      %v1292 = vmul.f32 %v1281, %v1291
      %v1293 = vsub.f32 1.0, %v1292
      %v1294 = vmul.f32 %v1291, %v1293
      %v1295 = vadd.f32 %v1291, %v1294
      %vm1296 = vweird.f32 %v1281
      %vm1297 = vweird.f32 %v1291
      %vm1298 = vmor %vm1296, %vm1297
      %v1299 = vsel %vm1298, %v1291, %v1295
      %v1300 = vand.u32 2147483647, %v1281
      %vm1301 = vcmp.eq.f32.partialorder %v1300, 8.507059e+37
      %v1302 = vand.u32 %v1281, 2147483648
      %v1303 = vor.u32 1.1754944e-38, %v1302
      %v1304 = vsel %vm1301, %v1303, %v1299
      %v1305 = vmul.f32 %v1272, %v1304
      %v1306 = vrcp.pop %v1284
      %v1307 = vmul.f32 %v1284, %v1306
      %v1308 = vsub.f32 1.0, %v1307
      %v1309 = vmul.f32 %v1306, %v1308
      %v1310 = vadd.f32 %v1306, %v1309
      %vm1311 = vweird.f32 %v1284
      %vm1312 = vweird.f32 %v1306
      %vm1313 = vmor %vm1311, %vm1312
      %v1314 = vsel %vm1313, %v1306, %v1310
      %v1315 = vand.u32 2147483647, %v1284
      %vm1316 = vcmp.eq.f32.partialorder %v1315, 8.507059e+37
      %v1317 = vand.u32 %v1284, 2147483648
      %v1318 = vor.u32 1.1754944e-38, %v1317
      %v1319 = vsel %vm1316, %v1318, %v1314
      %v1320 = vmul.f32 %v1274, %v1319
      %v1321 = vrcp.pop %v1287
      %v1322 = vmul.f32 %v1287, %v1321
      %v1323 = vsub.f32 1.0, %v1322
      %v1324 = vmul.f32 %v1321, %v1323
      %v1325 = vadd.f32 %v1321, %v1324
      %vm1326 = vweird.f32 %v1287
      %vm1327 = vweird.f32 %v1321
      %vm1328 = vmor %vm1326, %vm1327
      %v1329 = vsel %vm1328, %v1321, %v1325
      %v1330 = vand.u32 2147483647, %v1287
      %vm1331 = vcmp.eq.f32.partialorder %v1330, 8.507059e+37
      %v1332 = vand.u32 %v1287, 2147483648
      %v1333 = vor.u32 1.1754944e-38, %v1332
      %v1334 = vsel %vm1331, %v1333, %v1329
      %v1335 = vmul.f32 %v1276, %v1334
      %v1336 = vrcp.pop %v1290
      %v1337 = vmul.f32 %v1290, %v1336
      %v1338 = vsub.f32 1.0, %v1337
      %v1339 = vmul.f32 %v1336, %v1338
      %v1340 = vadd.f32 %v1336, %v1339
      %vm1341 = vweird.f32 %v1290
      %vm1342 = vweird.f32 %v1336
      %vm1343 = vmor %vm1341, %vm1342
      %v1344 = vsel %vm1343, %v1336, %v1340
      %v1345 = vand.u32 2147483647, %v1290
      %vm1346 = vcmp.eq.f32.partialorder %v1345, 8.507059e+37
      %v1347 = vand.u32 %v1290, 2147483648
      %v1348 = vor.u32 1.1754944e-38, %v1347
      %v1349 = vsel %vm1346, %v1348, %v1344
      %v1350 = vmul.f32 %v1278, %v1349
      %1351 = vrot.lane.b32.xlu0 %v1182, 64
      %v1352 = vpop.permute.xlu0 %1351
      %1353 = vrot.lane.b32.xlu0 %v1185, 64
      %v1354 = vpop.permute.xlu0 %1353
      %1355 = vrot.lane.b32.xlu0 %v1188, 64
      %v1356 = vpop.permute.xlu0 %1355
      %1357 = vrot.lane.b32.xlu0 %v1191, 64
      %v1358 = vpop.permute.xlu0 %1357
      %v1364 = vsel %vm1151, %v1305, 0
      %v1367 = vsel %vm1151, %v1320, 0
      %v1370 = vsel %vm1151, %v1335, 0
      %v1373 = vsel %vm1151, %v1350, 0
      %1375 = vmatpush.msra.mxu0 0.0
      %1376 = vmatpush.msra.mxu0 0.0
      %1377 = vmatpush.msra.mxu0 0.0
      %1378 = vmatpush.msra.mxu0 0.0
      %1379 = vmatpush.msra.mxu0 0.0
      %1380 = vmatpush.msra.mxu0 0.0
      %1381 = vmatpush.msra.mxu0 0.0
      %1382 = vmatpush.msra.mxu0 0.0
      %1383 = vmatpush.msra.mxu0 0.0
      %1384 = vmatpush.msra.mxu0 0.0
      %1385 = vmatpush.msra.mxu0 0.0
      %1386 = vmatpush.msra.mxu0 0.0
      %1387 = vmatpush.msra.mxu0 %v1358
      %1388 = vmatpush.msra.mxu0 %v1356
      %1389 = vmatpush.msra.mxu0 %v1354
      %1390 = vmatpush.msra.mxu0 %v1352
      %1391 = vmatmul.f32.gmra.mxu0 %v1364
      %v1392 = vpop.f32.mrf.mxu0
      %v1393 = vadd.f32 0.0, %v1392
      %1394 = vmatmul.f32.gmra.mxu0 %v1367
      %v1395 = vpop.f32.mrf.mxu0
      %v1396 = vadd.f32 0.0, %v1395
      %1397 = vmatmul.f32.gmra.mxu0 %v1370
      %v1398 = vpop.f32.mrf.mxu0
      %v1399 = vadd.f32 0.0, %v1398
      %1400 = vmatmul.f32.gmra.mxu0 %v1373
      %v1401 = vpop.f32.mrf.mxu0
      %v1402 = vadd.f32 0.0, %v1401
      %1403 = vdwg.mxu0
      %1404 = vrot.lane.b32.xlu0 %v1182, 120
      %v1405 = vpop.permute.xlu0 %1404
      %1406 = vrot.lane.b32.xlu0 %v1185, 120
      %v1407 = vpop.permute.xlu0 %1406
      %1408 = vrot.lane.b32.xlu0 %v1188, 120
      %v1409 = vpop.permute.xlu0 %1408
      %1410 = vrot.lane.b32.xlu0 %v1191, 120
      %v1411 = vpop.permute.xlu0 %1410
      %1412 = vrot.lane.b32.xlu0 %v1182, 88
      %v1413 = vpop.permute.xlu0 %1412
      %1414 = vrot.lane.b32.xlu0 %v1185, 88
      %v1415 = vpop.permute.xlu0 %1414
      %1416 = vrot.lane.b32.xlu0 %v1188, 88
      %v1417 = vpop.permute.xlu0 %1416
      %1418 = vrot.lane.b32.xlu0 %v1191, 88
      %v1419 = vpop.permute.xlu0 %1418
      %v1420 = vsel %vm1205, %v1405, 0
      %v1422 = vsel %vm1205, %v1407, 0
      %v1424 = vsel %vm1205, %v1409, 0
      %v1426 = vsel %vm1205, %v1411, 0
      %v1428 = vsel %vm1205, %v1413, 0
      %v1430 = vsel %vm1205, %v1415, 0
      %v1432 = vsel %vm1205, %v1417, 0
      %v1434 = vsel %vm1205, %v1419, 0
      %1436 = vmatpush.xpose.msra.mxu0 0.0
      %1437 = vmatpush.xpose.msra.mxu0 0.0
      %1438 = vmatpush.xpose.msra.mxu0 0.0
      %1439 = vmatpush.xpose.msra.mxu0 0.0
      %1440 = vmatpush.xpose.msra.mxu0 0.0
      %1441 = vmatpush.xpose.msra.mxu0 0.0
      %1442 = vmatpush.xpose.msra.mxu0 0.0
      %1443 = vmatpush.xpose.msra.mxu0 0.0
      %1444 = vmatpush.xpose.msra.mxu0 0.0
      %1445 = vmatpush.xpose.msra.mxu0 0.0
      %1446 = vmatpush.xpose.msra.mxu0 0.0
      %1447 = vmatpush.xpose.msra.mxu0 0.0
      %1448 = vmatpush.xpose.msra.mxu0 %v1434
      %1449 = vmatpush.xpose.msra.mxu0 %v1432
      %1450 = vmatpush.xpose.msra.mxu0 %v1430
      %1451 = vmatpush.xpose.msra.mxu0 %v1428
      %1452 = vmatmul.f32.gmra.mxu0 %v1420
      %v1453 = vpop.f32.mrf.mxu0
      %v1454 = vadd.f32 0.0, %v1453
      %1455 = vmatmul.f32.gmra.mxu0 %v1422
      %v1456 = vpop.f32.mrf.mxu0
      %v1457 = vadd.f32 0.0, %v1456
      %1458 = vmatmul.f32.gmra.mxu0 %v1424
      %v1459 = vpop.f32.mrf.mxu0
      %v1460 = vadd.f32 0.0, %v1459
      %1461 = vmatmul.f32.gmra.mxu0 %v1426
      %v1462 = vpop.f32.mrf.mxu0
      %v1463 = vadd.f32 0.0, %v1462
      %1464 = vdwg.mxu0
      %v1465 = vmul.f32 %v1454, 0.35355338
      %v1466 = vmul.f32 %v1457, 0.35355338
      %v1467 = vmul.f32 %v1460, 0.35355338
      %v1468 = vmul.f32 %v1463, 0.35355338
      %v1469 = vsel %vm1151, %v1465, -inf
      %1470 = vmax.xlane.f32.xlu0 %v1469
      %v1471 = vpop.xlane.xlu0 %1470
      %v1472 = vsel %vm1151, %v1466, -inf
      %1473 = vmax.xlane.f32.xlu0 %v1472
      %v1474 = vpop.xlane.xlu0 %1473
      %v1475 = vsel %vm1151, %v1467, -inf
      %1476 = vmax.xlane.f32.xlu0 %v1475
      %v1477 = vpop.xlane.xlu0 %1476
      %v1478 = vsel %vm1151, %v1468, -inf
      %1479 = vmax.xlane.f32.xlu0 %v1478
      %v1480 = vpop.xlane.xlu0 %1479
      %v1481 = vsub.f32 %v1465, %v1471
      %v1482 = vsub.f32 %v1466, %v1474
      %v1483 = vsub.f32 %v1467, %v1477
      %v1484 = vsub.f32 %v1468, %v1480
      %v1485 = vmul.f32 %v1481, 1.442695
      %v1486 = vpow.pop %v1485
      %v1487 = vmul.f32 %v1482, 1.442695
      %v1488 = vpow.pop %v1487
      %v1489 = vmul.f32 %v1483, 1.442695
      %v1490 = vpow.pop %v1489
      %v1491 = vmul.f32 %v1484, 1.442695
      %v1492 = vpow.pop %v1491
      %v1493 = vsel %vm1151, %v1486, 0.0
      %1494 = vadd.xlane.f32.xlu0 %v1493
      %v1495 = vpop.xlane.xlu0 %1494
      %v1496 = vsel %vm1151, %v1488, 0.0
      %1497 = vadd.xlane.f32.xlu0 %v1496
      %v1498 = vpop.xlane.xlu0 %1497
      %v1499 = vsel %vm1151, %v1490, 0.0
      %1500 = vadd.xlane.f32.xlu0 %v1499
      %v1501 = vpop.xlane.xlu0 %1500
      %v1502 = vsel %vm1151, %v1492, 0.0
      %1503 = vadd.xlane.f32.xlu0 %v1502
      %v1504 = vpop.xlane.xlu0 %1503
      %v1505 = vrcp.pop %v1495
      %v1506 = vmul.f32 %v1495, %v1505
      %v1507 = vsub.f32 1.0, %v1506
      %v1508 = vmul.f32 %v1505, %v1507
      %v1509 = vadd.f32 %v1505, %v1508
      %vm1510 = vweird.f32 %v1495
      %vm1511 = vweird.f32 %v1505
      %vm1512 = vmor %vm1510, %vm1511
      %v1513 = vsel %vm1512, %v1505, %v1509
      %v1514 = vand.u32 2147483647, %v1495
      %vm1515 = vcmp.eq.f32.partialorder %v1514, 8.507059e+37
      %v1516 = vand.u32 %v1495, 2147483648
      %v1517 = vor.u32 1.1754944e-38, %v1516
      %v1518 = vsel %vm1515, %v1517, %v1513
      %v1519 = vmul.f32 %v1486, %v1518
      %v1520 = vrcp.pop %v1498
      %v1521 = vmul.f32 %v1498, %v1520
      %v1522 = vsub.f32 1.0, %v1521
      %v1523 = vmul.f32 %v1520, %v1522
      %v1524 = vadd.f32 %v1520, %v1523
      %vm1525 = vweird.f32 %v1498
      %vm1526 = vweird.f32 %v1520
      %vm1527 = vmor %vm1525, %vm1526
      %v1528 = vsel %vm1527, %v1520, %v1524
      %v1529 = vand.u32 2147483647, %v1498
      %vm1530 = vcmp.eq.f32.partialorder %v1529, 8.507059e+37
      %v1531 = vand.u32 %v1498, 2147483648
      %v1532 = vor.u32 1.1754944e-38, %v1531
      %v1533 = vsel %vm1530, %v1532, %v1528
      %v1534 = vmul.f32 %v1488, %v1533
      %v1535 = vrcp.pop %v1501
      %v1536 = vmul.f32 %v1501, %v1535
      %v1537 = vsub.f32 1.0, %v1536
      %v1538 = vmul.f32 %v1535, %v1537
      %v1539 = vadd.f32 %v1535, %v1538
      %vm1540 = vweird.f32 %v1501
      %vm1541 = vweird.f32 %v1535
      %vm1542 = vmor %vm1540, %vm1541
      %v1543 = vsel %vm1542, %v1535, %v1539
      %v1544 = vand.u32 2147483647, %v1501
      %vm1545 = vcmp.eq.f32.partialorder %v1544, 8.507059e+37
      %v1546 = vand.u32 %v1501, 2147483648
      %v1547 = vor.u32 1.1754944e-38, %v1546
      %v1548 = vsel %vm1545, %v1547, %v1543
      %v1549 = vmul.f32 %v1490, %v1548
      %v1550 = vrcp.pop %v1504
      %v1551 = vmul.f32 %v1504, %v1550
      %v1552 = vsub.f32 1.0, %v1551
      %v1553 = vmul.f32 %v1550, %v1552
      %v1554 = vadd.f32 %v1550, %v1553
      %vm1555 = vweird.f32 %v1504
      %vm1556 = vweird.f32 %v1550
      %vm1557 = vmor %vm1555, %vm1556
      %v1558 = vsel %vm1557, %v1550, %v1554
      %v1559 = vand.u32 2147483647, %v1504
      %vm1560 = vcmp.eq.f32.partialorder %v1559, 8.507059e+37
      %v1561 = vand.u32 %v1504, 2147483648
      %v1562 = vor.u32 1.1754944e-38, %v1561
      %v1563 = vsel %vm1560, %v1562, %v1558
      %v1564 = vmul.f32 %v1492, %v1563
      %1565 = vrot.lane.b32.xlu0 %v1182, 56
      %v1566 = vpop.permute.xlu0 %1565
      %1567 = vrot.lane.b32.xlu0 %v1185, 56
      %v1568 = vpop.permute.xlu0 %1567
      %1569 = vrot.lane.b32.xlu0 %v1188, 56
      %v1570 = vpop.permute.xlu0 %1569
      %1571 = vrot.lane.b32.xlu0 %v1191, 56
      %v1572 = vpop.permute.xlu0 %1571
      %v1578 = vsel %vm1151, %v1519, 0
      %v1581 = vsel %vm1151, %v1534, 0
      %v1584 = vsel %vm1151, %v1549, 0
      %v1587 = vsel %vm1151, %v1564, 0
      %1589 = vmatpush.msra.mxu0 0.0
      %1590 = vmatpush.msra.mxu0 0.0
      %1591 = vmatpush.msra.mxu0 0.0
      %1592 = vmatpush.msra.mxu0 0.0
      %1593 = vmatpush.msra.mxu0 0.0
      %1594 = vmatpush.msra.mxu0 0.0
      %1595 = vmatpush.msra.mxu0 0.0
      %1596 = vmatpush.msra.mxu0 0.0
      %1597 = vmatpush.msra.mxu0 0.0
      %1598 = vmatpush.msra.mxu0 0.0
      %1599 = vmatpush.msra.mxu0 0.0
      %1600 = vmatpush.msra.mxu0 0.0
      %1601 = vmatpush.msra.mxu0 %v1572
      %1602 = vmatpush.msra.mxu0 %v1570
      %1603 = vmatpush.msra.mxu0 %v1568
      %1604 = vmatpush.msra.mxu0 %v1566
      %1605 = vmatmul.f32.gmra.mxu0 %v1578
      %v1606 = vpop.f32.mrf.mxu0
      %v1607 = vadd.f32 0.0, %v1606
      %1608 = vmatmul.f32.gmra.mxu0 %v1581
      %v1609 = vpop.f32.mrf.mxu0
      %v1610 = vadd.f32 0.0, %v1609
      %1611 = vmatmul.f32.gmra.mxu0 %v1584
      %v1612 = vpop.f32.mrf.mxu0
      %v1613 = vadd.f32 0.0, %v1612
      %1614 = vmatmul.f32.gmra.mxu0 %v1587
      %v1615 = vpop.f32.mrf.mxu0
      %v1616 = vadd.f32 0.0, %v1615
      %1617 = vdwg.mxu0
      %1618 = vrot.lane.b32.xlu0 %v1182, 112
      %v1619 = vpop.permute.xlu0 %1618
      %1620 = vrot.lane.b32.xlu0 %v1185, 112
      %v1621 = vpop.permute.xlu0 %1620
      %1622 = vrot.lane.b32.xlu0 %v1188, 112
      %v1623 = vpop.permute.xlu0 %1622
      %1624 = vrot.lane.b32.xlu0 %v1191, 112
      %v1625 = vpop.permute.xlu0 %1624
      %1626 = vrot.lane.b32.xlu0 %v1182, 80
      %v1627 = vpop.permute.xlu0 %1626
      %1628 = vrot.lane.b32.xlu0 %v1185, 80
      %v1629 = vpop.permute.xlu0 %1628
      %1630 = vrot.lane.b32.xlu0 %v1188, 80
      %v1631 = vpop.permute.xlu0 %1630
      %1632 = vrot.lane.b32.xlu0 %v1191, 80
      %v1633 = vpop.permute.xlu0 %1632
      %v1634 = vsel %vm1205, %v1619, 0
      %v1636 = vsel %vm1205, %v1621, 0
      %v1638 = vsel %vm1205, %v1623, 0
      %v1640 = vsel %vm1205, %v1625, 0
      %v1642 = vsel %vm1205, %v1627, 0
      %v1644 = vsel %vm1205, %v1629, 0
      %v1646 = vsel %vm1205, %v1631, 0
      %v1648 = vsel %vm1205, %v1633, 0
      %1650 = vmatpush.xpose.msra.mxu0 0.0
      %1651 = vmatpush.xpose.msra.mxu0 0.0
      %1652 = vmatpush.xpose.msra.mxu0 0.0
      %1653 = vmatpush.xpose.msra.mxu0 0.0
      %1654 = vmatpush.xpose.msra.mxu0 0.0
      %1655 = vmatpush.xpose.msra.mxu0 0.0
      %1656 = vmatpush.xpose.msra.mxu0 0.0
      %1657 = vmatpush.xpose.msra.mxu0 0.0
      %1658 = vmatpush.xpose.msra.mxu0 0.0
      %1659 = vmatpush.xpose.msra.mxu0 0.0
      %1660 = vmatpush.xpose.msra.mxu0 0.0
      %1661 = vmatpush.xpose.msra.mxu0 0.0
      %1662 = vmatpush.xpose.msra.mxu0 %v1648
      %1663 = vmatpush.xpose.msra.mxu0 %v1646
      %1664 = vmatpush.xpose.msra.mxu0 %v1644
      %1665 = vmatpush.xpose.msra.mxu0 %v1642
      %1666 = vmatmul.f32.gmra.mxu0 %v1634
      %v1667 = vpop.f32.mrf.mxu0
      %v1668 = vadd.f32 0.0, %v1667
      %1669 = vmatmul.f32.gmra.mxu0 %v1636
      %v1670 = vpop.f32.mrf.mxu0
      %v1671 = vadd.f32 0.0, %v1670
      %1672 = vmatmul.f32.gmra.mxu0 %v1638
      %v1673 = vpop.f32.mrf.mxu0
      %v1674 = vadd.f32 0.0, %v1673
      %1675 = vmatmul.f32.gmra.mxu0 %v1640
      %v1676 = vpop.f32.mrf.mxu0
      %v1677 = vadd.f32 0.0, %v1676
      %1678 = vdwg.mxu0
      %v1679 = vmul.f32 %v1668, 0.35355338
      %v1680 = vmul.f32 %v1671, 0.35355338
      %v1681 = vmul.f32 %v1674, 0.35355338
      %v1682 = vmul.f32 %v1677, 0.35355338
      %v1683 = vsel %vm1151, %v1679, -inf
      %1684 = vmax.xlane.f32.xlu0 %v1683
      %v1685 = vpop.xlane.xlu0 %1684
      %v1686 = vsel %vm1151, %v1680, -inf
      %1687 = vmax.xlane.f32.xlu0 %v1686
      %v1688 = vpop.xlane.xlu0 %1687
      %v1689 = vsel %vm1151, %v1681, -inf
      %1690 = vmax.xlane.f32.xlu0 %v1689
      %v1691 = vpop.xlane.xlu0 %1690
      %v1692 = vsel %vm1151, %v1682, -inf
      %1693 = vmax.xlane.f32.xlu0 %v1692
      %v1694 = vpop.xlane.xlu0 %1693
      %v1695 = vsub.f32 %v1679, %v1685
      %v1696 = vsub.f32 %v1680, %v1688
      %v1697 = vsub.f32 %v1681, %v1691
      %v1698 = vsub.f32 %v1682, %v1694
      %v1699 = vmul.f32 %v1695, 1.442695
      %v1700 = vpow.pop %v1699
      %v1701 = vmul.f32 %v1696, 1.442695
      %v1702 = vpow.pop %v1701
      %v1703 = vmul.f32 %v1697, 1.442695
      %v1704 = vpow.pop %v1703
      %v1705 = vmul.f32 %v1698, 1.442695
      %v1706 = vpow.pop %v1705
      %v1707 = vsel %vm1151, %v1700, 0.0
      %1708 = vadd.xlane.f32.xlu0 %v1707
      %v1709 = vpop.xlane.xlu0 %1708
      %v1710 = vsel %vm1151, %v1702, 0.0
      %1711 = vadd.xlane.f32.xlu0 %v1710
      %v1712 = vpop.xlane.xlu0 %1711
      %v1713 = vsel %vm1151, %v1704, 0.0
      %1714 = vadd.xlane.f32.xlu0 %v1713
      %v1715 = vpop.xlane.xlu0 %1714
      %v1716 = vsel %vm1151, %v1706, 0.0
      %1717 = vadd.xlane.f32.xlu0 %v1716
      %v1718 = vpop.xlane.xlu0 %1717
      %v1719 = vrcp.pop %v1709
      %v1720 = vmul.f32 %v1709, %v1719
      %v1721 = vsub.f32 1.0, %v1720
      %v1722 = vmul.f32 %v1719, %v1721
      %v1723 = vadd.f32 %v1719, %v1722
      %vm1724 = vweird.f32 %v1709
      %vm1725 = vweird.f32 %v1719
      %vm1726 = vmor %vm1724, %vm1725
      %v1727 = vsel %vm1726, %v1719, %v1723
      %v1728 = vand.u32 2147483647, %v1709
      %vm1729 = vcmp.eq.f32.partialorder %v1728, 8.507059e+37
      %v1730 = vand.u32 %v1709, 2147483648
      %v1731 = vor.u32 1.1754944e-38, %v1730
      %v1732 = vsel %vm1729, %v1731, %v1727
      %v1733 = vmul.f32 %v1700, %v1732
      %v1734 = vrcp.pop %v1712
      %v1735 = vmul.f32 %v1712, %v1734
      %v1736 = vsub.f32 1.0, %v1735
      %v1737 = vmul.f32 %v1734, %v1736
      %v1738 = vadd.f32 %v1734, %v1737
      %vm1739 = vweird.f32 %v1712
      %vm1740 = vweird.f32 %v1734
      %vm1741 = vmor %vm1739, %vm1740
      %v1742 = vsel %vm1741, %v1734, %v1738
      %v1743 = vand.u32 2147483647, %v1712
      %vm1744 = vcmp.eq.f32.partialorder %v1743, 8.507059e+37
      %v1745 = vand.u32 %v1712, 2147483648
      %v1746 = vor.u32 1.1754944e-38, %v1745
      %v1747 = vsel %vm1744, %v1746, %v1742
      %v1748 = vmul.f32 %v1702, %v1747
      %v1749 = vrcp.pop %v1715
      %v1750 = vmul.f32 %v1715, %v1749
      %v1751 = vsub.f32 1.0, %v1750
      %v1752 = vmul.f32 %v1749, %v1751
      %v1753 = vadd.f32 %v1749, %v1752
      %vm1754 = vweird.f32 %v1715
      %vm1755 = vweird.f32 %v1749
      %vm1756 = vmor %vm1754, %vm1755
      %v1757 = vsel %vm1756, %v1749, %v1753
      %v1758 = vand.u32 2147483647, %v1715
      %vm1759 = vcmp.eq.f32.partialorder %v1758, 8.507059e+37
      %v1760 = vand.u32 %v1715, 2147483648
      %v1761 = vor.u32 1.1754944e-38, %v1760
      %v1762 = vsel %vm1759, %v1761, %v1757
      %v1763 = vmul.f32 %v1704, %v1762
      %v1764 = vrcp.pop %v1718
      %v1765 = vmul.f32 %v1718, %v1764
      %v1766 = vsub.f32 1.0, %v1765
      %v1767 = vmul.f32 %v1764, %v1766
      %v1768 = vadd.f32 %v1764, %v1767
      %vm1769 = vweird.f32 %v1718
      %vm1770 = vweird.f32 %v1764
      %vm1771 = vmor %vm1769, %vm1770
      %v1772 = vsel %vm1771, %v1764, %v1768
      %v1773 = vand.u32 2147483647, %v1718
      %vm1774 = vcmp.eq.f32.partialorder %v1773, 8.507059e+37
      %v1775 = vand.u32 %v1718, 2147483648
      %v1776 = vor.u32 1.1754944e-38, %v1775
      %v1777 = vsel %vm1774, %v1776, %v1772
      %v1778 = vmul.f32 %v1706, %v1777
      %1779 = vrot.lane.b32.xlu0 %v1182, 48
      %v1780 = vpop.permute.xlu0 %1779
      %1781 = vrot.lane.b32.xlu0 %v1185, 48
      %v1782 = vpop.permute.xlu0 %1781
      %1783 = vrot.lane.b32.xlu0 %v1188, 48
      %v1784 = vpop.permute.xlu0 %1783
      %1785 = vrot.lane.b32.xlu0 %v1191, 48
      %v1786 = vpop.permute.xlu0 %1785
      %v1792 = vsel %vm1151, %v1733, 0
      %v1795 = vsel %vm1151, %v1748, 0
      %v1798 = vsel %vm1151, %v1763, 0
      %v1801 = vsel %vm1151, %v1778, 0
      %1803 = vmatpush.msra.mxu0 0.0
      %1804 = vmatpush.msra.mxu0 0.0
      %1805 = vmatpush.msra.mxu0 0.0
      %1806 = vmatpush.msra.mxu0 0.0
      %1807 = vmatpush.msra.mxu0 0.0
      %1808 = vmatpush.msra.mxu0 0.0
      %1809 = vmatpush.msra.mxu0 0.0
      %1810 = vmatpush.msra.mxu0 0.0
      %1811 = vmatpush.msra.mxu0 0.0
      %1812 = vmatpush.msra.mxu0 0.0
      %1813 = vmatpush.msra.mxu0 0.0
      %1814 = vmatpush.msra.mxu0 0.0
      %1815 = vmatpush.msra.mxu0 %v1786
      %1816 = vmatpush.msra.mxu0 %v1784
      %1817 = vmatpush.msra.mxu0 %v1782
      %1818 = vmatpush.msra.mxu0 %v1780
      %1819 = vmatmul.f32.gmra.mxu0 %v1792
      %v1820 = vpop.f32.mrf.mxu0
      %v1821 = vadd.f32 0.0, %v1820
      %1822 = vmatmul.f32.gmra.mxu0 %v1795
      %v1823 = vpop.f32.mrf.mxu0
      %v1824 = vadd.f32 0.0, %v1823
      %1825 = vmatmul.f32.gmra.mxu0 %v1798
      %v1826 = vpop.f32.mrf.mxu0
      %v1827 = vadd.f32 0.0, %v1826
      %1828 = vmatmul.f32.gmra.mxu0 %v1801
      %v1829 = vpop.f32.mrf.mxu0
      %v1830 = vadd.f32 0.0, %v1829
      %1831 = vdwg.mxu0
      %1832 = vrot.lane.b32.xlu0 %v1182, 104
      %v1833 = vpop.permute.xlu0 %1832
      %1834 = vrot.lane.b32.xlu0 %v1185, 104
      %v1835 = vpop.permute.xlu0 %1834
      %1836 = vrot.lane.b32.xlu0 %v1188, 104
      %v1837 = vpop.permute.xlu0 %1836
      %1838 = vrot.lane.b32.xlu0 %v1191, 104
      %v1839 = vpop.permute.xlu0 %1838
      %1840 = vrot.lane.b32.xlu0 %v1182, 72
      %v1841 = vpop.permute.xlu0 %1840
      %1842 = vrot.lane.b32.xlu0 %v1185, 72
      %v1843 = vpop.permute.xlu0 %1842
      %1844 = vrot.lane.b32.xlu0 %v1188, 72
      %v1845 = vpop.permute.xlu0 %1844
      %1846 = vrot.lane.b32.xlu0 %v1191, 72
      %v1847 = vpop.permute.xlu0 %1846
      %v1848 = vsel %vm1205, %v1833, 0
      %v1850 = vsel %vm1205, %v1835, 0
      %v1852 = vsel %vm1205, %v1837, 0
      %v1854 = vsel %vm1205, %v1839, 0
      %v1856 = vsel %vm1205, %v1841, 0
      %v1858 = vsel %vm1205, %v1843, 0
      %v1860 = vsel %vm1205, %v1845, 0
      %v1862 = vsel %vm1205, %v1847, 0
      %1864 = vmatpush.xpose.msra.mxu0 0.0
      %1865 = vmatpush.xpose.msra.mxu0 0.0
      %1866 = vmatpush.xpose.msra.mxu0 0.0
      %1867 = vmatpush.xpose.msra.mxu0 0.0
      %1868 = vmatpush.xpose.msra.mxu0 0.0
      %1869 = vmatpush.xpose.msra.mxu0 0.0
      %1870 = vmatpush.xpose.msra.mxu0 0.0
      %1871 = vmatpush.xpose.msra.mxu0 0.0
      %1872 = vmatpush.xpose.msra.mxu0 0.0
      %1873 = vmatpush.xpose.msra.mxu0 0.0
      %1874 = vmatpush.xpose.msra.mxu0 0.0
      %1875 = vmatpush.xpose.msra.mxu0 0.0
      %1876 = vmatpush.xpose.msra.mxu0 %v1862
      %1877 = vmatpush.xpose.msra.mxu0 %v1860
      %1878 = vmatpush.xpose.msra.mxu0 %v1858
      %1879 = vmatpush.xpose.msra.mxu0 %v1856
      %1880 = vmatmul.f32.gmra.mxu0 %v1848
      %v1881 = vpop.f32.mrf.mxu0
      %v1882 = vadd.f32 0.0, %v1881
      %1883 = vmatmul.f32.gmra.mxu0 %v1850
      %v1884 = vpop.f32.mrf.mxu0
      %v1885 = vadd.f32 0.0, %v1884
      %1886 = vmatmul.f32.gmra.mxu0 %v1852
      %v1887 = vpop.f32.mrf.mxu0
      %v1888 = vadd.f32 0.0, %v1887
      %1889 = vmatmul.f32.gmra.mxu0 %v1854
      %v1890 = vpop.f32.mrf.mxu0
      %v1891 = vadd.f32 0.0, %v1890
      %1892 = vdwg.mxu0
      %v1893 = vmul.f32 %v1882, 0.35355338
      %v1894 = vmul.f32 %v1885, 0.35355338
      %v1895 = vmul.f32 %v1888, 0.35355338
      %v1896 = vmul.f32 %v1891, 0.35355338
      %v1897 = vsel %vm1151, %v1893, -inf
      %1898 = vmax.xlane.f32.xlu0 %v1897
      %v1899 = vpop.xlane.xlu0 %1898
      %v1900 = vsel %vm1151, %v1894, -inf
      %1901 = vmax.xlane.f32.xlu0 %v1900
      %v1902 = vpop.xlane.xlu0 %1901
      %v1903 = vsel %vm1151, %v1895, -inf
      %1904 = vmax.xlane.f32.xlu0 %v1903
      %v1905 = vpop.xlane.xlu0 %1904
      %v1906 = vsel %vm1151, %v1896, -inf
      %1907 = vmax.xlane.f32.xlu0 %v1906
      %v1908 = vpop.xlane.xlu0 %1907
      %v1909 = vsub.f32 %v1893, %v1899
      %v1910 = vsub.f32 %v1894, %v1902
      %v1911 = vsub.f32 %v1895, %v1905
      %v1912 = vsub.f32 %v1896, %v1908
      %v1913 = vmul.f32 %v1909, 1.442695
      %v1914 = vpow.pop %v1913
      %v1915 = vmul.f32 %v1910, 1.442695
      %v1916 = vpow.pop %v1915
      %v1917 = vmul.f32 %v1911, 1.442695
      %v1918 = vpow.pop %v1917
      %v1919 = vmul.f32 %v1912, 1.442695
      %v1920 = vpow.pop %v1919
      %v1921 = vsel %vm1151, %v1914, 0.0
      %1922 = vadd.xlane.f32.xlu0 %v1921
      %v1923 = vpop.xlane.xlu0 %1922
      %v1924 = vsel %vm1151, %v1916, 0.0
      %1925 = vadd.xlane.f32.xlu0 %v1924
      %v1926 = vpop.xlane.xlu0 %1925
      %v1927 = vsel %vm1151, %v1918, 0.0
      %1928 = vadd.xlane.f32.xlu0 %v1927
      %v1929 = vpop.xlane.xlu0 %1928
      %v1930 = vsel %vm1151, %v1920, 0.0
      %1931 = vadd.xlane.f32.xlu0 %v1930
      %v1932 = vpop.xlane.xlu0 %1931
      %v1933 = vrcp.pop %v1923
      %v1934 = vmul.f32 %v1923, %v1933
      %v1935 = vsub.f32 1.0, %v1934
      %v1936 = vmul.f32 %v1933, %v1935
      %v1937 = vadd.f32 %v1933, %v1936
      %vm1938 = vweird.f32 %v1923
      %vm1939 = vweird.f32 %v1933
      %vm1940 = vmor %vm1938, %vm1939
      %v1941 = vsel %vm1940, %v1933, %v1937
      %v1942 = vand.u32 2147483647, %v1923
      %vm1943 = vcmp.eq.f32.partialorder %v1942, 8.507059e+37
      %v1944 = vand.u32 %v1923, 2147483648
      %v1945 = vor.u32 1.1754944e-38, %v1944
      %v1946 = vsel %vm1943, %v1945, %v1941
      %v1947 = vmul.f32 %v1914, %v1946
      %v1948 = vrcp.pop %v1926
      %v1949 = vmul.f32 %v1926, %v1948
      %v1950 = vsub.f32 1.0, %v1949
      %v1951 = vmul.f32 %v1948, %v1950
      %v1952 = vadd.f32 %v1948, %v1951
      %vm1953 = vweird.f32 %v1926
      %vm1954 = vweird.f32 %v1948
      %vm1955 = vmor %vm1953, %vm1954
      %v1956 = vsel %vm1955, %v1948, %v1952
      %v1957 = vand.u32 2147483647, %v1926
      %vm1958 = vcmp.eq.f32.partialorder %v1957, 8.507059e+37
      %v1959 = vand.u32 %v1926, 2147483648
      %v1960 = vor.u32 1.1754944e-38, %v1959
      %v1961 = vsel %vm1958, %v1960, %v1956
      %v1962 = vmul.f32 %v1916, %v1961
      %v1963 = vrcp.pop %v1929
      %v1964 = vmul.f32 %v1929, %v1963
      %v1965 = vsub.f32 1.0, %v1964
      %v1966 = vmul.f32 %v1963, %v1965
      %v1967 = vadd.f32 %v1963, %v1966
      %vm1968 = vweird.f32 %v1929
      %vm1969 = vweird.f32 %v1963
      %vm1970 = vmor %vm1968, %vm1969
      %v1971 = vsel %vm1970, %v1963, %v1967
      %v1972 = vand.u32 2147483647, %v1929
      %vm1973 = vcmp.eq.f32.partialorder %v1972, 8.507059e+37
      %v1974 = vand.u32 %v1929, 2147483648
      %v1975 = vor.u32 1.1754944e-38, %v1974
      %v1976 = vsel %vm1973, %v1975, %v1971
      %v1977 = vmul.f32 %v1918, %v1976
      %v1978 = vrcp.pop %v1932
      %v1979 = vmul.f32 %v1932, %v1978
      %v1980 = vsub.f32 1.0, %v1979
      %v1981 = vmul.f32 %v1978, %v1980
      %v1982 = vadd.f32 %v1978, %v1981
      %vm1983 = vweird.f32 %v1932
      %vm1984 = vweird.f32 %v1978
      %vm1985 = vmor %vm1983, %vm1984
      %v1986 = vsel %vm1985, %v1978, %v1982
      %v1987 = vand.u32 2147483647, %v1932
      %vm1988 = vcmp.eq.f32.partialorder %v1987, 8.507059e+37
      %v1989 = vand.u32 %v1932, 2147483648
      %v1990 = vor.u32 1.1754944e-38, %v1989
      %v1991 = vsel %vm1988, %v1990, %v1986
      %v1992 = vmul.f32 %v1920, %v1991
      %1993 = vrot.lane.b32.xlu0 %v1182, 40
      %v1994 = vpop.permute.xlu0 %1993
      %1995 = vrot.lane.b32.xlu0 %v1185, 40
      %v1996 = vpop.permute.xlu0 %1995
      %1997 = vrot.lane.b32.xlu0 %v1188, 40
      %v1998 = vpop.permute.xlu0 %1997
      %1999 = vrot.lane.b32.xlu0 %v1191, 40
      %v2000 = vpop.permute.xlu0 %1999
      %v2006 = vsel %vm1151, %v1947, 0
      %v2009 = vsel %vm1151, %v1962, 0
      %v2012 = vsel %vm1151, %v1977, 0
      %v2015 = vsel %vm1151, %v1992, 0
      %2017 = vmatpush.msra.mxu0 0.0
      %2018 = vmatpush.msra.mxu0 0.0
      %2019 = vmatpush.msra.mxu0 0.0
      %2020 = vmatpush.msra.mxu0 0.0
      %2021 = vmatpush.msra.mxu0 0.0
      %2022 = vmatpush.msra.mxu0 0.0
      %2023 = vmatpush.msra.mxu0 0.0
      %2024 = vmatpush.msra.mxu0 0.0
      %2025 = vmatpush.msra.mxu0 0.0
      %2026 = vmatpush.msra.mxu0 0.0
      %2027 = vmatpush.msra.mxu0 0.0
      %2028 = vmatpush.msra.mxu0 0.0
      %2029 = vmatpush.msra.mxu0 %v2000
      %2030 = vmatpush.msra.mxu0 %v1998
      %2031 = vmatpush.msra.mxu0 %v1996
      %2032 = vmatpush.msra.mxu0 %v1994
      %2033 = vmatmul.f32.gmra.mxu0 %v2006
      %v2034 = vpop.f32.mrf.mxu0
      %v2035 = vadd.f32 0.0, %v2034
      %2036 = vmatmul.f32.gmra.mxu0 %v2009
      %v2037 = vpop.f32.mrf.mxu0
      %v2038 = vadd.f32 0.0, %v2037
      %2039 = vmatmul.f32.gmra.mxu0 %v2012
      %v2040 = vpop.f32.mrf.mxu0
      %v2041 = vadd.f32 0.0, %v2040
      %2042 = vmatmul.f32.gmra.mxu0 %v2015
      %v2043 = vpop.f32.mrf.mxu0
      %v2044 = vadd.f32 0.0, %v2043
      %2045 = vdwg.mxu0
      %2050 = vrot.lane.b32.xlu0 %v1607, 8
      %v2051 = vpop.permute.xlu0 %2050
      %2052 = vrot.lane.b32.xlu0 %v1610, 8
      %v2053 = vpop.permute.xlu0 %2052
      %2054 = vrot.lane.b32.xlu0 %v1613, 8
      %v2055 = vpop.permute.xlu0 %2054
      %2056 = vrot.lane.b32.xlu0 %v1616, 8
      %v2057 = vpop.permute.xlu0 %2056
      %2066 = vrot.lane.b32.xlu0 %v1821, 16
      %v2067 = vpop.permute.xlu0 %2066
      %2068 = vrot.lane.b32.xlu0 %v1824, 16
      %v2069 = vpop.permute.xlu0 %2068
      %2070 = vrot.lane.b32.xlu0 %v1827, 16
      %v2071 = vpop.permute.xlu0 %2070
      %2072 = vrot.lane.b32.xlu0 %v1830, 16
      %v2073 = vpop.permute.xlu0 %2072
      %2082 = vrot.lane.b32.xlu0 %v2035, 24
      %v2083 = vpop.permute.xlu0 %2082
      %2084 = vrot.lane.b32.xlu0 %v2038, 24
      %v2085 = vpop.permute.xlu0 %2084
      %2086 = vrot.lane.b32.xlu0 %v2041, 24
      %v2087 = vpop.permute.xlu0 %2086
      %2088 = vrot.lane.b32.xlu0 %v2044, 24
      %v2089 = vpop.permute.xlu0 %2088
      %v2094 = vsel %vm1205, %v1393, %v2051
      %v2095 = vsel %vm1205, %v1396, %v2053
      %v2096 = vsel %vm1205, %v1399, %v2055
      %v2097 = vsel %vm1205, %v1402, %v2057
      %v2098 = vsel %vm1028, %v2094, %v2067
      %v2099 = vsel %vm1028, %v2095, %v2069
      %v2100 = vsel %vm1028, %v2096, %v2071
      %v2101 = vsel %vm1028, %v2097, %v2073
      %vm2102 = vcmask 195584
      %v2103 = vsel %vm2102, %v2098, %v2083
      %v2104 = vsel %vm2102, %v2099, %v2085
      %v2105 = vsel %vm2102, %v2100, %v2087
      %v2106 = vsel %vm2102, %v2101, %v2089
      %v2107 = vld [vmem:[%s11] sm:$0xff]
      %v2108 = vld [vmem:[%s11 + $0x8] sm:$0xff]
      %v2109 = vld [vmem:[%s11 + $0x10] sm:$0xff]
      %v2110 = vld [vmem:[%s11 + $0x18] sm:$0xff]
      %v2111 = vld [vmem:[%s12] sm:$0x1]
      %v2113 = vperm.slane %v2111, 0
      %v2116 = vsel %vm1151, %v2103, 0
      %v2119 = vsel %vm1151, %v2104, 0
      %v2122 = vsel %vm1151, %v2105, 0
      %v2125 = vsel %vm1151, %v2106, 0
      %2127 = vmatpush.msra.mxu0 0.0
      %2128 = vmatpush.msra.mxu0 0.0
      %2129 = vmatpush.msra.mxu0 0.0
      %2130 = vmatpush.msra.mxu0 0.0
      %2131 = vmatpush.msra.mxu0 0.0
      %2132 = vmatpush.msra.mxu0 0.0
      %2133 = vmatpush.msra.mxu0 0.0
      %2134 = vmatpush.msra.mxu0 0.0
      %2135 = vmatpush.msra.mxu0 0.0
      %2136 = vmatpush.msra.mxu0 0.0
      %2137 = vmatpush.msra.mxu0 0.0
      %2138 = vmatpush.msra.mxu0 0.0
      %2139 = vmatpush.msra.mxu0 %v2110
      %2140 = vmatpush.msra.mxu0 %v2109
      %2141 = vmatpush.msra.mxu0 %v2108
      %2142 = vmatpush.msra.mxu0 %v2107
      %2143 = vmatmul.f32.gmra.mxu0 %v2116
      %v2144 = vpop.f32.mrf.mxu0
      %v2145 = vadd.f32 %v2113, %v2144
      %2146 = vmatmul.f32.gmra.mxu0 %v2119
      %v2147 = vpop.f32.mrf.mxu0
      %v2148 = vadd.f32 %v2113, %v2147
      %2149 = vmatmul.f32.gmra.mxu0 %v2122
      %v2150 = vpop.f32.mrf.mxu0
      %v2151 = vadd.f32 %v2113, %v2150
      %2152 = vmatmul.f32.gmra.mxu0 %v2125
      %v2153 = vpop.f32.mrf.mxu0
      %v2154 = vadd.f32 %v2113, %v2153
      %2155 = vdwg.mxu0
      %v2156 = vadd.f32 %v1139, %v2145
      %v2157 = vadd.f32 %v1140, %v2148
      %v2158 = vadd.f32 %v1141, %v2151
      %v2159 = vadd.f32 %v1142, %v2154
      %v2160 = vld [vmem:[%s13] sm:$0x1]
      %v2161 = vld [vmem:[%s14] sm:$0x1]
      %v2162 = vsel %vm1151, %v2156, 0.0
      %2163 = vadd.xlane.f32.xlu0 %v2162
      %v2164 = vpop.xlane.xlu0 %2163
      %v2165 = vsel %vm1151, %v2157, 0.0
      %2166 = vadd.xlane.f32.xlu0 %v2165
      %v2167 = vpop.xlane.xlu0 %2166
      %v2168 = vsel %vm1151, %v2158, 0.0
      %2169 = vadd.xlane.f32.xlu0 %v2168
      %v2170 = vpop.xlane.xlu0 %2169
      %v2171 = vsel %vm1151, %v2159, 0.0
      %2172 = vadd.xlane.f32.xlu0 %v2171
      %v2173 = vpop.xlane.xlu0 %2172
      %v2174 = vrcp.pop 32.0
      %v2175 = vmul.f32 32.0, %v2174
      %v2176 = vsub.f32 1.0, %v2175
      %v2177 = vmul.f32 %v2174, %v2176
      %v2178 = vadd.f32 %v2174, %v2177
      %vm2179 = vweird.f32 %v2174
      %v2180 = vsel %vm2179, %v2174, %v2178
      %v2181 = vmul.f32 %v2164, %v2180
      %v2182 = vmul.f32 %v2167, %v2180
      %v2183 = vmul.f32 %v2170, %v2180
      %v2184 = vmul.f32 %v2173, %v2180
      %v2185 = vmul.f32 %v2156, %v2156
      %v2186 = vmul.f32 %v2157, %v2157
      %v2187 = vmul.f32 %v2158, %v2158
      %v2188 = vmul.f32 %v2159, %v2159
      %v2189 = vsel %vm1151, %v2185, 0.0
      %2190 = vadd.xlane.f32.xlu0 %v2189
      %v2191 = vpop.xlane.xlu0 %2190
      %v2192 = vsel %vm1151, %v2186, 0.0
      %2193 = vadd.xlane.f32.xlu0 %v2192
      %v2194 = vpop.xlane.xlu0 %2193
      %v2195 = vsel %vm1151, %v2187, 0.0
      %2196 = vadd.xlane.f32.xlu0 %v2195
      %v2197 = vpop.xlane.xlu0 %2196
      %v2198 = vsel %vm1151, %v2188, 0.0
      %2199 = vadd.xlane.f32.xlu0 %v2198
      %v2200 = vpop.xlane.xlu0 %2199
      %v2201 = vmul.f32 %v2191, %v2180
      %v2202 = vmul.f32 %v2194, %v2180
      %v2203 = vmul.f32 %v2197, %v2180
      %v2204 = vmul.f32 %v2200, %v2180
      %v2205 = vmul.f32 %v2181, %v2181
      %v2206 = vmul.f32 %v2182, %v2182
      %v2207 = vmul.f32 %v2183, %v2183
      %v2208 = vmul.f32 %v2184, %v2184
      %v2209 = vsub.f32 %v2201, %v2205
      %v2210 = vsub.f32 %v2202, %v2206
      %v2211 = vsub.f32 %v2203, %v2207
      %v2212 = vsub.f32 %v2204, %v2208
      %v2213 = vsub.f32 %v2156, %v2181
      %v2214 = vsub.f32 %v2157, %v2182
      %v2215 = vsub.f32 %v2158, %v2183
      %v2216 = vsub.f32 %v2159, %v2184
      %v2217 = vadd.f32 %v2209, 1e-05
      %v2218 = vadd.f32 %v2210, 1e-05
      %v2219 = vadd.f32 %v2211, 1e-05
      %v2220 = vadd.f32 %v2212, 1e-05
      %v2221 = vrsqrt.pop %v2217
      %v2222 = vmul.f32 %v2221, %v2217
      %v2223 = vmul.f32 %v2222, %v2221
      %v2224 = vmul.f32 0.5, %v2223
      %v2225 = vsub.f32 1.5, %v2224
      %v2226 = vmul.f32 %v2221, %v2225
      %vm2227 = vweird.f32 %v2217
      %vm2228 = vweird.f32 %v2221
      %vm2229 = vmor %vm2227, %vm2228
      %v2230 = vsel %vm2229, %v2221, %v2226
      %v2231 = vrsqrt.pop %v2218
      %v2232 = vmul.f32 %v2231, %v2218
      %v2233 = vmul.f32 %v2232, %v2231
      %v2234 = vmul.f32 0.5, %v2233
      %v2235 = vsub.f32 1.5, %v2234
      %v2236 = vmul.f32 %v2231, %v2235
      %vm2237 = vweird.f32 %v2218
      %vm2238 = vweird.f32 %v2231
      %vm2239 = vmor %vm2237, %vm2238
      %v2240 = vsel %vm2239, %v2231, %v2236
      %v2241 = vrsqrt.pop %v2219
      %v2242 = vmul.f32 %v2241, %v2219
      %v2243 = vmul.f32 %v2242, %v2241
      %v2244 = vmul.f32 0.5, %v2243
      %v2245 = vsub.f32 1.5, %v2244
      %v2246 = vmul.f32 %v2241, %v2245
      %vm2247 = vweird.f32 %v2219
      %vm2248 = vweird.f32 %v2241
      %vm2249 = vmor %vm2247, %vm2248
      %v2250 = vsel %vm2249, %v2241, %v2246
      %v2251 = vrsqrt.pop %v2220
      %v2252 = vmul.f32 %v2251, %v2220
      %v2253 = vmul.f32 %v2252, %v2251
      %v2254 = vmul.f32 0.5, %v2253
      %v2255 = vsub.f32 1.5, %v2254
      %v2256 = vmul.f32 %v2251, %v2255
      %vm2257 = vweird.f32 %v2220
      %vm2258 = vweird.f32 %v2251
      %vm2259 = vmor %vm2257, %vm2258
      %v2260 = vsel %vm2259, %v2251, %v2256
      %v2261 = vmul.f32 %v2213, %v2230
      %v2262 = vmul.f32 %v2214, %v2240
      %v2263 = vmul.f32 %v2215, %v2250
      %v2264 = vmul.f32 %v2216, %v2260
      %v2266 = vperm.slane %v2160, 0
      %v2268 = vmul.f32 %v2261, %v2266
      %v2269 = vmul.f32 %v2262, %v2266
      %v2270 = vmul.f32 %v2263, %v2266
      %v2271 = vmul.f32 %v2264, %v2266
      %v2273 = vperm.slane %v2161, 0
      %v2275 = vadd.f32 %v2268, %v2273
      %v2276 = vadd.f32 %v2269, %v2273
      %v2277 = vadd.f32 %v2270, %v2273
      %v2278 = vadd.f32 %v2271, %v2273
      %v2279 = vld [vmem:[%s15] sm:$0xff]
      %v2280 = vld [vmem:[%s15 + $0x8] sm:$0xff]
      %v2281 = vld [vmem:[%s15 + $0x10] sm:$0xff]
      %v2282 = vld [vmem:[%s15 + $0x18] sm:$0xff]
      %v2283 = vld [vmem:[%s16] sm:$0x1]
      %v2285 = vperm.slane %v2283, 0
      %v2288 = vsel %vm1151, %v2275, 0
      %v2291 = vsel %vm1151, %v2276, 0
      %v2294 = vsel %vm1151, %v2277, 0
      %v2297 = vsel %vm1151, %v2278, 0
      %2299 = vmatpush.msra.mxu0 0.0
      %2300 = vmatpush.msra.mxu0 0.0
      %2301 = vmatpush.msra.mxu0 0.0
      %2302 = vmatpush.msra.mxu0 0.0
      %2303 = vmatpush.msra.mxu0 0.0
      %2304 = vmatpush.msra.mxu0 0.0
      %2305 = vmatpush.msra.mxu0 0.0
      %2306 = vmatpush.msra.mxu0 0.0
      %2307 = vmatpush.msra.mxu0 0.0
      %2308 = vmatpush.msra.mxu0 0.0
      %2309 = vmatpush.msra.mxu0 0.0
      %2310 = vmatpush.msra.mxu0 0.0
      %2311 = vmatpush.msra.mxu0 %v2282
      %2312 = vmatpush.msra.mxu0 %v2281
      %2313 = vmatpush.msra.mxu0 %v2280
      %2314 = vmatpush.msra.mxu0 %v2279
      %2315 = vmatmul.f32.gmra.mxu0 %v2288
      %v2316 = vpop.f32.mrf.mxu0
      %v2317 = vadd.f32 %v2285, %v2316
      %2318 = vmatmul.f32.gmra.mxu0 %v2291
      %v2319 = vpop.f32.mrf.mxu0
      %v2320 = vadd.f32 %v2285, %v2319
      %2321 = vmatmul.f32.gmra.mxu0 %v2294
      %v2322 = vpop.f32.mrf.mxu0
      %v2323 = vadd.f32 %v2285, %v2322
      %2324 = vmatmul.f32.gmra.mxu0 %v2297
      %v2325 = vpop.f32.mrf.mxu0
      %v2326 = vadd.f32 %v2285, %v2325
      %2327 = vdwg.mxu0
      %v2328 = vmax.f32 %v2317, 0.0
      %v2329 = vmax.f32 %v2320, 0.0
      %v2330 = vmax.f32 %v2323, 0.0
      %v2331 = vmax.f32 %v2326, 0.0
      %v2332 = vld [vmem:[%s17] sm:$0xff]
      %v2333 = vld [vmem:[%s17 + $0x8] sm:$0xff]
      %v2334 = vld [vmem:[%s17 + $0x10] sm:$0xff]
      %v2335 = vld [vmem:[%s17 + $0x18] sm:$0xff]
      %v2336 = vld [vmem:[%s17 + $0x20] sm:$0xff]
      %v2337 = vld [vmem:[%s17 + $0x28] sm:$0xff]
      %v2338 = vld [vmem:[%s17 + $0x30] sm:$0xff]
      %v2339 = vld [vmem:[%s17 + $0x38] sm:$0xff]
      %v2340 = vld [vmem:[%s17 + $0x40] sm:$0xff]
      %v2341 = vld [vmem:[%s17 + $0x48] sm:$0xff]
      %v2342 = vld [vmem:[%s17 + $0x50] sm:$0xff]
      %v2343 = vld [vmem:[%s17 + $0x58] sm:$0xff]
      %v2344 = vld [vmem:[%s17 + $0x60] sm:$0xff]
      %v2345 = vld [vmem:[%s17 + $0x68] sm:$0xff]
      %v2346 = vld [vmem:[%s17 + $0x70] sm:$0xff]
      %v2347 = vld [vmem:[%s17 + $0x78] sm:$0xff]
      %v2348 = vld [vmem:[%s18] sm:$0x1]
      %v2350 = vperm.slane %v2348, 0
      %2352 = vmatpush.msra.mxu0 %v2347
      %2353 = vmatpush.msra.mxu0 %v2346
      %2354 = vmatpush.msra.mxu0 %v2345
      %2355 = vmatpush.msra.mxu0 %v2344
      %2356 = vmatpush.msra.mxu0 %v2343
      %2357 = vmatpush.msra.mxu0 %v2342
      %2358 = vmatpush.msra.mxu0 %v2341
      %2359 = vmatpush.msra.mxu0 %v2340
      %2360 = vmatpush.msra.mxu0 %v2339
      %2361 = vmatpush.msra.mxu0 %v2338
      %2362 = vmatpush.msra.mxu0 %v2337
      %2363 = vmatpush.msra.mxu0 %v2336
      %2364 = vmatpush.msra.mxu0 %v2335
      %2365 = vmatpush.msra.mxu0 %v2334
      %2366 = vmatpush.msra.mxu0 %v2333
      %2367 = vmatpush.msra.mxu0 %v2332
      %2368 = vmatmul.f32.gmra.mxu0 %v2328
      %v2369 = vpop.f32.mrf.mxu0
      %v2370 = vadd.f32 %v2350, %v2369
      %2371 = vmatmul.f32.gmra.mxu0 %v2329
      %v2372 = vpop.f32.mrf.mxu0
      %v2373 = vadd.f32 %v2350, %v2372
      %2374 = vmatmul.f32.gmra.mxu0 %v2330
      %v2375 = vpop.f32.mrf.mxu0
      %v2376 = vadd.f32 %v2350, %v2375
      %2377 = vmatmul.f32.gmra.mxu0 %v2331
      %v2378 = vpop.f32.mrf.mxu0
      %v2379 = vadd.f32 %v2350, %v2378
      %2380 = vdwg.mxu0
      %v2381 = vadd.f32 %v2275, %v2370
      %v2382 = vadd.f32 %v2276, %v2373
      %v2383 = vadd.f32 %v2277, %v2376
      %v2384 = vadd.f32 %v2278, %v2379
      %v2385 = vld [vmem:[%s19] sm:$0x1]
      %v2386 = vld [vmem:[%s20] sm:$0x1]
      %v2387 = vsel %vm1151, %v2381, 0.0
      %2388 = vadd.xlane.f32.xlu0 %v2387
      %v2389 = vpop.xlane.xlu0 %2388
      %v2390 = vsel %vm1151, %v2382, 0.0
      %2391 = vadd.xlane.f32.xlu0 %v2390
      %v2392 = vpop.xlane.xlu0 %2391
      %v2393 = vsel %vm1151, %v2383, 0.0
      %2394 = vadd.xlane.f32.xlu0 %v2393
      %v2395 = vpop.xlane.xlu0 %2394
      %v2396 = vsel %vm1151, %v2384, 0.0
      %2397 = vadd.xlane.f32.xlu0 %v2396
      %v2398 = vpop.xlane.xlu0 %2397
      %v2399 = vmul.f32 %v2389, %v2180
      %v2400 = vmul.f32 %v2392, %v2180
      %v2401 = vmul.f32 %v2395, %v2180
      %v2402 = vmul.f32 %v2398, %v2180
      %v2403 = vmul.f32 %v2381, %v2381
      %v2404 = vmul.f32 %v2382, %v2382
      %v2405 = vmul.f32 %v2383, %v2383
      %v2406 = vmul.f32 %v2384, %v2384
      %v2407 = vsel %vm1151, %v2403, 0.0
      %2408 = vadd.xlane.f32.xlu0 %v2407
      %v2409 = vpop.xlane.xlu0 %2408
      %v2410 = vsel %vm1151, %v2404, 0.0
      %2411 = vadd.xlane.f32.xlu0 %v2410
      %v2412 = vpop.xlane.xlu0 %2411
      %v2413 = vsel %vm1151, %v2405, 0.0
      %2414 = vadd.xlane.f32.xlu0 %v2413
      %v2415 = vpop.xlane.xlu0 %2414
      %v2416 = vsel %vm1151, %v2406, 0.0
      %2417 = vadd.xlane.f32.xlu0 %v2416
      %v2418 = vpop.xlane.xlu0 %2417
      %v2419 = vmul.f32 %v2409, %v2180
      %v2420 = vmul.f32 %v2412, %v2180
      %v2421 = vmul.f32 %v2415, %v2180
      %v2422 = vmul.f32 %v2418, %v2180
      %v2423 = vmul.f32 %v2399, %v2399
      %v2424 = vmul.f32 %v2400, %v2400
      %v2425 = vmul.f32 %v2401, %v2401
      %v2426 = vmul.f32 %v2402, %v2402
      %v2427 = vsub.f32 %v2419, %v2423
      %v2428 = vsub.f32 %v2420, %v2424
      %v2429 = vsub.f32 %v2421, %v2425
      %v2430 = vsub.f32 %v2422, %v2426
      %v2431 = vsub.f32 %v2381, %v2399
      %v2432 = vsub.f32 %v2382, %v2400
      %v2433 = vsub.f32 %v2383, %v2401
      %v2434 = vsub.f32 %v2384, %v2402
      %v2435 = vadd.f32 %v2427, 1e-05
      %v2436 = vadd.f32 %v2428, 1e-05
      %v2437 = vadd.f32 %v2429, 1e-05
      %v2438 = vadd.f32 %v2430, 1e-05
      %v2439 = vrsqrt.pop %v2435
      %v2440 = vmul.f32 %v2439, %v2435
      %v2441 = vmul.f32 %v2440, %v2439
      %v2442 = vmul.f32 0.5, %v2441
      %v2443 = vsub.f32 1.5, %v2442
      %v2444 = vmul.f32 %v2439, %v2443
      %vm2445 = vweird.f32 %v2435
      %vm2446 = vweird.f32 %v2439
      %vm2447 = vmor %vm2445, %vm2446
      %v2448 = vsel %vm2447, %v2439, %v2444
      %v2449 = vrsqrt.pop %v2436
      %v2450 = vmul.f32 %v2449, %v2436
      %v2451 = vmul.f32 %v2450, %v2449
      %v2452 = vmul.f32 0.5, %v2451
      %v2453 = vsub.f32 1.5, %v2452
      %v2454 = vmul.f32 %v2449, %v2453
      %vm2455 = vweird.f32 %v2436
      %vm2456 = vweird.f32 %v2449
      %vm2457 = vmor %vm2455, %vm2456
      %v2458 = vsel %vm2457, %v2449, %v2454
      %v2459 = vrsqrt.pop %v2437
      %v2460 = vmul.f32 %v2459, %v2437
      %v2461 = vmul.f32 %v2460, %v2459
      %v2462 = vmul.f32 0.5, %v2461
      %v2463 = vsub.f32 1.5, %v2462
      %v2464 = vmul.f32 %v2459, %v2463
      %vm2465 = vweird.f32 %v2437
      %vm2466 = vweird.f32 %v2459
      %vm2467 = vmor %vm2465, %vm2466
      %v2468 = vsel %vm2467, %v2459, %v2464
      %v2469 = vrsqrt.pop %v2438
      %v2470 = vmul.f32 %v2469, %v2438
      %v2471 = vmul.f32 %v2470, %v2469
      %v2472 = vmul.f32 0.5, %v2471
      %v2473 = vsub.f32 1.5, %v2472
      %v2474 = vmul.f32 %v2469, %v2473
      %vm2475 = vweird.f32 %v2438
      %vm2476 = vweird.f32 %v2469
      %vm2477 = vmor %vm2475, %vm2476
      %v2478 = vsel %vm2477, %v2469, %v2474
      %v2479 = vmul.f32 %v2431, %v2448
      %v2480 = vmul.f32 %v2432, %v2458
      %v2481 = vmul.f32 %v2433, %v2468
      %v2482 = vmul.f32 %v2434, %v2478
      %v2484 = vperm.slane %v2385, 0
      %v2486 = vmul.f32 %v2479, %v2484
      %v2487 = vmul.f32 %v2480, %v2484
      %v2488 = vmul.f32 %v2481, %v2484
      %v2489 = vmul.f32 %v2482, %v2484
      %v2491 = vperm.slane %v2386, 0
      %v2493 = vadd.f32 %v2486, %v2491
      %v2494 = vadd.f32 %v2487, %v2491
      %v2495 = vadd.f32 %v2488, %v2491
      %v2496 = vadd.f32 %v2489, %v2491
      %s2497 = scalar_lea.vmem %s9, 32
      %v2498 = vld [vmem:[%s2497] sm:$0xff]
      %v2499 = vld [vmem:[%s2497 + $0x8] sm:$0xff]
      %v2500 = vld [vmem:[%s2497 + $0x10] sm:$0xff]
      %v2501 = vld [vmem:[%s2497 + $0x18] sm:$0xff]
      %s2502 = scalar_lea.vmem %s10, 1
      %v2503 = vld [vmem:[%s2502] sm:$0x1]
      %v2505 = vperm.slane %v2503, 0
      %v2508 = vsel %vm1151, %v2493, 0
      %v2511 = vsel %vm1151, %v2494, 0
      %v2514 = vsel %vm1151, %v2495, 0
      %v2517 = vsel %vm1151, %v2496, 0
      %2519 = vmatpush.msra.mxu0 0.0
      %2520 = vmatpush.msra.mxu0 0.0
      %2521 = vmatpush.msra.mxu0 0.0
      %2522 = vmatpush.msra.mxu0 0.0
      %2523 = vmatpush.msra.mxu0 0.0
      %2524 = vmatpush.msra.mxu0 0.0
      %2525 = vmatpush.msra.mxu0 0.0
      %2526 = vmatpush.msra.mxu0 0.0
      %2527 = vmatpush.msra.mxu0 0.0
      %2528 = vmatpush.msra.mxu0 0.0
      %2529 = vmatpush.msra.mxu0 0.0
      %2530 = vmatpush.msra.mxu0 0.0
      %2531 = vmatpush.msra.mxu0 %v2501
      %2532 = vmatpush.msra.mxu0 %v2500
      %2533 = vmatpush.msra.mxu0 %v2499
      %2534 = vmatpush.msra.mxu0 %v2498
      %2535 = vmatmul.f32.gmra.mxu0 %v2508
      %v2536 = vpop.f32.mrf.mxu0
      %v2537 = vadd.f32 %v2505, %v2536
      %2538 = vmatmul.f32.gmra.mxu0 %v2511
      %v2539 = vpop.f32.mrf.mxu0
      %v2540 = vadd.f32 %v2505, %v2539
      %2541 = vmatmul.f32.gmra.mxu0 %v2514
      %v2542 = vpop.f32.mrf.mxu0
      %v2543 = vadd.f32 %v2505, %v2542
      %2544 = vmatmul.f32.gmra.mxu0 %v2517
      %v2545 = vpop.f32.mrf.mxu0
      %v2546 = vadd.f32 %v2505, %v2545
      %2547 = vdwg.mxu0
      %2552 = vrot.lane.b32.xlu0 %v2537, 96
      %v2553 = vpop.permute.xlu0 %2552
      %2554 = vrot.lane.b32.xlu0 %v2540, 96
      %v2555 = vpop.permute.xlu0 %2554
      %2556 = vrot.lane.b32.xlu0 %v2543, 96
      %v2557 = vpop.permute.xlu0 %2556
      %2558 = vrot.lane.b32.xlu0 %v2546, 96
      %v2559 = vpop.permute.xlu0 %2558
      %v2560 = vsel %vm1205, %v2537, 0
      %v2562 = vsel %vm1205, %v2540, 0
      %v2564 = vsel %vm1205, %v2543, 0
      %v2566 = vsel %vm1205, %v2546, 0
      %v2568 = vsel %vm1205, %v2553, 0
      %v2570 = vsel %vm1205, %v2555, 0
      %v2572 = vsel %vm1205, %v2557, 0
      %v2574 = vsel %vm1205, %v2559, 0
      %2576 = vmatpush.xpose.msra.mxu0 0.0
      %2577 = vmatpush.xpose.msra.mxu0 0.0
      %2578 = vmatpush.xpose.msra.mxu0 0.0
      %2579 = vmatpush.xpose.msra.mxu0 0.0
      %2580 = vmatpush.xpose.msra.mxu0 0.0
      %2581 = vmatpush.xpose.msra.mxu0 0.0
      %2582 = vmatpush.xpose.msra.mxu0 0.0
      %2583 = vmatpush.xpose.msra.mxu0 0.0
      %2584 = vmatpush.xpose.msra.mxu0 0.0
      %2585 = vmatpush.xpose.msra.mxu0 0.0
      %2586 = vmatpush.xpose.msra.mxu0 0.0
      %2587 = vmatpush.xpose.msra.mxu0 0.0
      %2588 = vmatpush.xpose.msra.mxu0 %v2574
      %2589 = vmatpush.xpose.msra.mxu0 %v2572
      %2590 = vmatpush.xpose.msra.mxu0 %v2570
      %2591 = vmatpush.xpose.msra.mxu0 %v2568
      %2592 = vmatmul.f32.gmra.mxu0 %v2560
      %v2593 = vpop.f32.mrf.mxu0
      %v2594 = vadd.f32 0.0, %v2593
      %2595 = vmatmul.f32.gmra.mxu0 %v2562
      %v2596 = vpop.f32.mrf.mxu0
      %v2597 = vadd.f32 0.0, %v2596
      %2598 = vmatmul.f32.gmra.mxu0 %v2564
      %v2599 = vpop.f32.mrf.mxu0
      %v2600 = vadd.f32 0.0, %v2599
      %2601 = vmatmul.f32.gmra.mxu0 %v2566
      %v2602 = vpop.f32.mrf.mxu0
      %v2603 = vadd.f32 0.0, %v2602
      %2604 = vdwg.mxu0
      %v2605 = vmul.f32 %v2594, 0.35355338
      %v2606 = vmul.f32 %v2597, 0.35355338
      %v2607 = vmul.f32 %v2600, 0.35355338
      %v2608 = vmul.f32 %v2603, 0.35355338
      %v2609 = vsel %vm1151, %v2605, -inf
      %2610 = vmax.xlane.f32.xlu0 %v2609
      %v2611 = vpop.xlane.xlu0 %2610
      %v2612 = vsel %vm1151, %v2606, -inf
      %2613 = vmax.xlane.f32.xlu0 %v2612
      %v2614 = vpop.xlane.xlu0 %2613
      %v2615 = vsel %vm1151, %v2607, -inf
      %2616 = vmax.xlane.f32.xlu0 %v2615
      %v2617 = vpop.xlane.xlu0 %2616
      %v2618 = vsel %vm1151, %v2608, -inf
      %2619 = vmax.xlane.f32.xlu0 %v2618
      %v2620 = vpop.xlane.xlu0 %2619
      %v2621 = vsub.f32 %v2605, %v2611
      %v2622 = vsub.f32 %v2606, %v2614
      %v2623 = vsub.f32 %v2607, %v2617
      %v2624 = vsub.f32 %v2608, %v2620
      %v2625 = vmul.f32 %v2621, 1.442695
      %v2626 = vpow.pop %v2625
      %v2627 = vmul.f32 %v2622, 1.442695
      %v2628 = vpow.pop %v2627
      %v2629 = vmul.f32 %v2623, 1.442695
      %v2630 = vpow.pop %v2629
      %v2631 = vmul.f32 %v2624, 1.442695
      %v2632 = vpow.pop %v2631
      %v2633 = vsel %vm1151, %v2626, 0.0
      %2634 = vadd.xlane.f32.xlu0 %v2633
      %v2635 = vpop.xlane.xlu0 %2634
      %v2636 = vsel %vm1151, %v2628, 0.0
      %2637 = vadd.xlane.f32.xlu0 %v2636
      %v2638 = vpop.xlane.xlu0 %2637
      %v2639 = vsel %vm1151, %v2630, 0.0
      %2640 = vadd.xlane.f32.xlu0 %v2639
      %v2641 = vpop.xlane.xlu0 %2640
      %v2642 = vsel %vm1151, %v2632, 0.0
      %2643 = vadd.xlane.f32.xlu0 %v2642
      %v2644 = vpop.xlane.xlu0 %2643
      %v2645 = vrcp.pop %v2635
      %v2646 = vmul.f32 %v2635, %v2645
      %v2647 = vsub.f32 1.0, %v2646
      %v2648 = vmul.f32 %v2645, %v2647
      %v2649 = vadd.f32 %v2645, %v2648
      %vm2650 = vweird.f32 %v2635
      %vm2651 = vweird.f32 %v2645
      %vm2652 = vmor %vm2650, %vm2651
      %v2653 = vsel %vm2652, %v2645, %v2649
      %v2654 = vand.u32 2147483647, %v2635
      %vm2655 = vcmp.eq.f32.partialorder %v2654, 8.507059e+37
      %v2656 = vand.u32 %v2635, 2147483648
      %v2657 = vor.u32 1.1754944e-38, %v2656
      %v2658 = vsel %vm2655, %v2657, %v2653
      %v2659 = vmul.f32 %v2626, %v2658
      %v2660 = vrcp.pop %v2638
      %v2661 = vmul.f32 %v2638, %v2660
      %v2662 = vsub.f32 1.0, %v2661
      %v2663 = vmul.f32 %v2660, %v2662
      %v2664 = vadd.f32 %v2660, %v2663
      %vm2665 = vweird.f32 %v2638
      %vm2666 = vweird.f32 %v2660
      %vm2667 = vmor %vm2665, %vm2666
      %v2668 = vsel %vm2667, %v2660, %v2664
      %v2669 = vand.u32 2147483647, %v2638
      %vm2670 = vcmp.eq.f32.partialorder %v2669, 8.507059e+37
      %v2671 = vand.u32 %v2638, 2147483648
      %v2672 = vor.u32 1.1754944e-38, %v2671
      %v2673 = vsel %vm2670, %v2672, %v2668
      %v2674 = vmul.f32 %v2628, %v2673
      %v2675 = vrcp.pop %v2641
      %v2676 = vmul.f32 %v2641, %v2675
      %v2677 = vsub.f32 1.0, %v2676
      %v2678 = vmul.f32 %v2675, %v2677
      %v2679 = vadd.f32 %v2675, %v2678
      %vm2680 = vweird.f32 %v2641
      %vm2681 = vweird.f32 %v2675
      %vm2682 = vmor %vm2680, %vm2681
      %v2683 = vsel %vm2682, %v2675, %v2679
      %v2684 = vand.u32 2147483647, %v2641
      %vm2685 = vcmp.eq.f32.partialorder %v2684, 8.507059e+37
      %v2686 = vand.u32 %v2641, 2147483648
      %v2687 = vor.u32 1.1754944e-38, %v2686
      %v2688 = vsel %vm2685, %v2687, %v2683
      %v2689 = vmul.f32 %v2630, %v2688
      %v2690 = vrcp.pop %v2644
      %v2691 = vmul.f32 %v2644, %v2690
      %v2692 = vsub.f32 1.0, %v2691
      %v2693 = vmul.f32 %v2690, %v2692
      %v2694 = vadd.f32 %v2690, %v2693
      %vm2695 = vweird.f32 %v2644
      %vm2696 = vweird.f32 %v2690
      %vm2697 = vmor %vm2695, %vm2696
      %v2698 = vsel %vm2697, %v2690, %v2694
      %v2699 = vand.u32 2147483647, %v2644
      %vm2700 = vcmp.eq.f32.partialorder %v2699, 8.507059e+37
      %v2701 = vand.u32 %v2644, 2147483648
      %v2702 = vor.u32 1.1754944e-38, %v2701
      %v2703 = vsel %vm2700, %v2702, %v2698
      %v2704 = vmul.f32 %v2632, %v2703
      %2705 = vrot.lane.b32.xlu0 %v2537, 64
      %v2706 = vpop.permute.xlu0 %2705
      %2707 = vrot.lane.b32.xlu0 %v2540, 64
      %v2708 = vpop.permute.xlu0 %2707
      %2709 = vrot.lane.b32.xlu0 %v2543, 64
      %v2710 = vpop.permute.xlu0 %2709
      %2711 = vrot.lane.b32.xlu0 %v2546, 64
      %v2712 = vpop.permute.xlu0 %2711
      %v2718 = vsel %vm1151, %v2659, 0
      %v2721 = vsel %vm1151, %v2674, 0
      %v2724 = vsel %vm1151, %v2689, 0
      %v2727 = vsel %vm1151, %v2704, 0
      %2729 = vmatpush.msra.mxu0 0.0
      %2730 = vmatpush.msra.mxu0 0.0
      %2731 = vmatpush.msra.mxu0 0.0
      %2732 = vmatpush.msra.mxu0 0.0
      %2733 = vmatpush.msra.mxu0 0.0
      %2734 = vmatpush.msra.mxu0 0.0
      %2735 = vmatpush.msra.mxu0 0.0
      %2736 = vmatpush.msra.mxu0 0.0
      %2737 = vmatpush.msra.mxu0 0.0
      %2738 = vmatpush.msra.mxu0 0.0
      %2739 = vmatpush.msra.mxu0 0.0
      %2740 = vmatpush.msra.mxu0 0.0
      %2741 = vmatpush.msra.mxu0 %v2712
      %2742 = vmatpush.msra.mxu0 %v2710
      %2743 = vmatpush.msra.mxu0 %v2708
      %2744 = vmatpush.msra.mxu0 %v2706
      %2745 = vmatmul.f32.gmra.mxu0 %v2718
      %v2746 = vpop.f32.mrf.mxu0
      %v2747 = vadd.f32 0.0, %v2746
      %2748 = vmatmul.f32.gmra.mxu0 %v2721
      %v2749 = vpop.f32.mrf.mxu0
      %v2750 = vadd.f32 0.0, %v2749
      %2751 = vmatmul.f32.gmra.mxu0 %v2724
      %v2752 = vpop.f32.mrf.mxu0
      %v2753 = vadd.f32 0.0, %v2752
      %2754 = vmatmul.f32.gmra.mxu0 %v2727
      %v2755 = vpop.f32.mrf.mxu0
      %v2756 = vadd.f32 0.0, %v2755
      %2757 = vdwg.mxu0
      %2758 = vrot.lane.b32.xlu0 %v2537, 120
      %v2759 = vpop.permute.xlu0 %2758
      %2760 = vrot.lane.b32.xlu0 %v2540, 120
      %v2761 = vpop.permute.xlu0 %2760
      %2762 = vrot.lane.b32.xlu0 %v2543, 120
      %v2763 = vpop.permute.xlu0 %2762
      %2764 = vrot.lane.b32.xlu0 %v2546, 120
      %v2765 = vpop.permute.xlu0 %2764
      %2766 = vrot.lane.b32.xlu0 %v2537, 88
      %v2767 = vpop.permute.xlu0 %2766
      %2768 = vrot.lane.b32.xlu0 %v2540, 88
      %v2769 = vpop.permute.xlu0 %2768
      %2770 = vrot.lane.b32.xlu0 %v2543, 88
      %v2771 = vpop.permute.xlu0 %2770
      %2772 = vrot.lane.b32.xlu0 %v2546, 88
      %v2773 = vpop.permute.xlu0 %2772
      %v2774 = vsel %vm1205, %v2759, 0
      %v2776 = vsel %vm1205, %v2761, 0
      %v2778 = vsel %vm1205, %v2763, 0
      %v2780 = vsel %vm1205, %v2765, 0
      %v2782 = vsel %vm1205, %v2767, 0
      %v2784 = vsel %vm1205, %v2769, 0
      %v2786 = vsel %vm1205, %v2771, 0
      %v2788 = vsel %vm1205, %v2773, 0
      %2790 = vmatpush.xpose.msra.mxu0 0.0
      %2791 = vmatpush.xpose.msra.mxu0 0.0
      %2792 = vmatpush.xpose.msra.mxu0 0.0
      %2793 = vmatpush.xpose.msra.mxu0 0.0
      %2794 = vmatpush.xpose.msra.mxu0 0.0
      %2795 = vmatpush.xpose.msra.mxu0 0.0
      %2796 = vmatpush.xpose.msra.mxu0 0.0
      %2797 = vmatpush.xpose.msra.mxu0 0.0
      %2798 = vmatpush.xpose.msra.mxu0 0.0
      %2799 = vmatpush.xpose.msra.mxu0 0.0
      %2800 = vmatpush.xpose.msra.mxu0 0.0
      %2801 = vmatpush.xpose.msra.mxu0 0.0
      %2802 = vmatpush.xpose.msra.mxu0 %v2788
      %2803 = vmatpush.xpose.msra.mxu0 %v2786
      %2804 = vmatpush.xpose.msra.mxu0 %v2784
      %2805 = vmatpush.xpose.msra.mxu0 %v2782
      %2806 = vmatmul.f32.gmra.mxu0 %v2774
      %v2807 = vpop.f32.mrf.mxu0
      %v2808 = vadd.f32 0.0, %v2807
      %2809 = vmatmul.f32.gmra.mxu0 %v2776
      %v2810 = vpop.f32.mrf.mxu0
      %v2811 = vadd.f32 0.0, %v2810
      %2812 = vmatmul.f32.gmra.mxu0 %v2778
      %v2813 = vpop.f32.mrf.mxu0
      %v2814 = vadd.f32 0.0, %v2813
      %2815 = vmatmul.f32.gmra.mxu0 %v2780
      %v2816 = vpop.f32.mrf.mxu0
      %v2817 = vadd.f32 0.0, %v2816
      %2818 = vdwg.mxu0
      %v2819 = vmul.f32 %v2808, 0.35355338
      %v2820 = vmul.f32 %v2811, 0.35355338
      %v2821 = vmul.f32 %v2814, 0.35355338
      %v2822 = vmul.f32 %v2817, 0.35355338
      %v2823 = vsel %vm1151, %v2819, -inf
      %2824 = vmax.xlane.f32.xlu0 %v2823
      %v2825 = vpop.xlane.xlu0 %2824
      %v2826 = vsel %vm1151, %v2820, -inf
      %2827 = vmax.xlane.f32.xlu0 %v2826
      %v2828 = vpop.xlane.xlu0 %2827
      %v2829 = vsel %vm1151, %v2821, -inf
      %2830 = vmax.xlane.f32.xlu0 %v2829
      %v2831 = vpop.xlane.xlu0 %2830
      %v2832 = vsel %vm1151, %v2822, -inf
      %2833 = vmax.xlane.f32.xlu0 %v2832
      %v2834 = vpop.xlane.xlu0 %2833
      %v2835 = vsub.f32 %v2819, %v2825
      %v2836 = vsub.f32 %v2820, %v2828
      %v2837 = vsub.f32 %v2821, %v2831
      %v2838 = vsub.f32 %v2822, %v2834
      %v2839 = vmul.f32 %v2835, 1.442695
      %v2840 = vpow.pop %v2839
      %v2841 = vmul.f32 %v2836, 1.442695
      %v2842 = vpow.pop %v2841
      %v2843 = vmul.f32 %v2837, 1.442695
      %v2844 = vpow.pop %v2843
      %v2845 = vmul.f32 %v2838, 1.442695
      %v2846 = vpow.pop %v2845
      %v2847 = vsel %vm1151, %v2840, 0.0
      %2848 = vadd.xlane.f32.xlu0 %v2847
      %v2849 = vpop.xlane.xlu0 %2848
      %v2850 = vsel %vm1151, %v2842, 0.0
      %2851 = vadd.xlane.f32.xlu0 %v2850
      %v2852 = vpop.xlane.xlu0 %2851
      %v2853 = vsel %vm1151, %v2844, 0.0
      %2854 = vadd.xlane.f32.xlu0 %v2853
      %v2855 = vpop.xlane.xlu0 %2854
      %v2856 = vsel %vm1151, %v2846, 0.0
      %2857 = vadd.xlane.f32.xlu0 %v2856
      %v2858 = vpop.xlane.xlu0 %2857
      %v2859 = vrcp.pop %v2849
      %v2860 = vmul.f32 %v2849, %v2859
      %v2861 = vsub.f32 1.0, %v2860
      %v2862 = vmul.f32 %v2859, %v2861
      %v2863 = vadd.f32 %v2859, %v2862
      %vm2864 = vweird.f32 %v2849
      %vm2865 = vweird.f32 %v2859
      %vm2866 = vmor %vm2864, %vm2865
      %v2867 = vsel %vm2866, %v2859, %v2863
      %v2868 = vand.u32 2147483647, %v2849
      %vm2869 = vcmp.eq.f32.partialorder %v2868, 8.507059e+37
      %v2870 = vand.u32 %v2849, 2147483648
      %v2871 = vor.u32 1.1754944e-38, %v2870
      %v2872 = vsel %vm2869, %v2871, %v2867
      %v2873 = vmul.f32 %v2840, %v2872
      %v2874 = vrcp.pop %v2852
      %v2875 = vmul.f32 %v2852, %v2874
      %v2876 = vsub.f32 1.0, %v2875
      %v2877 = vmul.f32 %v2874, %v2876
      %v2878 = vadd.f32 %v2874, %v2877
      %vm2879 = vweird.f32 %v2852
      %vm2880 = vweird.f32 %v2874
      %vm2881 = vmor %vm2879, %vm2880
      %v2882 = vsel %vm2881, %v2874, %v2878
      %v2883 = vand.u32 2147483647, %v2852
      %vm2884 = vcmp.eq.f32.partialorder %v2883, 8.507059e+37
      %v2885 = vand.u32 %v2852, 2147483648
      %v2886 = vor.u32 1.1754944e-38, %v2885
      %v2887 = vsel %vm2884, %v2886, %v2882
      %v2888 = vmul.f32 %v2842, %v2887
      %v2889 = vrcp.pop %v2855
      %v2890 = vmul.f32 %v2855, %v2889
      %v2891 = vsub.f32 1.0, %v2890
      %v2892 = vmul.f32 %v2889, %v2891
      %v2893 = vadd.f32 %v2889, %v2892
      %vm2894 = vweird.f32 %v2855
      %vm2895 = vweird.f32 %v2889
      %vm2896 = vmor %vm2894, %vm2895
      %v2897 = vsel %vm2896, %v2889, %v2893
      %v2898 = vand.u32 2147483647, %v2855
      %vm2899 = vcmp.eq.f32.partialorder %v2898, 8.507059e+37
      %v2900 = vand.u32 %v2855, 2147483648
      %v2901 = vor.u32 1.1754944e-38, %v2900
      %v2902 = vsel %vm2899, %v2901, %v2897
      %v2903 = vmul.f32 %v2844, %v2902
      %v2904 = vrcp.pop %v2858
      %v2905 = vmul.f32 %v2858, %v2904
      %v2906 = vsub.f32 1.0, %v2905
      %v2907 = vmul.f32 %v2904, %v2906
      %v2908 = vadd.f32 %v2904, %v2907
      %vm2909 = vweird.f32 %v2858
      %vm2910 = vweird.f32 %v2904
      %vm2911 = vmor %vm2909, %vm2910
      %v2912 = vsel %vm2911, %v2904, %v2908
      %v2913 = vand.u32 2147483647, %v2858
      %vm2914 = vcmp.eq.f32.partialorder %v2913, 8.507059e+37
      %v2915 = vand.u32 %v2858, 2147483648
      %v2916 = vor.u32 1.1754944e-38, %v2915
      %v2917 = vsel %vm2914, %v2916, %v2912
      %v2918 = vmul.f32 %v2846, %v2917
      %2919 = vrot.lane.b32.xlu0 %v2537, 56
      %v2920 = vpop.permute.xlu0 %2919
      %2921 = vrot.lane.b32.xlu0 %v2540, 56
      %v2922 = vpop.permute.xlu0 %2921
      %2923 = vrot.lane.b32.xlu0 %v2543, 56
      %v2924 = vpop.permute.xlu0 %2923
      %2925 = vrot.lane.b32.xlu0 %v2546, 56
      %v2926 = vpop.permute.xlu0 %2925
      %v2932 = vsel %vm1151, %v2873, 0
      %v2935 = vsel %vm1151, %v2888, 0
      %v2938 = vsel %vm1151, %v2903, 0
      %v2941 = vsel %vm1151, %v2918, 0
      %2943 = vmatpush.msra.mxu0 0.0
      %2944 = vmatpush.msra.mxu0 0.0
      %2945 = vmatpush.msra.mxu0 0.0
      %2946 = vmatpush.msra.mxu0 0.0
      %2947 = vmatpush.msra.mxu0 0.0
      %2948 = vmatpush.msra.mxu0 0.0
      %2949 = vmatpush.msra.mxu0 0.0
      %2950 = vmatpush.msra.mxu0 0.0
      %2951 = vmatpush.msra.mxu0 0.0
      %2952 = vmatpush.msra.mxu0 0.0
      %2953 = vmatpush.msra.mxu0 0.0
      %2954 = vmatpush.msra.mxu0 0.0
      %2955 = vmatpush.msra.mxu0 %v2926
      %2956 = vmatpush.msra.mxu0 %v2924
      %2957 = vmatpush.msra.mxu0 %v2922
      %2958 = vmatpush.msra.mxu0 %v2920
      %2959 = vmatmul.f32.gmra.mxu0 %v2932
      %v2960 = vpop.f32.mrf.mxu0
      %v2961 = vadd.f32 0.0, %v2960
      %2962 = vmatmul.f32.gmra.mxu0 %v2935
      %v2963 = vpop.f32.mrf.mxu0
      %v2964 = vadd.f32 0.0, %v2963
      %2965 = vmatmul.f32.gmra.mxu0 %v2938
      %v2966 = vpop.f32.mrf.mxu0
      %v2967 = vadd.f32 0.0, %v2966
      %2968 = vmatmul.f32.gmra.mxu0 %v2941
      %v2969 = vpop.f32.mrf.mxu0
      %v2970 = vadd.f32 0.0, %v2969
      %2971 = vdwg.mxu0
      %2972 = vrot.lane.b32.xlu0 %v2537, 112
      %v2973 = vpop.permute.xlu0 %2972
      %2974 = vrot.lane.b32.xlu0 %v2540, 112
      %v2975 = vpop.permute.xlu0 %2974
      %2976 = vrot.lane.b32.xlu0 %v2543, 112
      %v2977 = vpop.permute.xlu0 %2976
      %2978 = vrot.lane.b32.xlu0 %v2546, 112
      %v2979 = vpop.permute.xlu0 %2978
      %2980 = vrot.lane.b32.xlu0 %v2537, 80
      %v2981 = vpop.permute.xlu0 %2980
      %2982 = vrot.lane.b32.xlu0 %v2540, 80
      %v2983 = vpop.permute.xlu0 %2982
      %2984 = vrot.lane.b32.xlu0 %v2543, 80
      %v2985 = vpop.permute.xlu0 %2984
      %2986 = vrot.lane.b32.xlu0 %v2546, 80
      %v2987 = vpop.permute.xlu0 %2986
      %v2988 = vsel %vm1205, %v2973, 0
      %v2990 = vsel %vm1205, %v2975, 0
      %v2992 = vsel %vm1205, %v2977, 0
      %v2994 = vsel %vm1205, %v2979, 0
      %v2996 = vsel %vm1205, %v2981, 0
      %v2998 = vsel %vm1205, %v2983, 0
      %v3000 = vsel %vm1205, %v2985, 0
      %v3002 = vsel %vm1205, %v2987, 0
      %3004 = vmatpush.xpose.msra.mxu0 0.0
      %3005 = vmatpush.xpose.msra.mxu0 0.0
      %3006 = vmatpush.xpose.msra.mxu0 0.0
      %3007 = vmatpush.xpose.msra.mxu0 0.0
      %3008 = vmatpush.xpose.msra.mxu0 0.0
      %3009 = vmatpush.xpose.msra.mxu0 0.0
      %3010 = vmatpush.xpose.msra.mxu0 0.0
      %3011 = vmatpush.xpose.msra.mxu0 0.0
      %3012 = vmatpush.xpose.msra.mxu0 0.0
      %3013 = vmatpush.xpose.msra.mxu0 0.0
      %3014 = vmatpush.xpose.msra.mxu0 0.0
      %3015 = vmatpush.xpose.msra.mxu0 0.0
      %3016 = vmatpush.xpose.msra.mxu0 %v3002
      %3017 = vmatpush.xpose.msra.mxu0 %v3000
      %3018 = vmatpush.xpose.msra.mxu0 %v2998
      %3019 = vmatpush.xpose.msra.mxu0 %v2996
      %3020 = vmatmul.f32.gmra.mxu0 %v2988
      %v3021 = vpop.f32.mrf.mxu0
      %v3022 = vadd.f32 0.0, %v3021
      %3023 = vmatmul.f32.gmra.mxu0 %v2990
      %v3024 = vpop.f32.mrf.mxu0
      %v3025 = vadd.f32 0.0, %v3024
      %3026 = vmatmul.f32.gmra.mxu0 %v2992
      %v3027 = vpop.f32.mrf.mxu0
      %v3028 = vadd.f32 0.0, %v3027
      %3029 = vmatmul.f32.gmra.mxu0 %v2994
      %v3030 = vpop.f32.mrf.mxu0
      %v3031 = vadd.f32 0.0, %v3030
      %3032 = vdwg.mxu0
      %v3033 = vmul.f32 %v3022, 0.35355338
      %v3034 = vmul.f32 %v3025, 0.35355338
      %v3035 = vmul.f32 %v3028, 0.35355338
      %v3036 = vmul.f32 %v3031, 0.35355338
      %v3037 = vsel %vm1151, %v3033, -inf
      %3038 = vmax.xlane.f32.xlu0 %v3037
      %v3039 = vpop.xlane.xlu0 %3038
      %v3040 = vsel %vm1151, %v3034, -inf
      %3041 = vmax.xlane.f32.xlu0 %v3040
      %v3042 = vpop.xlane.xlu0 %3041
      %v3043 = vsel %vm1151, %v3035, -inf
      %3044 = vmax.xlane.f32.xlu0 %v3043
      %v3045 = vpop.xlane.xlu0 %3044
      %v3046 = vsel %vm1151, %v3036, -inf
      %3047 = vmax.xlane.f32.xlu0 %v3046
      %v3048 = vpop.xlane.xlu0 %3047
      %v3049 = vsub.f32 %v3033, %v3039
      %v3050 = vsub.f32 %v3034, %v3042
      %v3051 = vsub.f32 %v3035, %v3045
      %v3052 = vsub.f32 %v3036, %v3048
      %v3053 = vmul.f32 %v3049, 1.442695
      %v3054 = vpow.pop %v3053
      %v3055 = vmul.f32 %v3050, 1.442695
      %v3056 = vpow.pop %v3055
      %v3057 = vmul.f32 %v3051, 1.442695
      %v3058 = vpow.pop %v3057
      %v3059 = vmul.f32 %v3052, 1.442695
      %v3060 = vpow.pop %v3059
      %v3061 = vsel %vm1151, %v3054, 0.0
      %3062 = vadd.xlane.f32.xlu0 %v3061
      %v3063 = vpop.xlane.xlu0 %3062
      %v3064 = vsel %vm1151, %v3056, 0.0
      %3065 = vadd.xlane.f32.xlu0 %v3064
      %v3066 = vpop.xlane.xlu0 %3065
      %v3067 = vsel %vm1151, %v3058, 0.0
      %3068 = vadd.xlane.f32.xlu0 %v3067
      %v3069 = vpop.xlane.xlu0 %3068
      %v3070 = vsel %vm1151, %v3060, 0.0
      %3071 = vadd.xlane.f32.xlu0 %v3070
      %v3072 = vpop.xlane.xlu0 %3071
      %v3073 = vrcp.pop %v3063
      %v3074 = vmul.f32 %v3063, %v3073
      %v3075 = vsub.f32 1.0, %v3074
      %v3076 = vmul.f32 %v3073, %v3075
      %v3077 = vadd.f32 %v3073, %v3076
      %vm3078 = vweird.f32 %v3063
      %vm3079 = vweird.f32 %v3073
      %vm3080 = vmor %vm3078, %vm3079
      %v3081 = vsel %vm3080, %v3073, %v3077
      %v3082 = vand.u32 2147483647, %v3063
      %vm3083 = vcmp.eq.f32.partialorder %v3082, 8.507059e+37
      %v3084 = vand.u32 %v3063, 2147483648
      %v3085 = vor.u32 1.1754944e-38, %v3084
      %v3086 = vsel %vm3083, %v3085, %v3081
      %v3087 = vmul.f32 %v3054, %v3086
      %v3088 = vrcp.pop %v3066
      %v3089 = vmul.f32 %v3066, %v3088
      %v3090 = vsub.f32 1.0, %v3089
      %v3091 = vmul.f32 %v3088, %v3090
      %v3092 = vadd.f32 %v3088, %v3091
      %vm3093 = vweird.f32 %v3066
      %vm3094 = vweird.f32 %v3088
      %vm3095 = vmor %vm3093, %vm3094
      %v3096 = vsel %vm3095, %v3088, %v3092
      %v3097 = vand.u32 2147483647, %v3066
      %vm3098 = vcmp.eq.f32.partialorder %v3097, 8.507059e+37
      %v3099 = vand.u32 %v3066, 2147483648
      %v3100 = vor.u32 1.1754944e-38, %v3099
      %v3101 = vsel %vm3098, %v3100, %v3096
      %v3102 = vmul.f32 %v3056, %v3101
      %v3103 = vrcp.pop %v3069
      %v3104 = vmul.f32 %v3069, %v3103
      %v3105 = vsub.f32 1.0, %v3104
      %v3106 = vmul.f32 %v3103, %v3105
      %v3107 = vadd.f32 %v3103, %v3106
      %vm3108 = vweird.f32 %v3069
      %vm3109 = vweird.f32 %v3103
      %vm3110 = vmor %vm3108, %vm3109
      %v3111 = vsel %vm3110, %v3103, %v3107
      %v3112 = vand.u32 2147483647, %v3069
      %vm3113 = vcmp.eq.f32.partialorder %v3112, 8.507059e+37
      %v3114 = vand.u32 %v3069, 2147483648
      %v3115 = vor.u32 1.1754944e-38, %v3114
      %v3116 = vsel %vm3113, %v3115, %v3111
      %v3117 = vmul.f32 %v3058, %v3116
      %v3118 = vrcp.pop %v3072
      %v3119 = vmul.f32 %v3072, %v3118
      %v3120 = vsub.f32 1.0, %v3119
      %v3121 = vmul.f32 %v3118, %v3120
      %v3122 = vadd.f32 %v3118, %v3121
      %vm3123 = vweird.f32 %v3072
      %vm3124 = vweird.f32 %v3118
      %vm3125 = vmor %vm3123, %vm3124
      %v3126 = vsel %vm3125, %v3118, %v3122
      %v3127 = vand.u32 2147483647, %v3072
      %vm3128 = vcmp.eq.f32.partialorder %v3127, 8.507059e+37
      %v3129 = vand.u32 %v3072, 2147483648
      %v3130 = vor.u32 1.1754944e-38, %v3129
      %v3131 = vsel %vm3128, %v3130, %v3126
      %v3132 = vmul.f32 %v3060, %v3131
      %3133 = vrot.lane.b32.xlu0 %v2537, 48
      %v3134 = vpop.permute.xlu0 %3133
      %3135 = vrot.lane.b32.xlu0 %v2540, 48
      %v3136 = vpop.permute.xlu0 %3135
      %3137 = vrot.lane.b32.xlu0 %v2543, 48
      %v3138 = vpop.permute.xlu0 %3137
      %3139 = vrot.lane.b32.xlu0 %v2546, 48
      %v3140 = vpop.permute.xlu0 %3139
      %v3146 = vsel %vm1151, %v3087, 0
      %v3149 = vsel %vm1151, %v3102, 0
      %v3152 = vsel %vm1151, %v3117, 0
      %v3155 = vsel %vm1151, %v3132, 0
      %3157 = vmatpush.msra.mxu0 0.0
      %3158 = vmatpush.msra.mxu0 0.0
      %3159 = vmatpush.msra.mxu0 0.0
      %3160 = vmatpush.msra.mxu0 0.0
      %3161 = vmatpush.msra.mxu0 0.0
      %3162 = vmatpush.msra.mxu0 0.0
      %3163 = vmatpush.msra.mxu0 0.0
      %3164 = vmatpush.msra.mxu0 0.0
      %3165 = vmatpush.msra.mxu0 0.0
      %3166 = vmatpush.msra.mxu0 0.0
      %3167 = vmatpush.msra.mxu0 0.0
      %3168 = vmatpush.msra.mxu0 0.0
      %3169 = vmatpush.msra.mxu0 %v3140
      %3170 = vmatpush.msra.mxu0 %v3138
      %3171 = vmatpush.msra.mxu0 %v3136
      %3172 = vmatpush.msra.mxu0 %v3134
      %3173 = vmatmul.f32.gmra.mxu0 %v3146
      %v3174 = vpop.f32.mrf.mxu0
      %v3175 = vadd.f32 0.0, %v3174
      %3176 = vmatmul.f32.gmra.mxu0 %v3149
      %v3177 = vpop.f32.mrf.mxu0
      %v3178 = vadd.f32 0.0, %v3177
      %3179 = vmatmul.f32.gmra.mxu0 %v3152
      %v3180 = vpop.f32.mrf.mxu0
      %v3181 = vadd.f32 0.0, %v3180
      %3182 = vmatmul.f32.gmra.mxu0 %v3155
      %v3183 = vpop.f32.mrf.mxu0
      %v3184 = vadd.f32 0.0, %v3183
      %3185 = vdwg.mxu0
      %3186 = vrot.lane.b32.xlu0 %v2537, 104
      %v3187 = vpop.permute.xlu0 %3186
      %3188 = vrot.lane.b32.xlu0 %v2540, 104
      %v3189 = vpop.permute.xlu0 %3188
      %3190 = vrot.lane.b32.xlu0 %v2543, 104
      %v3191 = vpop.permute.xlu0 %3190
      %3192 = vrot.lane.b32.xlu0 %v2546, 104
      %v3193 = vpop.permute.xlu0 %3192
      %3194 = vrot.lane.b32.xlu0 %v2537, 72
      %v3195 = vpop.permute.xlu0 %3194
      %3196 = vrot.lane.b32.xlu0 %v2540, 72
      %v3197 = vpop.permute.xlu0 %3196
      %3198 = vrot.lane.b32.xlu0 %v2543, 72
      %v3199 = vpop.permute.xlu0 %3198
      %3200 = vrot.lane.b32.xlu0 %v2546, 72
      %v3201 = vpop.permute.xlu0 %3200
      %v3202 = vsel %vm1205, %v3187, 0
      %v3204 = vsel %vm1205, %v3189, 0
      %v3206 = vsel %vm1205, %v3191, 0
      %v3208 = vsel %vm1205, %v3193, 0
      %v3210 = vsel %vm1205, %v3195, 0
      %v3212 = vsel %vm1205, %v3197, 0
      %v3214 = vsel %vm1205, %v3199, 0
      %v3216 = vsel %vm1205, %v3201, 0
      %3218 = vmatpush.xpose.msra.mxu0 0.0
      %3219 = vmatpush.xpose.msra.mxu0 0.0
      %3220 = vmatpush.xpose.msra.mxu0 0.0
      %3221 = vmatpush.xpose.msra.mxu0 0.0
      %3222 = vmatpush.xpose.msra.mxu0 0.0
      %3223 = vmatpush.xpose.msra.mxu0 0.0
      %3224 = vmatpush.xpose.msra.mxu0 0.0
      %3225 = vmatpush.xpose.msra.mxu0 0.0
      %3226 = vmatpush.xpose.msra.mxu0 0.0
      %3227 = vmatpush.xpose.msra.mxu0 0.0
      %3228 = vmatpush.xpose.msra.mxu0 0.0
      %3229 = vmatpush.xpose.msra.mxu0 0.0
      %3230 = vmatpush.xpose.msra.mxu0 %v3216
      %3231 = vmatpush.xpose.msra.mxu0 %v3214
      %3232 = vmatpush.xpose.msra.mxu0 %v3212
      %3233 = vmatpush.xpose.msra.mxu0 %v3210
      %3234 = vmatmul.f32.gmra.mxu0 %v3202
      %v3235 = vpop.f32.mrf.mxu0
      %v3236 = vadd.f32 0.0, %v3235
      %3237 = vmatmul.f32.gmra.mxu0 %v3204
      %v3238 = vpop.f32.mrf.mxu0
      %v3239 = vadd.f32 0.0, %v3238
      %3240 = vmatmul.f32.gmra.mxu0 %v3206
      %v3241 = vpop.f32.mrf.mxu0
      %v3242 = vadd.f32 0.0, %v3241
      %3243 = vmatmul.f32.gmra.mxu0 %v3208
      %v3244 = vpop.f32.mrf.mxu0
      %v3245 = vadd.f32 0.0, %v3244
      %3246 = vdwg.mxu0
      %v3247 = vmul.f32 %v3236, 0.35355338
      %v3248 = vmul.f32 %v3239, 0.35355338
      %v3249 = vmul.f32 %v3242, 0.35355338
      %v3250 = vmul.f32 %v3245, 0.35355338
      %v3251 = vsel %vm1151, %v3247, -inf
      %3252 = vmax.xlane.f32.xlu0 %v3251
      %v3253 = vpop.xlane.xlu0 %3252
      %v3254 = vsel %vm1151, %v3248, -inf
      %3255 = vmax.xlane.f32.xlu0 %v3254
      %v3256 = vpop.xlane.xlu0 %3255
      %v3257 = vsel %vm1151, %v3249, -inf
      %3258 = vmax.xlane.f32.xlu0 %v3257
      %v3259 = vpop.xlane.xlu0 %3258
      %v3260 = vsel %vm1151, %v3250, -inf
      %3261 = vmax.xlane.f32.xlu0 %v3260
      %v3262 = vpop.xlane.xlu0 %3261
      %v3263 = vsub.f32 %v3247, %v3253
      %v3264 = vsub.f32 %v3248, %v3256
      %v3265 = vsub.f32 %v3249, %v3259
      %v3266 = vsub.f32 %v3250, %v3262
      %v3267 = vmul.f32 %v3263, 1.442695
      %v3268 = vpow.pop %v3267
      %v3269 = vmul.f32 %v3264, 1.442695
      %v3270 = vpow.pop %v3269
      %v3271 = vmul.f32 %v3265, 1.442695
      %v3272 = vpow.pop %v3271
      %v3273 = vmul.f32 %v3266, 1.442695
      %v3274 = vpow.pop %v3273
      %v3275 = vsel %vm1151, %v3268, 0.0
      %3276 = vadd.xlane.f32.xlu0 %v3275
      %v3277 = vpop.xlane.xlu0 %3276
      %v3278 = vsel %vm1151, %v3270, 0.0
      %3279 = vadd.xlane.f32.xlu0 %v3278
      %v3280 = vpop.xlane.xlu0 %3279
      %v3281 = vsel %vm1151, %v3272, 0.0
      %3282 = vadd.xlane.f32.xlu0 %v3281
      %v3283 = vpop.xlane.xlu0 %3282
      %v3284 = vsel %vm1151, %v3274, 0.0
      %3285 = vadd.xlane.f32.xlu0 %v3284
      %v3286 = vpop.xlane.xlu0 %3285
      %v3287 = vrcp.pop %v3277
      %v3288 = vmul.f32 %v3277, %v3287
      %v3289 = vsub.f32 1.0, %v3288
      %v3290 = vmul.f32 %v3287, %v3289
      %v3291 = vadd.f32 %v3287, %v3290
      %vm3292 = vweird.f32 %v3277
      %vm3293 = vweird.f32 %v3287
      %vm3294 = vmor %vm3292, %vm3293
      %v3295 = vsel %vm3294, %v3287, %v3291
      %v3296 = vand.u32 2147483647, %v3277
      %vm3297 = vcmp.eq.f32.partialorder %v3296, 8.507059e+37
      %v3298 = vand.u32 %v3277, 2147483648
      %v3299 = vor.u32 1.1754944e-38, %v3298
      %v3300 = vsel %vm3297, %v3299, %v3295
      %v3301 = vmul.f32 %v3268, %v3300
      %v3302 = vrcp.pop %v3280
      %v3303 = vmul.f32 %v3280, %v3302
      %v3304 = vsub.f32 1.0, %v3303
      %v3305 = vmul.f32 %v3302, %v3304
      %v3306 = vadd.f32 %v3302, %v3305
      %vm3307 = vweird.f32 %v3280
      %vm3308 = vweird.f32 %v3302
      %vm3309 = vmor %vm3307, %vm3308
      %v3310 = vsel %vm3309, %v3302, %v3306
      %v3311 = vand.u32 2147483647, %v3280
      %vm3312 = vcmp.eq.f32.partialorder %v3311, 8.507059e+37
      %v3313 = vand.u32 %v3280, 2147483648
      %v3314 = vor.u32 1.1754944e-38, %v3313
      %v3315 = vsel %vm3312, %v3314, %v3310
      %v3316 = vmul.f32 %v3270, %v3315
      %v3317 = vrcp.pop %v3283
      %v3318 = vmul.f32 %v3283, %v3317
      %v3319 = vsub.f32 1.0, %v3318
      %v3320 = vmul.f32 %v3317, %v3319
      %v3321 = vadd.f32 %v3317, %v3320
      %vm3322 = vweird.f32 %v3283
      %vm3323 = vweird.f32 %v3317
      %vm3324 = vmor %vm3322, %vm3323
      %v3325 = vsel %vm3324, %v3317, %v3321
      %v3326 = vand.u32 2147483647, %v3283
      %vm3327 = vcmp.eq.f32.partialorder %v3326, 8.507059e+37
      %v3328 = vand.u32 %v3283, 2147483648
      %v3329 = vor.u32 1.1754944e-38, %v3328
      %v3330 = vsel %vm3327, %v3329, %v3325
      %v3331 = vmul.f32 %v3272, %v3330
      %v3332 = vrcp.pop %v3286
      %v3333 = vmul.f32 %v3286, %v3332
      %v3334 = vsub.f32 1.0, %v3333
      %v3335 = vmul.f32 %v3332, %v3334
      %v3336 = vadd.f32 %v3332, %v3335
      %vm3337 = vweird.f32 %v3286
      %vm3338 = vweird.f32 %v3332
      %vm3339 = vmor %vm3337, %vm3338
      %v3340 = vsel %vm3339, %v3332, %v3336
      %v3341 = vand.u32 2147483647, %v3286
      %vm3342 = vcmp.eq.f32.partialorder %v3341, 8.507059e+37
      %v3343 = vand.u32 %v3286, 2147483648
      %v3344 = vor.u32 1.1754944e-38, %v3343
      %v3345 = vsel %vm3342, %v3344, %v3340
      %v3346 = vmul.f32 %v3274, %v3345
      %3347 = vrot.lane.b32.xlu0 %v2537, 40
      %v3348 = vpop.permute.xlu0 %3347
      %3349 = vrot.lane.b32.xlu0 %v2540, 40
      %v3350 = vpop.permute.xlu0 %3349
      %3351 = vrot.lane.b32.xlu0 %v2543, 40
      %v3352 = vpop.permute.xlu0 %3351
      %3353 = vrot.lane.b32.xlu0 %v2546, 40
      %v3354 = vpop.permute.xlu0 %3353
      %v3360 = vsel %vm1151, %v3301, 0
      %v3363 = vsel %vm1151, %v3316, 0
      %v3366 = vsel %vm1151, %v3331, 0
      %v3369 = vsel %vm1151, %v3346, 0
      %3371 = vmatpush.msra.mxu0 0.0
      %3372 = vmatpush.msra.mxu0 0.0
      %3373 = vmatpush.msra.mxu0 0.0
      %3374 = vmatpush.msra.mxu0 0.0
      %3375 = vmatpush.msra.mxu0 0.0
      %3376 = vmatpush.msra.mxu0 0.0
      %3377 = vmatpush.msra.mxu0 0.0
      %3378 = vmatpush.msra.mxu0 0.0
      %3379 = vmatpush.msra.mxu0 0.0
      %3380 = vmatpush.msra.mxu0 0.0
      %3381 = vmatpush.msra.mxu0 0.0
      %3382 = vmatpush.msra.mxu0 0.0
      %3383 = vmatpush.msra.mxu0 %v3354
      %3384 = vmatpush.msra.mxu0 %v3352
      %3385 = vmatpush.msra.mxu0 %v3350
      %3386 = vmatpush.msra.mxu0 %v3348
      %3387 = vmatmul.f32.gmra.mxu0 %v3360
      %v3388 = vpop.f32.mrf.mxu0
      %v3389 = vadd.f32 0.0, %v3388
      %3390 = vmatmul.f32.gmra.mxu0 %v3363
      %v3391 = vpop.f32.mrf.mxu0
      %v3392 = vadd.f32 0.0, %v3391
      %3393 = vmatmul.f32.gmra.mxu0 %v3366
      %v3394 = vpop.f32.mrf.mxu0
      %v3395 = vadd.f32 0.0, %v3394
      %3396 = vmatmul.f32.gmra.mxu0 %v3369
      %v3397 = vpop.f32.mrf.mxu0
      %v3398 = vadd.f32 0.0, %v3397
      %3399 = vdwg.mxu0
      %3404 = vrot.lane.b32.xlu0 %v2961, 8
      %v3405 = vpop.permute.xlu0 %3404
      %3406 = vrot.lane.b32.xlu0 %v2964, 8
      %v3407 = vpop.permute.xlu0 %3406
      %3408 = vrot.lane.b32.xlu0 %v2967, 8
      %v3409 = vpop.permute.xlu0 %3408
      %3410 = vrot.lane.b32.xlu0 %v2970, 8
      %v3411 = vpop.permute.xlu0 %3410
      %3420 = vrot.lane.b32.xlu0 %v3175, 16
      %v3421 = vpop.permute.xlu0 %3420
      %3422 = vrot.lane.b32.xlu0 %v3178, 16
      %v3423 = vpop.permute.xlu0 %3422
      %3424 = vrot.lane.b32.xlu0 %v3181, 16
      %v3425 = vpop.permute.xlu0 %3424
      %3426 = vrot.lane.b32.xlu0 %v3184, 16
      %v3427 = vpop.permute.xlu0 %3426
      %3436 = vrot.lane.b32.xlu0 %v3389, 24
      %v3437 = vpop.permute.xlu0 %3436
      %3438 = vrot.lane.b32.xlu0 %v3392, 24
      %v3439 = vpop.permute.xlu0 %3438
      %3440 = vrot.lane.b32.xlu0 %v3395, 24
      %v3441 = vpop.permute.xlu0 %3440
      %3442 = vrot.lane.b32.xlu0 %v3398, 24
      %v3443 = vpop.permute.xlu0 %3442
      %v3448 = vsel %vm1205, %v2747, %v3405
      %v3449 = vsel %vm1205, %v2750, %v3407
      %v3450 = vsel %vm1205, %v2753, %v3409
      %v3451 = vsel %vm1205, %v2756, %v3411
      %v3452 = vsel %vm1028, %v3448, %v3421
      %v3453 = vsel %vm1028, %v3449, %v3423
      %v3454 = vsel %vm1028, %v3450, %v3425
      %v3455 = vsel %vm1028, %v3451, %v3427
      %v3456 = vsel %vm2102, %v3452, %v3437
      %v3457 = vsel %vm2102, %v3453, %v3439
      %v3458 = vsel %vm2102, %v3454, %v3441
      %v3459 = vsel %vm2102, %v3455, %v3443
      %s3460 = scalar_lea.vmem %s11, 32
      %v3461 = vld [vmem:[%s3460] sm:$0xff]
      %v3462 = vld [vmem:[%s3460 + $0x8] sm:$0xff]
      %v3463 = vld [vmem:[%s3460 + $0x10] sm:$0xff]
      %v3464 = vld [vmem:[%s3460 + $0x18] sm:$0xff]
      %s3465 = scalar_lea.vmem %s12, 1
      %v3466 = vld [vmem:[%s3465] sm:$0x1]
      %v3468 = vperm.slane %v3466, 0
      %v3471 = vsel %vm1151, %v3456, 0
      %v3474 = vsel %vm1151, %v3457, 0
      %v3477 = vsel %vm1151, %v3458, 0
      %v3480 = vsel %vm1151, %v3459, 0
      %3482 = vmatpush.msra.mxu0 0.0
      %3483 = vmatpush.msra.mxu0 0.0
      %3484 = vmatpush.msra.mxu0 0.0
      %3485 = vmatpush.msra.mxu0 0.0
      %3486 = vmatpush.msra.mxu0 0.0
      %3487 = vmatpush.msra.mxu0 0.0
      %3488 = vmatpush.msra.mxu0 0.0
      %3489 = vmatpush.msra.mxu0 0.0
      %3490 = vmatpush.msra.mxu0 0.0
      %3491 = vmatpush.msra.mxu0 0.0
      %3492 = vmatpush.msra.mxu0 0.0
      %3493 = vmatpush.msra.mxu0 0.0
      %3494 = vmatpush.msra.mxu0 %v3464
      %3495 = vmatpush.msra.mxu0 %v3463
      %3496 = vmatpush.msra.mxu0 %v3462
      %3497 = vmatpush.msra.mxu0 %v3461
      %3498 = vmatmul.f32.gmra.mxu0 %v3471
      %v3499 = vpop.f32.mrf.mxu0
      %v3500 = vadd.f32 %v3468, %v3499
      %3501 = vmatmul.f32.gmra.mxu0 %v3474
      %v3502 = vpop.f32.mrf.mxu0
      %v3503 = vadd.f32 %v3468, %v3502
      %3504 = vmatmul.f32.gmra.mxu0 %v3477
      %v3505 = vpop.f32.mrf.mxu0
      %v3506 = vadd.f32 %v3468, %v3505
      %3507 = vmatmul.f32.gmra.mxu0 %v3480
      %v3508 = vpop.f32.mrf.mxu0
      %v3509 = vadd.f32 %v3468, %v3508
      %3510 = vdwg.mxu0
      %v3511 = vadd.f32 %v2493, %v3500
      %v3512 = vadd.f32 %v2494, %v3503
      %v3513 = vadd.f32 %v2495, %v3506
      %v3514 = vadd.f32 %v2496, %v3509
      %s3515 = scalar_lea.vmem %s13, 1
      %v3516 = vld [vmem:[%s3515] sm:$0x1]
      %s3517 = scalar_lea.vmem %s14, 1
      %v3518 = vld [vmem:[%s3517] sm:$0x1]
      %v3519 = vsel %vm1151, %v3511, 0.0
      %3520 = vadd.xlane.f32.xlu0 %v3519
      %v3521 = vpop.xlane.xlu0 %3520
      %v3522 = vsel %vm1151, %v3512, 0.0
      %3523 = vadd.xlane.f32.xlu0 %v3522
      %v3524 = vpop.xlane.xlu0 %3523
      %v3525 = vsel %vm1151, %v3513, 0.0
      %3526 = vadd.xlane.f32.xlu0 %v3525
      %v3527 = vpop.xlane.xlu0 %3526
      %v3528 = vsel %vm1151, %v3514, 0.0
      %3529 = vadd.xlane.f32.xlu0 %v3528
      %v3530 = vpop.xlane.xlu0 %3529
      %v3531 = vmul.f32 %v3521, %v2180
      %v3532 = vmul.f32 %v3524, %v2180
      %v3533 = vmul.f32 %v3527, %v2180
      %v3534 = vmul.f32 %v3530, %v2180
      %v3535 = vmul.f32 %v3511, %v3511
      %v3536 = vmul.f32 %v3512, %v3512
      %v3537 = vmul.f32 %v3513, %v3513
      %v3538 = vmul.f32 %v3514, %v3514
      %v3539 = vsel %vm1151, %v3535, 0.0
      %3540 = vadd.xlane.f32.xlu0 %v3539
      %v3541 = vpop.xlane.xlu0 %3540
      %v3542 = vsel %vm1151, %v3536, 0.0
      %3543 = vadd.xlane.f32.xlu0 %v3542
      %v3544 = vpop.xlane.xlu0 %3543
      %v3545 = vsel %vm1151, %v3537, 0.0
      %3546 = vadd.xlane.f32.xlu0 %v3545
      %v3547 = vpop.xlane.xlu0 %3546
      %v3548 = vsel %vm1151, %v3538, 0.0
      %3549 = vadd.xlane.f32.xlu0 %v3548
      %v3550 = vpop.xlane.xlu0 %3549
      %v3551 = vmul.f32 %v3541, %v2180
      %v3552 = vmul.f32 %v3544, %v2180
      %v3553 = vmul.f32 %v3547, %v2180
      %v3554 = vmul.f32 %v3550, %v2180
      %v3555 = vmul.f32 %v3531, %v3531
      %v3556 = vmul.f32 %v3532, %v3532
      %v3557 = vmul.f32 %v3533, %v3533
      %v3558 = vmul.f32 %v3534, %v3534
      %v3559 = vsub.f32 %v3551, %v3555
      %v3560 = vsub.f32 %v3552, %v3556
      %v3561 = vsub.f32 %v3553, %v3557
      %v3562 = vsub.f32 %v3554, %v3558
      %v3563 = vsub.f32 %v3511, %v3531
      %v3564 = vsub.f32 %v3512, %v3532
      %v3565 = vsub.f32 %v3513, %v3533
      %v3566 = vsub.f32 %v3514, %v3534
      %v3567 = vadd.f32 %v3559, 1e-05
      %v3568 = vadd.f32 %v3560, 1e-05
      %v3569 = vadd.f32 %v3561, 1e-05
      %v3570 = vadd.f32 %v3562, 1e-05
      %v3571 = vrsqrt.pop %v3567
      %v3572 = vmul.f32 %v3571, %v3567
      %v3573 = vmul.f32 %v3572, %v3571
      %v3574 = vmul.f32 0.5, %v3573
      %v3575 = vsub.f32 1.5, %v3574
      %v3576 = vmul.f32 %v3571, %v3575
      %vm3577 = vweird.f32 %v3567
      %vm3578 = vweird.f32 %v3571
      %vm3579 = vmor %vm3577, %vm3578
      %v3580 = vsel %vm3579, %v3571, %v3576
      %v3581 = vrsqrt.pop %v3568
      %v3582 = vmul.f32 %v3581, %v3568
      %v3583 = vmul.f32 %v3582, %v3581
      %v3584 = vmul.f32 0.5, %v3583
      %v3585 = vsub.f32 1.5, %v3584
      %v3586 = vmul.f32 %v3581, %v3585
      %vm3587 = vweird.f32 %v3568
      %vm3588 = vweird.f32 %v3581
      %vm3589 = vmor %vm3587, %vm3588
      %v3590 = vsel %vm3589, %v3581, %v3586
      %v3591 = vrsqrt.pop %v3569
      %v3592 = vmul.f32 %v3591, %v3569
      %v3593 = vmul.f32 %v3592, %v3591
      %v3594 = vmul.f32 0.5, %v3593
      %v3595 = vsub.f32 1.5, %v3594
      %v3596 = vmul.f32 %v3591, %v3595
      %vm3597 = vweird.f32 %v3569
      %vm3598 = vweird.f32 %v3591
      %vm3599 = vmor %vm3597, %vm3598
      %v3600 = vsel %vm3599, %v3591, %v3596
      %v3601 = vrsqrt.pop %v3570
      %v3602 = vmul.f32 %v3601, %v3570
      %v3603 = vmul.f32 %v3602, %v3601
      %v3604 = vmul.f32 0.5, %v3603
      %v3605 = vsub.f32 1.5, %v3604
      %v3606 = vmul.f32 %v3601, %v3605
      %vm3607 = vweird.f32 %v3570
      %vm3608 = vweird.f32 %v3601
      %vm3609 = vmor %vm3607, %vm3608
      %v3610 = vsel %vm3609, %v3601, %v3606
      %v3611 = vmul.f32 %v3563, %v3580
      %v3612 = vmul.f32 %v3564, %v3590
      %v3613 = vmul.f32 %v3565, %v3600
      %v3614 = vmul.f32 %v3566, %v3610
      %v3616 = vperm.slane %v3516, 0
      %v3618 = vmul.f32 %v3611, %v3616
      %v3619 = vmul.f32 %v3612, %v3616
      %v3620 = vmul.f32 %v3613, %v3616
      %v3621 = vmul.f32 %v3614, %v3616
      %v3623 = vperm.slane %v3518, 0
      %v3625 = vadd.f32 %v3618, %v3623
      %v3626 = vadd.f32 %v3619, %v3623
      %v3627 = vadd.f32 %v3620, %v3623
      %v3628 = vadd.f32 %v3621, %v3623
      %s3629 = scalar_lea.vmem %s15, 32
      %v3630 = vld [vmem:[%s3629] sm:$0xff]
      %v3631 = vld [vmem:[%s3629 + $0x8] sm:$0xff]
      %v3632 = vld [vmem:[%s3629 + $0x10] sm:$0xff]
      %v3633 = vld [vmem:[%s3629 + $0x18] sm:$0xff]
      %s3634 = scalar_lea.vmem %s16, 1
      %v3635 = vld [vmem:[%s3634] sm:$0x1]
      %v3637 = vperm.slane %v3635, 0
      %v3640 = vsel %vm1151, %v3625, 0
      %v3643 = vsel %vm1151, %v3626, 0
      %v3646 = vsel %vm1151, %v3627, 0
      %v3649 = vsel %vm1151, %v3628, 0
      %3651 = vmatpush.msra.mxu0 0.0
      %3652 = vmatpush.msra.mxu0 0.0
      %3653 = vmatpush.msra.mxu0 0.0
      %3654 = vmatpush.msra.mxu0 0.0
      %3655 = vmatpush.msra.mxu0 0.0
      %3656 = vmatpush.msra.mxu0 0.0
      %3657 = vmatpush.msra.mxu0 0.0
      %3658 = vmatpush.msra.mxu0 0.0
      %3659 = vmatpush.msra.mxu0 0.0
      %3660 = vmatpush.msra.mxu0 0.0
      %3661 = vmatpush.msra.mxu0 0.0
      %3662 = vmatpush.msra.mxu0 0.0
      %3663 = vmatpush.msra.mxu0 %v3633
      %3664 = vmatpush.msra.mxu0 %v3632
      %3665 = vmatpush.msra.mxu0 %v3631
      %3666 = vmatpush.msra.mxu0 %v3630
      %3667 = vmatmul.f32.gmra.mxu0 %v3640
      %v3668 = vpop.f32.mrf.mxu0
      %v3669 = vadd.f32 %v3637, %v3668
      %3670 = vmatmul.f32.gmra.mxu0 %v3643
      %v3671 = vpop.f32.mrf.mxu0
      %v3672 = vadd.f32 %v3637, %v3671
      %3673 = vmatmul.f32.gmra.mxu0 %v3646
      %v3674 = vpop.f32.mrf.mxu0
      %v3675 = vadd.f32 %v3637, %v3674
      %3676 = vmatmul.f32.gmra.mxu0 %v3649
      %v3677 = vpop.f32.mrf.mxu0
      %v3678 = vadd.f32 %v3637, %v3677
      %3679 = vdwg.mxu0
      %v3680 = vmax.f32 %v3669, 0.0
      %v3681 = vmax.f32 %v3672, 0.0
      %v3682 = vmax.f32 %v3675, 0.0
      %v3683 = vmax.f32 %v3678, 0.0
      %s3684 = scalar_lea.vmem %s17, 128
      %v3685 = vld [vmem:[%s3684] sm:$0xff]
      %v3686 = vld [vmem:[%s3684 + $0x8] sm:$0xff]
      %v3687 = vld [vmem:[%s3684 + $0x10] sm:$0xff]
      %v3688 = vld [vmem:[%s3684 + $0x18] sm:$0xff]
      %v3689 = vld [vmem:[%s3684 + $0x20] sm:$0xff]
      %v3690 = vld [vmem:[%s3684 + $0x28] sm:$0xff]
      %v3691 = vld [vmem:[%s3684 + $0x30] sm:$0xff]
      %v3692 = vld [vmem:[%s3684 + $0x38] sm:$0xff]
      %v3693 = vld [vmem:[%s3684 + $0x40] sm:$0xff]
      %v3694 = vld [vmem:[%s3684 + $0x48] sm:$0xff]
      %v3695 = vld [vmem:[%s3684 + $0x50] sm:$0xff]
      %v3696 = vld [vmem:[%s3684 + $0x58] sm:$0xff]
      %v3697 = vld [vmem:[%s3684 + $0x60] sm:$0xff]
      %v3698 = vld [vmem:[%s3684 + $0x68] sm:$0xff]
      %v3699 = vld [vmem:[%s3684 + $0x70] sm:$0xff]
      %v3700 = vld [vmem:[%s3684 + $0x78] sm:$0xff]
      %s3701 = scalar_lea.vmem %s18, 1
      %v3702 = vld [vmem:[%s3701] sm:$0x1]
      %v3704 = vperm.slane %v3702, 0
      %3706 = vmatpush.msra.mxu0 %v3700
      %3707 = vmatpush.msra.mxu0 %v3699
      %3708 = vmatpush.msra.mxu0 %v3698
      %3709 = vmatpush.msra.mxu0 %v3697
      %3710 = vmatpush.msra.mxu0 %v3696
      %3711 = vmatpush.msra.mxu0 %v3695
      %3712 = vmatpush.msra.mxu0 %v3694
      %3713 = vmatpush.msra.mxu0 %v3693
      %3714 = vmatpush.msra.mxu0 %v3692
      %3715 = vmatpush.msra.mxu0 %v3691
      %3716 = vmatpush.msra.mxu0 %v3690
      %3717 = vmatpush.msra.mxu0 %v3689
      %3718 = vmatpush.msra.mxu0 %v3688
      %3719 = vmatpush.msra.mxu0 %v3687
      %3720 = vmatpush.msra.mxu0 %v3686
      %3721 = vmatpush.msra.mxu0 %v3685
      %3722 = vmatmul.f32.gmra.mxu0 %v3680
      %v3723 = vpop.f32.mrf.mxu0
      %v3724 = vadd.f32 %v3704, %v3723
      %3725 = vmatmul.f32.gmra.mxu0 %v3681
      %v3726 = vpop.f32.mrf.mxu0
      %v3727 = vadd.f32 %v3704, %v3726
      %3728 = vmatmul.f32.gmra.mxu0 %v3682
      %v3729 = vpop.f32.mrf.mxu0
      %v3730 = vadd.f32 %v3704, %v3729
      %3731 = vmatmul.f32.gmra.mxu0 %v3683
      %v3732 = vpop.f32.mrf.mxu0
      %v3733 = vadd.f32 %v3704, %v3732
      %3734 = vdwg.mxu0
      %v3735 = vadd.f32 %v3625, %v3724
      %v3736 = vadd.f32 %v3626, %v3727
      %v3737 = vadd.f32 %v3627, %v3730
      %v3738 = vadd.f32 %v3628, %v3733
      %s3739 = scalar_lea.vmem %s19, 1
      %v3740 = vld [vmem:[%s3739] sm:$0x1]
      %s3741 = scalar_lea.vmem %s20, 1
      %v3742 = vld [vmem:[%s3741] sm:$0x1]
      %v3743 = vsel %vm1151, %v3735, 0.0
      %3744 = vadd.xlane.f32.xlu0 %v3743
      %v3745 = vpop.xlane.xlu0 %3744
      %v3746 = vsel %vm1151, %v3736, 0.0
      %3747 = vadd.xlane.f32.xlu0 %v3746
      %v3748 = vpop.xlane.xlu0 %3747
      %v3749 = vsel %vm1151, %v3737, 0.0
      %3750 = vadd.xlane.f32.xlu0 %v3749
      %v3751 = vpop.xlane.xlu0 %3750
      %v3752 = vsel %vm1151, %v3738, 0.0
      %3753 = vadd.xlane.f32.xlu0 %v3752
      %v3754 = vpop.xlane.xlu0 %3753
      %v3755 = vmul.f32 %v3745, %v2180
      %v3756 = vmul.f32 %v3748, %v2180
      %v3757 = vmul.f32 %v3751, %v2180
      %v3758 = vmul.f32 %v3754, %v2180
      %v3759 = vmul.f32 %v3735, %v3735
      %v3760 = vmul.f32 %v3736, %v3736
      %v3761 = vmul.f32 %v3737, %v3737
      %v3762 = vmul.f32 %v3738, %v3738
      %v3763 = vsel %vm1151, %v3759, 0.0
      %3764 = vadd.xlane.f32.xlu0 %v3763
      %v3765 = vpop.xlane.xlu0 %3764
      %v3766 = vsel %vm1151, %v3760, 0.0
      %3767 = vadd.xlane.f32.xlu0 %v3766
      %v3768 = vpop.xlane.xlu0 %3767
      %v3769 = vsel %vm1151, %v3761, 0.0
      %3770 = vadd.xlane.f32.xlu0 %v3769
      %v3771 = vpop.xlane.xlu0 %3770
      %v3772 = vsel %vm1151, %v3762, 0.0
      %3773 = vadd.xlane.f32.xlu0 %v3772
      %v3774 = vpop.xlane.xlu0 %3773
      %v3775 = vmul.f32 %v3765, %v2180
      %v3776 = vmul.f32 %v3768, %v2180
      %v3777 = vmul.f32 %v3771, %v2180
      %v3778 = vmul.f32 %v3774, %v2180
      %v3779 = vmul.f32 %v3755, %v3755
      %v3780 = vmul.f32 %v3756, %v3756
      %v3781 = vmul.f32 %v3757, %v3757
      %v3782 = vmul.f32 %v3758, %v3758
      %v3783 = vsub.f32 %v3775, %v3779
      %v3784 = vsub.f32 %v3776, %v3780
      %v3785 = vsub.f32 %v3777, %v3781
      %v3786 = vsub.f32 %v3778, %v3782
      %v3787 = vsub.f32 %v3735, %v3755
      %v3788 = vsub.f32 %v3736, %v3756
      %v3789 = vsub.f32 %v3737, %v3757
      %v3790 = vsub.f32 %v3738, %v3758
      %v3791 = vadd.f32 %v3783, 1e-05
      %v3792 = vadd.f32 %v3784, 1e-05
      %v3793 = vadd.f32 %v3785, 1e-05
      %v3794 = vadd.f32 %v3786, 1e-05
      %v3795 = vrsqrt.pop %v3791
      %v3796 = vmul.f32 %v3795, %v3791
      %v3797 = vmul.f32 %v3796, %v3795
      %v3798 = vmul.f32 0.5, %v3797
      %v3799 = vsub.f32 1.5, %v3798
      %v3800 = vmul.f32 %v3795, %v3799
      %vm3801 = vweird.f32 %v3791
      %vm3802 = vweird.f32 %v3795
      %vm3803 = vmor %vm3801, %vm3802
      %v3804 = vsel %vm3803, %v3795, %v3800
      %v3805 = vrsqrt.pop %v3792
      %v3806 = vmul.f32 %v3805, %v3792
      %v3807 = vmul.f32 %v3806, %v3805
      %v3808 = vmul.f32 0.5, %v3807
      %v3809 = vsub.f32 1.5, %v3808
      %v3810 = vmul.f32 %v3805, %v3809
      %vm3811 = vweird.f32 %v3792
      %vm3812 = vweird.f32 %v3805
      %vm3813 = vmor %vm3811, %vm3812
      %v3814 = vsel %vm3813, %v3805, %v3810
      %v3815 = vrsqrt.pop %v3793
      %v3816 = vmul.f32 %v3815, %v3793
      %v3817 = vmul.f32 %v3816, %v3815
      %v3818 = vmul.f32 0.5, %v3817
      %v3819 = vsub.f32 1.5, %v3818
      %v3820 = vmul.f32 %v3815, %v3819
      %vm3821 = vweird.f32 %v3793
      %vm3822 = vweird.f32 %v3815
      %vm3823 = vmor %vm3821, %vm3822
      %v3824 = vsel %vm3823, %v3815, %v3820
      %v3825 = vrsqrt.pop %v3794
      %v3826 = vmul.f32 %v3825, %v3794
      %v3827 = vmul.f32 %v3826, %v3825
      %v3828 = vmul.f32 0.5, %v3827
      %v3829 = vsub.f32 1.5, %v3828
      %v3830 = vmul.f32 %v3825, %v3829
      %vm3831 = vweird.f32 %v3794
      %vm3832 = vweird.f32 %v3825
      %vm3833 = vmor %vm3831, %vm3832
      %v3834 = vsel %vm3833, %v3825, %v3830
      %v3835 = vmul.f32 %v3787, %v3804
      %v3836 = vmul.f32 %v3788, %v3814
      %v3837 = vmul.f32 %v3789, %v3824
      %v3838 = vmul.f32 %v3790, %v3834
      %v3840 = vperm.slane %v3740, 0
      %v3842 = vmul.f32 %v3835, %v3840
      %v3843 = vmul.f32 %v3836, %v3840
      %v3844 = vmul.f32 %v3837, %v3840
      %v3845 = vmul.f32 %v3838, %v3840
      %v3847 = vperm.slane %v3742, 0
      %v3849 = vadd.f32 %v3842, %v3847
      %v3850 = vadd.f32 %v3843, %v3847
      %v3851 = vadd.f32 %v3844, %v3847
      %v3852 = vadd.f32 %v3845, %v3847
      %v3853 = vld [vmem:[%s21] sm:$0xff]
      %v3854 = vld [vmem:[%s21 + $0x8] sm:$0xff]
      %v3855 = vld [vmem:[%s21 + $0x10] sm:$0xff]
      %v3856 = vld [vmem:[%s21 + $0x18] sm:$0xff]
      %v3857 = vld [vmem:[%s22] sm:$0x1]
      %v3859 = vperm.slane %v3857, 0
      %v3862 = vsel %vm1151, %v3849, 0
      %v3865 = vsel %vm1151, %v3850, 0
      %v3868 = vsel %vm1151, %v3851, 0
      %v3871 = vsel %vm1151, %v3852, 0
      %3873 = vmatpush.msra.mxu0 0.0
      %3874 = vmatpush.msra.mxu0 0.0
      %3875 = vmatpush.msra.mxu0 0.0
      %3876 = vmatpush.msra.mxu0 0.0
      %3877 = vmatpush.msra.mxu0 0.0
      %3878 = vmatpush.msra.mxu0 0.0
      %3879 = vmatpush.msra.mxu0 0.0
      %3880 = vmatpush.msra.mxu0 0.0
      %3881 = vmatpush.msra.mxu0 0.0
      %3882 = vmatpush.msra.mxu0 0.0
      %3883 = vmatpush.msra.mxu0 0.0
      %3884 = vmatpush.msra.mxu0 0.0
      %3885 = vmatpush.msra.mxu0 %v3856
      %3886 = vmatpush.msra.mxu0 %v3855
      %3887 = vmatpush.msra.mxu0 %v3854
      %3888 = vmatpush.msra.mxu0 %v3853
      %3889 = vmatmul.f32.gmra.mxu0 %v3862
      %v3890 = vpop.f32.mrf.mxu0
      %v3891 = vadd.f32 %v3859, %v3890
      %3892 = vmatmul.f32.gmra.mxu0 %v3865
      %v3893 = vpop.f32.mrf.mxu0
      %v3894 = vadd.f32 %v3859, %v3893
      %3895 = vmatmul.f32.gmra.mxu0 %v3868
      %v3896 = vpop.f32.mrf.mxu0
      %v3897 = vadd.f32 %v3859, %v3896
      %3898 = vmatmul.f32.gmra.mxu0 %v3871
      %v3899 = vpop.f32.mrf.mxu0
      %v3900 = vadd.f32 %v3859, %v3899
      %3901 = vdwg.mxu0
      %v3902 = vmax.f32 %v3891, 0.0
      %v3903 = vmax.f32 %v3894, 0.0
      %v3904 = vmax.f32 %v3897, 0.0
      %v3905 = vmax.f32 %v3900, 0.0
      %v3906 = vld [vmem:[%s23] sm:$0x1]
      %v3908 = vperm.slane %v3906, 0
      %v3910 = vmul.f32 %v3902, %v3908
      %v3911 = vmul.f32 %v3903, %v3908
      %v3912 = vmul.f32 %v3904, %v3908
      %v3913 = vmul.f32 %v3905, %v3908
      %v3914 = vsel %vm843, %v3910, 0.0
      %3915 = vadd.xlane.f32.xlu0 %v3914
      %v3916 = vpop.xlane.xlu0 %3915
      %v3917 = vsel %vm843, %v3911, 0.0
      %3918 = vadd.xlane.f32.xlu0 %v3917
      %v3919 = vpop.xlane.xlu0 %3918
      %v3920 = vsel %vm843, %v3912, 0.0
      %3921 = vadd.xlane.f32.xlu0 %v3920
      %v3922 = vpop.xlane.xlu0 %3921
      %v3923 = vsel %vm843, %v3913, 0.0
      %3924 = vadd.xlane.f32.xlu0 %v3923
      %v3925 = vpop.xlane.xlu0 %3924
      %v3926 = vld [vmem:[#allocation2] sm:$0x1]
      %v3928 = vperm.slane %v3926, 0
      %v3930 = vadd.f32 %v3916, %v3928
      %v3931 = vadd.f32 %v3919, %v3928
      %v3932 = vadd.f32 %v3922, %v3928
      %v3933 = vadd.f32 %v3925, %v3928
      %vm3934 = vcmask 7168
      %v3935 = vsel %vm3934, %v3930, -inf
      %v3936 = vsel %vm3934, %v3931, -inf
      %v3937 = vsel %vm3934, %v3932, -inf
      %v3938 = vsel %vm3934, %v3933, -inf
      %v3939 = vmax.f32 %v3935, %v3936
      %v3940 = vmax.f32 %v3937, %v3938
      %v3941 = vmax.f32 %v3939, %v3940
      %3942 = vmax.xlane.f32.xlu0 %v3941
      %v3943 = vpop.xlane.xlu0 %3942
      %v3944 = vrot.slane %v3943, 4
      %v3945 = vmax.f32 %v3943, %v3944
      %v3946 = vrot.slane %v3945, 2
      %v3947 = vmax.f32 %v3945, %v3946
      %v3948 = vrot.slane %v3947, 1
      %v3949 = vmax.f32 %v3947, %v3948
      %s3950 = vtos %v3949
      %v3951 = vstv %s3950
      %v3952 = vsub.f32 %v3930, %v3951
      %v3953 = vsub.f32 %v3931, %v3951
      %v3954 = vsub.f32 %v3932, %v3951
      %v3955 = vsub.f32 %v3933, %v3951
      %v3956 = vmul.f32 %v3952, 1.442695
      %v3957 = vpow.pop %v3956
      %v3958 = vmul.f32 %v3953, 1.442695
      %v3959 = vpow.pop %v3958
      %v3960 = vmul.f32 %v3954, 1.442695
      %v3961 = vpow.pop %v3960
      %v3962 = vmul.f32 %v3955, 1.442695
      %v3963 = vpow.pop %v3962
      %v3964 = vsel %vm3934, %v3957, 0.0
      %v3965 = vsel %vm3934, %v3959, 0.0
      %v3966 = vadd.f32 %v3964, %v3965
      %v3967 = vsel %vm3934, %v3961, 0.0
      %v3968 = vadd.f32 %v3966, %v3967
      %v3969 = vsel %vm3934, %v3963, 0.0
      %v3970 = vadd.f32 %v3968, %v3969
      %3971 = vadd.xlane.f32.xlu0 %v3970
      %v3972 = vpop.xlane.xlu0 %3971
      %v3973 = vrot.slane %v3972, 4
      %v3974 = vadd.f32 %v3972, %v3973
      %v3975 = vrot.slane %v3974, 2
      %v3976 = vadd.f32 %v3974, %v3975
      %v3977 = vrot.slane %v3976, 1
      %v3978 = vadd.f32 %v3976, %v3977
      %s3979 = vtos %v3978
      %v3980 = vstv %s3979
      %v3981 = vrcp.pop %v3980
      %v3982 = vmul.f32 %v3980, %v3981
      %v3983 = vsub.f32 1.0, %v3982
      %v3984 = vmul.f32 %v3981, %v3983
      %v3985 = vadd.f32 %v3981, %v3984
      %vm3986 = vweird.f32 %v3980
      %vm3987 = vweird.f32 %v3981
      %vm3988 = vmor %vm3986, %vm3987
      %v3989 = vsel %vm3988, %v3981, %v3985
      %v3990 = vand.u32 2147483647, %v3980
      %vm3991 = vcmp.eq.f32.partialorder %v3990, 8.507059e+37
      %v3992 = vand.u32 %v3980, 2147483648
      %v3993 = vor.u32 1.1754944e-38, %v3992
      %v3994 = vsel %vm3991, %v3993, %v3989
      %v3995 = vmul.f32 %v3957, %v3994
      %v3996 = vmul.f32 %v3959, %v3994
      %v3997 = vmul.f32 %v3961, %v3994
      %v3998 = vmul.f32 %v3963, %v3994
      %4000 = vset.pattern.permute.xlu0 0
      %4001 = vperm.xlu0 %4000, %v3995
      %v4002 = vpop.permute.xlu0 %4001
      %4005 = vset.pattern.permute.xlu0 0
      %4006 = vperm.xlu0 %4005, %v3996
      %v4007 = vpop.permute.xlu0 %4006
      %4010 = vset.pattern.permute.xlu0 0
      %4011 = vperm.xlu0 %4010, %v3997
      %v4012 = vpop.permute.xlu0 %4011
      %4015 = vset.pattern.permute.xlu0 0
      %4016 = vperm.xlu0 %4015, %v3998
      %v4017 = vpop.permute.xlu0 %4016
      %v4019 = vmul.f32 %v4002, %v3849
      %v4020 = vmul.f32 %v4007, %v3850
      %v4021 = vmul.f32 %v4012, %v3851
      %v4022 = vmul.f32 %v4017, %v3852
      %v4023 = vsel %vm1151, %v4019, 0.0
      %v4024 = vsel %vm1151, %v4020, 0.0
      %v4025 = vadd.f32 %v4023, %v4024
      %v4026 = vsel %vm1151, %v4021, 0.0
      %v4027 = vadd.f32 %v4025, %v4026
      %v4028 = vsel %vm1151, %v4022, 0.0
      %v4029 = vadd.f32 %v4027, %v4028
      %v4030 = vrot.slane %v4029, 4
      %v4031 = vadd.f32 %v4029, %v4030
      %v4032 = vrot.slane %v4031, 2
      %v4033 = vadd.f32 %v4031, %v4032
      %v4034 = vrot.slane %v4033, 1
      %v4035 = vadd.f32 %v4033, %v4034
      %v4036 = vld [vmem:[%s25] sm:$0x1]
      %v4037 = vmul.f32 %v4035, %v4036
      %vm4038 = vcmask 253952
      %v4039 = vsel %vm4038, %v4037, 0.0
      %4040 = vadd.xlane.f32.xlu0 %v4039
      %v4041 = vpop.xlane.xlu0 %4040
      %v4042 = vld [vmem:[#allocation3] sm:$0x1]
      %v4043 = vadd.f32 %v4041, %v4042
      %v4044 = vxor.u32 %v4043, 2147483648
      %v4045 = vmul.f32 %v4044, 1.442695
      %v4046 = vpow.pop %v4045
      %v4047 = vadd.f32 %v4046, 1.0
      %v4048 = vrcp.pop %v4047
      %v4049 = vmul.f32 %v4047, %v4048
      %v4050 = vsub.f32 1.0, %v4049
      %v4051 = vmul.f32 %v4048, %v4050
      %v4052 = vadd.f32 %v4048, %v4051
      %vm4053 = vweird.f32 %v4047
      %vm4054 = vweird.f32 %v4048
      %vm4055 = vmor %vm4053, %vm4054
      %v4056 = vsel %vm4055, %v4048, %v4052
      %v4057 = vand.u32 2147483647, %v4047
      %vm4058 = vcmp.eq.f32.partialorder %v4057, 8.507059e+37
      %v4059 = vand.u32 %v4047, 2147483648
      %v4060 = vor.u32 1.1754944e-38, %v4059
      %v4061 = vsel %vm4058, %v4060, %v4056
      %v4062 = vmul.f32 1.0, %v4061
      %4064 = vset.pattern.permute.xlu0 0
      %4065 = vperm.xlu0 %4064, %v4062
      %v4066 = vpop.permute.xlu0 %4065
      %v4068 = vadd.f32 %v4066, 0.0
      %4069 = vst [vmem:[%s818] sm:$0x1] %v4068
      %p4070 = scmp.lt.s32.totalorder %s42, 1
      %s4071 = scalar_select %p4070, %s42, 1
      %s4072 = scalar_lea.vmem %s27, %s4071
      // Predicated region
      $region129: #{forward.1} parent=127 // pred_check
        %p4073 = pneg %p632
      $region130: #{forward.1} parent=127 // pred_check_branch
        %4075 = sbr.rel (%p4073) target = $region132
      $region131: #{forward.1} parent=127 // pred_region
        _
      $region132: #{forward.1} parent=127 // pred_fallthru
        _
    $region128: #{forward.1} parent=5 // pred_fallthru
      _
    %p4076 = scmp.le.s32.totalorder 2, %s37
    // Predicated region
    $region133: #{forward.1} parent=5 // pred_check
      %p4077 = pneg %p4076
    $region134: #{forward.1} parent=5 // pred_check_branch
      %4079 = sbr.rel (%p4077) target = $region136
    $region135: #{forward.1} parent=5 // pred_region
      %s4080 = ssub.s32 %s37, 2
      // Predicated region
      $region137: #{forward.1} parent=135 // pred_check
        %p4081 = pneg %p638
      $region138: #{forward.1} parent=135 // pred_check_branch
        %4083 = sbr.rel (%p4081) target = $region140
      $region139: #{forward.1} parent=135 // pred_region
        %p4084 = scmp.lt.s32.totalorder %s43, 1
        %s4085 = scalar_select %p4084, %s43, 1
        %s4086 = scalar_lea.vmem %s27, %s4085
      $region140: #{forward.1} parent=135 // pred_fallthru
        _
    $region136: #{forward.1} parent=5 // pred_fallthru
      _
  $region6: #{forward.1} parent=0 // loop_footer
    %s41 = sadd.s32 1, %s37
  $region7: #{forward.1} parent=0 // loop_footer_branch
    %36 = sbr.rel target = $region3
  $region8: #{forward.1} parent=0 // loop_exit
    _

</llo_original>
